<compile_context>
chip_gen: v7x
topology: tpu7x:2x2x1
jax: 0.10.0
libtpu: 0.0.40
codegen_flags: <defaults>
</compile_context>

<pallas_src>
import functools

import jax
import jax.numpy as jnp
from jax.experimental import pallas as pl
from jax.experimental.pallas import tpu as pltpu

_EPS = 1e-5
_VMEM_LIMIT = 32 * 1024 * 1024  # worst-case WRN working set is ~20 MiB; safe on v5e/v6e/v7x


def _round_up(v, m):
    return (v + m - 1) // m * m


# ----------------------------- kernel bodies --------------------------------

def _accum_conv3x3(x_ref, w_ref, *, stride, ho, wo):
    """3x3 conv as 9 shifted matmuls accumulated in f32.

    x_ref : (stride*stride, Hs, Ws, Cp) bf16 phase-decomposed padded image.
    w_ref : (9, Cp, Np) bf16, BN scale pre-folded into the output columns.
    Returns (ho*wo, Np) f32.
    """
    cp = x_ref.shape[-1]
    acc = None
    for kh in range(3):
        for kw in range(3):
            ph = (kh % stride) * stride + (kw % stride)
            d, e = kh // stride, kw // stride
            win = x_ref[ph, d:d + ho, e:e + wo, :]          # (ho, wo, cp) bf16
            lhs = win.reshape(ho * wo, cp)
            t = jnp.dot(lhs, w_ref[3 * kh + kw],
                        preferred_element_type=jnp.float32)
            acc = t if acc is None else acc + t
    return acc


def _conv1_bn_relu_kernel(x_ref, w_ref, b_ref, o_ref, *, stride, ho, wo):
    """conv1 (3x3, stride) + BN1 + ReLU.  Output is written directly into the
    zero-padded (pad=1) bf16 NHWC layout conv2 consumes."""
    acc = _accum_conv3x3(x_ref, w_ref, stride=stride, ho=ho, wo=wo)
    y = jnp.maximum(acc + b_ref[...], 0.0)                  # (ho*wo, Np)
    o_ref[...] = jnp.zeros_like(o_ref)                      # 1-px zero border
    o_ref[0, 1:ho + 1, 1:wo + 1, :] = (
        y.reshape(ho, wo, -1).astype(o_ref.dtype))


def _conv2_bn_add_relu_kernel(x_ref, w_ref, b_ref, r_ref, o_ref, *, ho, wo):
    """conv2 (3x3, stride 1) + BN2 + identity-shortcut add + ReLU."""
    acc = _accum_conv3x3(x_ref, w_ref, stride=1, ho=ho, wo=wo)
    res = r_ref[0].reshape(ho * wo, -1).astype(jnp.float32)
    y = jnp.maximum(acc + b_ref[...] + res, 0.0)
    o_ref[0] = y.reshape(ho, wo, -1).astype(o_ref.dtype)


def _conv2_bn_scconv_add_relu_kernel(x_ref, w_ref, b_ref, xs_ref, ws_ref,
                                     o_ref, *, ho, wo):
    """conv2 + BN2 with the (1x1 conv + BN) shortcut folded into the same
    accumulation chain; epilogue is combined-bias + ReLU only."""
    acc = _accum_conv3x3(x_ref, w_ref, stride=1, ho=ho, wo=wo)
    cs = xs_ref.shape[-1]
    acc = acc + jnp.dot(xs_ref[0].reshape(ho * wo, cs), ws_ref[...],
                        preferred_element_type=jnp.float32)
    y = jnp.maximum(acc + b_ref[...], 0.0)
    o_ref[0] = y.reshape(ho, wo, -1).astype(o_ref.dtype)


# --------------------------- pallas_call wrappers ----------------------------

def _compiler_params():
    return pltpu.CompilerParams(
        dimension_semantics=("parallel",),   # batch axis -> megacore on v7x
        vmem_limit_bytes=_VMEM_LIMIT,
    )


def _call_conv1(xq, w, b, *, n, stride, ho, wo, np_):
    ss = stride * stride
    hs, wsp, cp = xq.shape[1], xq.shape[2], xq.shape[3]
    return pl.pallas_call(
        functools.partial(_conv1_bn_relu_kernel, stride=stride, ho=ho, wo=wo),
        out_shape=jax.ShapeDtypeStruct((n, ho + 2, wo + 2, np_), jnp.bfloat16),
        grid_spec=pltpu.PrefetchScalarGridSpec(
            num_scalar_prefetch=0,
            grid=(n,),
            in_specs=[
                pl.BlockSpec((ss, hs, wsp, cp), lambda i: (i, 0, 0, 0)),
                pl.BlockSpec(w.shape, lambda i: (0, 0, 0)),
                pl.BlockSpec(b.shape, lambda i: (0, 0)),
            ],
            out_specs=pl.BlockSpec((1, ho + 2, wo + 2, np_),
                                   lambda i: (i, 0, 0, 0)),
        ),
        compiler_params=_compiler_params(),
    )(xq, w, b)


def _call_conv2_identity(y1p, w, b, res, *, n, ho, wo, np_):
    hs, wsp = y1p.shape[1], y1p.shape[2]
    return pl.pallas_call(
        functools.partial(_conv2_bn_add_relu_kernel, ho=ho, wo=wo),
        out_shape=jax.ShapeDtypeStruct((n, ho, wo, np_), jnp.float32),
        grid_spec=pltpu.PrefetchScalarGridSpec(
            num_scalar_prefetch=0,
            grid=(n,),
            in_specs=[
                pl.BlockSpec((1, hs, wsp, np_), lambda i: (i, 0, 0, 0)),
                pl.BlockSpec(w.shape, lambda i: (0, 0, 0)),
                pl.BlockSpec(b.shape, lambda i: (0, 0)),
                pl.BlockSpec((1, ho, wo, np_), lambda i: (i, 0, 0, 0)),
            ],
            out_specs=pl.BlockSpec((1, ho, wo, np_), lambda i: (i, 0, 0, 0)),
        ),
        compiler_params=_compiler_params(),
    )(y1p, w, b, res)


def _call_conv2_scconv(y1p, w, b, xs, ws, *, n, ho, wo, np_):
    hs, wsp = y1p.shape[1], y1p.shape[2]
    cs = xs.shape[-1]
    return pl.pallas_call(
        functools.partial(_conv2_bn_scconv_add_relu_kernel, ho=ho, wo=wo),
        out_shape=jax.ShapeDtypeStruct((n, ho, wo, np_), jnp.float32),
        grid_spec=pltpu.PrefetchScalarGridSpec(
            num_scalar_prefetch=0,
            grid=(n,),
            in_specs=[
                pl.BlockSpec((1, hs, wsp, np_), lambda i: (i, 0, 0, 0)),
                pl.BlockSpec(w.shape, lambda i: (0, 0, 0)),
                pl.BlockSpec(b.shape, lambda i: (0, 0)),
                pl.BlockSpec((1, ho, wo, cs), lambda i: (i, 0, 0, 0)),
                pl.BlockSpec(ws.shape, lambda i: (0, 0)),
            ],
            out_specs=pl.BlockSpec((1, ho, wo, np_), lambda i: (i, 0, 0, 0)),
        ),
        compiler_params=_compiler_params(),
    )(y1p, w, b, xs, ws)


# ------------------------------- JAX glue ------------------------------------

def _fold_bn(bn_params):
    gamma, beta, mean, var = bn_params
    scale = gamma / jnp.sqrt(var + _EPS)
    bias = beta - mean * scale
    return scale, bias


def _prep_conv3x3_w(w_oihw, scale, cin_p, cout_p):
    """(Cout,Cin,3,3) -> (9, Cin_p, Cout_p) bf16 with BN scale folded into the
    output-channel columns (in f32) and K/N zero-padded to lane multiples."""
    cout, cin = w_oihw.shape[0], w_oihw.shape[1]
    w = jnp.transpose(w_oihw, (2, 3, 1, 0)) * scale      # (3,3,Cin,Cout) * (Cout,)
    w = jnp.pad(w, ((0, 0), (0, 0), (0, cin_p - cin), (0, cout_p - cout)))
    return w.reshape(9, cin_p, cout_p).astype(jnp.bfloat16)


def _prep_bias(bias, cout_p):
    return jnp.pad(bias, (0, cout_p - bias.shape[0])).reshape(1, cout_p)


def _prep_phases(x_nhwc, cin_p, stride, ho, wo):
    """Zero-pad (spatial pad=1, channels to cin_p), cast bf16, and phase-
    decompose for stride>1 so every shifted 3x3 window read inside the kernel
    is a contiguous slice.  Result: (N*stride^2, Hs, Ws, cin_p) -> ~1x the
    activation size in HBM (no 9x im2col expansion)."""
    n, h, w, c = x_nhwc.shape
    s = stride
    hs, wsp = ho + 2 // s, wo + 2 // s
    xp = jnp.pad(
        x_nhwc,
        ((0, 0), (1, s * hs - h - 1), (1, s * wsp - w - 1), (0, cin_p - c)),
    ).astype(jnp.bfloat16)
    if s == 1:
        return xp.reshape(n, hs, wsp, cin_p)
    xq = xp.reshape(n, hs, s, wsp, s, cin_p)
    xq = jnp.transpose(xq, (0, 2, 4, 1, 3, 5))           # (N, s, s, Hs, Ws, Cp)
    return xq.reshape(n * s * s, hs, wsp, cin_p)


def wrn_block_forward(x_nchw, params, *, stride):
    """Forward pass of WRNBlock (inference semantics).  x is NCHW float32."""
    # TODO(synk): if the surrounding model keeps activations NHWC, drop the two
    # boundary transposes to save two HBM passes.
    x = jnp.transpose(x_nchw, (0, 2, 3, 1))              # NHWC
    n, h, w, cin = x.shape
    cout = params["w1"].shape[0]
    ho = (h + 2 - 3) // stride + 1
    wo = (w + 2 - 3) // stride + 1
    cin_p = _round_up(cin, 128)
    np_ = _round_up(cout, 128)

    # --- conv1 (3x3, stride) + BN1 + ReLU: bf16 output in padded layout ---
    s1, b1 = _fold_bn(params["bn1"])
    w1 = _prep_conv3x3_w(params["w1"], s1, cin_p, np_)
    b1p = _prep_bias(b1, np_)
    xq = _prep_phases(x, cin_p, stride, ho, wo)
    y1p = _call_conv1(xq, w1, b1p, n=n, stride=stride, ho=ho, wo=wo, np_=np_)
    # nn.Dropout(p=0.3): eval-mode identity.
    # TODO(synk): training-mode dropout RNG not replicated.

    # --- conv2 (3x3, stride 1) + BN2 + shortcut + add + ReLU (fully fused) ---
    s2, b2 = _fold_bn(params["bn2"])
    w2 = _prep_conv3x3_w(params["w2"], s2, np_, np_)

    if stride != 1 or cin != cout:
        ss, bs = _fold_bn(params["bns"])
        wsc = jnp.transpose(params["ws"][:, :, 0, 0], (1, 0)) * ss   # (Cin,Cout)
        wsc = jnp.pad(wsc, ((0, cin_p - cin), (0, np_ - cout))).astype(jnp.bfloat16)
        btot = _prep_bias(b2 + bs, np_)                              # combined bias
        xs = x[:, :(ho - 1) * stride + 1:stride,
                  :(wo - 1) * stride + 1:stride, :]
        xs = jnp.pad(xs, ((0, 0), (0, 0), (0, 0),
                          (0, cin_p - cin))).astype(jnp.bfloat16)
        out = _call_conv2_scconv(y1p, w2, btot, xs, wsc,
                                 n=n, ho=ho, wo=wo, np_=np_)
    else:
        b2p = _prep_bias(b2, np_)
        res = jnp.pad(x, ((0, 0), (0, 0), (0, 0),
                          (0, np_ - cout))).astype(jnp.bfloat16)
        out = _call_conv2_identity(y1p, w2, b2p, res,
                                   n=n, ho=ho, wo=wo, np_=np_)

    out = out[..., :cout]
    return jnp.transpose(out, (0, 3, 1, 2))              # back to NCHW


# -------------------------- deterministic params -----------------------------

def _init_bn(key, c):
    k = jax.random.split(key, 4)
    gamma = 1.0 + 0.1 * jax.random.normal(k[0], (c,), jnp.float32)
    beta = 0.1 * jax.random.normal(k[1], (c,), jnp.float32)
    mean = 0.1 * jax.random.normal(k[2], (c,), jnp.float32)
    var = jnp.abs(jax.random.normal(k[3], (c,), jnp.float32)) + 0.5
    return (gamma, beta, mean, var)


def init_params(key, cin, cout):
    k = jax.random.split(key, 6)
    return {
        "w1": 0.1 * jax.random.normal(k[0], (cout, cin, 3, 3), jnp.float32),
        "bn1": _init_bn(k[1], cout),
        "w2": 0.1 * jax.random.normal(k[2], (cout, cout, 3, 3), jnp.float32),
        "bn2": _init_bn(k[3], cout),
        "ws": 0.1 * jax.random.normal(k[4], (cout, cin, 1, 1), jnp.float32),
        "bns": _init_bn(k[5], cout),
    }


# ----------------------------- pure-JAX reference ----------------------------

def _reference_forward(x, params, stride):
    def conv(x_, w_, s_, pad):
        return jax.lax.conv_general_dilated(
            x_, w_, (s_, s_), pad, dimension_numbers=("NCHW", "OIHW", "NCHW"))

    def bn(x_, p_):
        g, b, m, v = p_
        inv = g / jnp.sqrt(v + _EPS)
        return (x_ - m[None, :, None, None]) * inv[None, :, None, None] \
            + b[None, :, None, None]

    cin, cout = params["w1"].shape[1], params["w1"].shape[0]
    y = conv(x, params["w1"], stride, ((1, 1), (1, 1)))
    y = jnp.maximum(bn(y, params["bn1"]), 0.0)
    y = bn(conv(y, params["w2"], 1, ((1, 1), (1, 1))), params["bn2"])
    if stride != 1 or cin != cout:
        sc = bn(conv(x, params["ws"], stride, ((0, 0), (0, 0))), params["bns"])
    else:
        sc = x
    return jnp.maximum(y + sc, 0.0)


# ---------------------------------- main -------------------------------------

if __name__ == "__main__":
    key = jax.random.PRNGKey(0)
    kx1, kp1, kx2, kp2 = jax.random.split(key, 4)

    # Case 1: downsampling block (1x1-conv shortcut): stride=2, Cin != Cout.
    N, Cin, H, W = 2, 4, 16, 16
    Cout, stride = 8, 2
    x1 = jax.random.normal(kx1, (N, Cin, H, W), jnp.float32)
    params1 = init_params(kp1, Cin, Cout)
    fwd1 = jax.jit(functools.partial(wrn_block_forward, stride=stride))
    out1 = jax.block_until_ready(fwd1(x1, params1))
    assert out1.shape == (N, Cout, H // stride, W // stride), out1.shape
    err1 = float(jnp.max(jnp.abs(out1 - _reference_forward(x1, params1, stride))))

    # Case 2: identity-shortcut block: stride=1, Cin == Cout.
    x2 = jax.random.normal(kx2, (N, Cout, H, W), jnp.float32)
    params2 = init_params(kp2, Cout, Cout)
    fwd2 = jax.jit(functools.partial(wrn_block_forward, stride=1))
    out2 = jax.block_until_ready(fwd2(x2, params2))
    assert out2.shape == (N, Cout, H, W), out2.shape
    err2 = float(jnp.max(jnp.abs(out2 - _reference_forward(x2, params2, 1))))

    # bf16 MXU inputs (BN scale pre-folded into weights) with f32 accumulation.
    tol = 5e-2
    if err1 > tol or err2 > tol:
        raise AssertionError(
            f"Pallas result differs from reference: {err1:.4e}, {err2:.4e}")

    print("KERNEL_OK")
</pallas_src>

<mosaic_0001>
module attributes {stable_mosaic.version = 11 : i64} {
  func.func @_conv1_bn_relu_kernel(%arg0: i32, %arg1: memref<4x9x9x128xbf16, #tpu.memory_space<vmem>>, %arg2: memref<9x128x128xbf16, #tpu.memory_space<vmem>>, %arg3: memref<1x128xf32, #tpu.memory_space<vmem>>, %arg4: memref<1x10x10x128xbf16, #tpu.memory_space<vmem>>) attributes {dimension_semantics = [#tpu.dimension_semantics<parallel>], iteration_bounds = array<i64: 2>, scalar_prefetch = 0 : i64, scratch_operands = 0 : i64, tpu.core_type = #tpu.core_type<tc>, window_params = [{transform_indices = @transform_0, window_bounds = array<i64: 4, 9, 9, 128>}, {pipeline_mode = #tpu.pipeline_mode<synchronous>, transform_indices = @transform_1, window_bounds = array<i64: 9, 128, 128>}, {pipeline_mode = #tpu.pipeline_mode<synchronous>, transform_indices = @transform_2, window_bounds = array<i64: 1, 128>}, {transform_indices = @transform_3, window_bounds = array<i64: 1, 10, 10, 128>}]} {
    %c0 = arith.constant 0 : index
    %c0_0 = arith.constant 0 : index
    %c0_1 = arith.constant 0 : index
    %c0_2 = arith.constant 0 : index
    %0 = vector.load %arg1[%c0, %c0_0, %c0_1, %c0_2] : memref<4x9x9x128xbf16, #tpu.memory_space<vmem>>, vector<1x8x8x128xbf16>
    %1 = vector.shape_cast %0 : vector<1x8x8x128xbf16> to vector<8x8x128xbf16>
    %2 = vector.shape_cast %1 : vector<8x8x128xbf16> to vector<64x128xbf16>
    %c0_3 = arith.constant 0 : index
    %c0_4 = arith.constant 0 : index
    %c0_5 = arith.constant 0 : index
    %3 = vector.load %arg2[%c0_3, %c0_4, %c0_5] : memref<9x128x128xbf16, #tpu.memory_space<vmem>>, vector<1x128x128xbf16>
    %4 = vector.shape_cast %3 : vector<1x128x128xbf16> to vector<128x128xbf16>
    %cst = arith.constant dense<0.000000e+00> : vector<64x128xf32>
    %5 = tpu.matmul %2, %4, %cst {dimension_numbers = #tpu.dot_dimension_numbers<[1], [0], [0], [1], [0, 0, 1, 1], [], []>} : vector<64x128xbf16>, vector<128x128xbf16>, vector<64x128xf32> -> vector<64x128xf32>
    %c1 = arith.constant 1 : index
    %c0_6 = arith.constant 0 : index
    %c0_7 = arith.constant 0 : index
    %c0_8 = arith.constant 0 : index
    %6 = vector.load %arg1[%c1, %c0_6, %c0_7, %c0_8] : memref<4x9x9x128xbf16, #tpu.memory_space<vmem>>, vector<1x8x8x128xbf16>
    %7 = vector.shape_cast %6 : vector<1x8x8x128xbf16> to vector<8x8x128xbf16>
    %8 = vector.shape_cast %7 : vector<8x8x128xbf16> to vector<64x128xbf16>
    %c1_9 = arith.constant 1 : index
    %c0_10 = arith.constant 0 : index
    %c0_11 = arith.constant 0 : index
    %9 = vector.load %arg2[%c1_9, %c0_10, %c0_11] : memref<9x128x128xbf16, #tpu.memory_space<vmem>>, vector<1x128x128xbf16>
    %10 = vector.shape_cast %9 : vector<1x128x128xbf16> to vector<128x128xbf16>
    %cst_12 = arith.constant dense<0.000000e+00> : vector<64x128xf32>
    %11 = tpu.matmul %8, %10, %cst_12 {dimension_numbers = #tpu.dot_dimension_numbers<[1], [0], [0], [1], [0, 0, 1, 1], [], []>} : vector<64x128xbf16>, vector<128x128xbf16>, vector<64x128xf32> -> vector<64x128xf32>
    %12 = arith.addf %5, %11 : vector<64x128xf32>
    %c0_13 = arith.constant 0 : index
    %c0_14 = arith.constant 0 : index
    %c1_15 = arith.constant 1 : index
    %c0_16 = arith.constant 0 : index
    %13 = vector.load %arg1[%c0_13, %c0_14, %c1_15, %c0_16] : memref<4x9x9x128xbf16, #tpu.memory_space<vmem>>, vector<1x8x8x128xbf16>
    %14 = vector.shape_cast %13 : vector<1x8x8x128xbf16> to vector<8x8x128xbf16>
    %15 = vector.shape_cast %14 : vector<8x8x128xbf16> to vector<64x128xbf16>
    %c2 = arith.constant 2 : index
    %c0_17 = arith.constant 0 : index
    %c0_18 = arith.constant 0 : index
    %16 = vector.load %arg2[%c2, %c0_17, %c0_18] : memref<9x128x128xbf16, #tpu.memory_space<vmem>>, vector<1x128x128xbf16>
    %17 = vector.shape_cast %16 : vector<1x128x128xbf16> to vector<128x128xbf16>
    %cst_19 = arith.constant dense<0.000000e+00> : vector<64x128xf32>
    %18 = tpu.matmul %15, %17, %cst_19 {dimension_numbers = #tpu.dot_dimension_numbers<[1], [0], [0], [1], [0, 0, 1, 1], [], []>} : vector<64x128xbf16>, vector<128x128xbf16>, vector<64x128xf32> -> vector<64x128xf32>
    %19 = arith.addf %12, %18 : vector<64x128xf32>
    %c2_20 = arith.constant 2 : index
    %c0_21 = arith.constant 0 : index
    %c0_22 = arith.constant 0 : index
    %c0_23 = arith.constant 0 : index
    %20 = vector.load %arg1[%c2_20, %c0_21, %c0_22, %c0_23] : memref<4x9x9x128xbf16, #tpu.memory_space<vmem>>, vector<1x8x8x128xbf16>
    %21 = vector.shape_cast %20 : vector<1x8x8x128xbf16> to vector<8x8x128xbf16>
    %22 = vector.shape_cast %21 : vector<8x8x128xbf16> to vector<64x128xbf16>
    %c3 = arith.constant 3 : index
    %c0_24 = arith.constant 0 : index
    %c0_25 = arith.constant 0 : index
    %23 = vector.load %arg2[%c3, %c0_24, %c0_25] : memref<9x128x128xbf16, #tpu.memory_space<vmem>>, vector<1x128x128xbf16>
    %24 = vector.shape_cast %23 : vector<1x128x128xbf16> to vector<128x128xbf16>
    %cst_26 = arith.constant dense<0.000000e+00> : vector<64x128xf32>
    %25 = tpu.matmul %22, %24, %cst_26 {dimension_numbers = #tpu.dot_dimension_numbers<[1], [0], [0], [1], [0, 0, 1, 1], [], []>} : vector<64x128xbf16>, vector<128x128xbf16>, vector<64x128xf32> -> vector<64x128xf32>
    %26 = arith.addf %19, %25 : vector<64x128xf32>
    %c3_27 = arith.constant 3 : index
    %c0_28 = arith.constant 0 : index
    %c0_29 = arith.constant 0 : index
    %c0_30 = arith.constant 0 : index
    %27 = vector.load %arg1[%c3_27, %c0_28, %c0_29, %c0_30] : memref<4x9x9x128xbf16, #tpu.memory_space<vmem>>, vector<1x8x8x128xbf16>
    %28 = vector.shape_cast %27 : vector<1x8x8x128xbf16> to vector<8x8x128xbf16>
    %29 = vector.shape_cast %28 : vector<8x8x128xbf16> to vector<64x128xbf16>
    %c4 = arith.constant 4 : index
    %c0_31 = arith.constant 0 : index
    %c0_32 = arith.constant 0 : index
    %30 = vector.load %arg2[%c4, %c0_31, %c0_32] : memref<9x128x128xbf16, #tpu.memory_space<vmem>>, vector<1x128x128xbf16>
    %31 = vector.shape_cast %30 : vector<1x128x128xbf16> to vector<128x128xbf16>
    %cst_33 = arith.constant dense<0.000000e+00> : vector<64x128xf32>
    %32 = tpu.matmul %29, %31, %cst_33 {dimension_numbers = #tpu.dot_dimension_numbers<[1], [0], [0], [1], [0, 0, 1, 1], [], []>} : vector<64x128xbf16>, vector<128x128xbf16>, vector<64x128xf32> -> vector<64x128xf32>
    %33 = arith.addf %26, %32 : vector<64x128xf32>
    %c2_34 = arith.constant 2 : index
    %c0_35 = arith.constant 0 : index
    %c1_36 = arith.constant 1 : index
    %c0_37 = arith.constant 0 : index
    %34 = vector.load %arg1[%c2_34, %c0_35, %c1_36, %c0_37] : memref<4x9x9x128xbf16, #tpu.memory_space<vmem>>, vector<1x8x8x128xbf16>
    %35 = vector.shape_cast %34 : vector<1x8x8x128xbf16> to vector<8x8x128xbf16>
    %36 = vector.shape_cast %35 : vector<8x8x128xbf16> to vector<64x128xbf16>
    %c5 = arith.constant 5 : index
    %c0_38 = arith.constant 0 : index
    %c0_39 = arith.constant 0 : index
    %37 = vector.load %arg2[%c5, %c0_38, %c0_39] : memref<9x128x128xbf16, #tpu.memory_space<vmem>>, vector<1x128x128xbf16>
    %38 = vector.shape_cast %37 : vector<1x128x128xbf16> to vector<128x128xbf16>
    %cst_40 = arith.constant dense<0.000000e+00> : vector<64x128xf32>
    %39 = tpu.matmul %36, %38, %cst_40 {dimension_numbers = #tpu.dot_dimension_numbers<[1], [0], [0], [1], [0, 0, 1, 1], [], []>} : vector<64x128xbf16>, vector<128x128xbf16>, vector<64x128xf32> -> vector<64x128xf32>
    %40 = arith.addf %33, %39 : vector<64x128xf32>
    %c0_41 = arith.constant 0 : index
    %c1_42 = arith.constant 1 : index
    %c0_43 = arith.constant 0 : index
    %c0_44 = arith.constant 0 : index
    %41 = vector.load %arg1[%c0_41, %c1_42, %c0_43, %c0_44] : memref<4x9x9x128xbf16, #tpu.memory_space<vmem>>, vector<1x8x8x128xbf16>
    %42 = vector.shape_cast %41 : vector<1x8x8x128xbf16> to vector<8x8x128xbf16>
    %43 = vector.shape_cast %42 : vector<8x8x128xbf16> to vector<64x128xbf16>
    %c6 = arith.constant 6 : index
    %c0_45 = arith.constant 0 : index
    %c0_46 = arith.constant 0 : index
    %44 = vector.load %arg2[%c6, %c0_45, %c0_46] : memref<9x128x128xbf16, #tpu.memory_space<vmem>>, vector<1x128x128xbf16>
    %45 = vector.shape_cast %44 : vector<1x128x128xbf16> to vector<128x128xbf16>
    %cst_47 = arith.constant dense<0.000000e+00> : vector<64x128xf32>
    %46 = tpu.matmul %43, %45, %cst_47 {dimension_numbers = #tpu.dot_dimension_numbers<[1], [0], [0], [1], [0, 0, 1, 1], [], []>} : vector<64x128xbf16>, vector<128x128xbf16>, vector<64x128xf32> -> vector<64x128xf32>
    %47 = arith.addf %40, %46 : vector<64x128xf32>
    %c1_48 = arith.constant 1 : index
    %c1_49 = arith.constant 1 : index
    %c0_50 = arith.constant 0 : index
    %c0_51 = arith.constant 0 : index
    %48 = vector.load %arg1[%c1_48, %c1_49, %c0_50, %c0_51] : memref<4x9x9x128xbf16, #tpu.memory_space<vmem>>, vector<1x8x8x128xbf16>
    %49 = vector.shape_cast %48 : vector<1x8x8x128xbf16> to vector<8x8x128xbf16>
    %50 = vector.shape_cast %49 : vector<8x8x128xbf16> to vector<64x128xbf16>
    %c7 = arith.constant 7 : index
    %c0_52 = arith.constant 0 : index
    %c0_53 = arith.constant 0 : index
    %51 = vector.load %arg2[%c7, %c0_52, %c0_53] : memref<9x128x128xbf16, #tpu.memory_space<vmem>>, vector<1x128x128xbf16>
    %52 = vector.shape_cast %51 : vector<1x128x128xbf16> to vector<128x128xbf16>
    %cst_54 = arith.constant dense<0.000000e+00> : vector<64x128xf32>
    %53 = tpu.matmul %50, %52, %cst_54 {dimension_numbers = #tpu.dot_dimension_numbers<[1], [0], [0], [1], [0, 0, 1, 1], [], []>} : vector<64x128xbf16>, vector<128x128xbf16>, vector<64x128xf32> -> vector<64x128xf32>
    %54 = arith.addf %47, %53 : vector<64x128xf32>
    %c0_55 = arith.constant 0 : index
    %c1_56 = arith.constant 1 : index
    %c1_57 = arith.constant 1 : index
    %c0_58 = arith.constant 0 : index
    %55 = vector.load %arg1[%c0_55, %c1_56, %c1_57, %c0_58] : memref<4x9x9x128xbf16, #tpu.memory_space<vmem>>, vector<1x8x8x128xbf16>
    %56 = vector.shape_cast %55 : vector<1x8x8x128xbf16> to vector<8x8x128xbf16>
    %57 = vector.shape_cast %56 : vector<8x8x128xbf16> to vector<64x128xbf16>
    %c8 = arith.constant 8 : index
    %c0_59 = arith.constant 0 : index
    %c0_60 = arith.constant 0 : index
    %58 = vector.load %arg2[%c8, %c0_59, %c0_60] : memref<9x128x128xbf16, #tpu.memory_space<vmem>>, vector<1x128x128xbf16>
    %59 = vector.shape_cast %58 : vector<1x128x128xbf16> to vector<128x128xbf16>
    %cst_61 = arith.constant dense<0.000000e+00> : vector<64x128xf32>
    %60 = tpu.matmul %57, %59, %cst_61 {dimension_numbers = #tpu.dot_dimension_numbers<[1], [0], [0], [1], [0, 0, 1, 1], [], []>} : vector<64x128xbf16>, vector<128x128xbf16>, vector<64x128xf32> -> vector<64x128xf32>
    %61 = arith.addf %54, %60 : vector<64x128xf32>
    %c0_62 = arith.constant 0 : index
    %c0_63 = arith.constant 0 : index
    %62 = vector.load %arg3[%c0_62, %c0_63] : memref<1x128xf32, #tpu.memory_space<vmem>>, vector<1x128xf32>
    %63 = vector.broadcast %62 : vector<1x128xf32> to vector<64x128xf32>
    %64 = arith.addf %61, %63 : vector<64x128xf32>
    %cst_64 = arith.constant 0.000000e+00 : f32
    %65 = vector.broadcast %cst_64 : f32 to vector<64x128xf32>
    %66 = arith.maximumf %64, %65 : vector<64x128xf32>
    %cst_65 = arith.constant 0.000000e+00 : bf16
    %67 = vector.broadcast %cst_65 : bf16 to vector<1x10x10x128xbf16>
    %c0_66 = arith.constant 0 : index
    %c0_67 = arith.constant 0 : index
    %c0_68 = arith.constant 0 : index
    %c0_69 = arith.constant 0 : index
    %68 = vector.load %arg4[%c0_66, %c0_67, %c0_68, %c0_69] : memref<1x10x10x128xbf16, #tpu.memory_space<vmem>>, vector<1x10x10x128xbf16>
    tpu.vector_store %arg4[%c0_66, %c0_67, %c0_68, %c0_69], %67 {strides = array<i32>} : memref<1x10x10x128xbf16, #tpu.memory_space<vmem>>, vector<1x10x10x128xbf16>,
    %69 = vector.shape_cast %66 : vector<64x128xf32> to vector<8x8x128xf32>
    %70 = arith.truncf %69 : vector<8x8x128xf32> to vector<8x8x128xbf16>
    %c0_70 = arith.constant 0 : index
    %c1_71 = arith.constant 1 : index
    %c1_72 = arith.constant 1 : index
    %c0_73 = arith.constant 0 : index
    %71 = vector.load %arg4[%c0_70, %c1_71, %c1_72, %c0_73] : memref<1x10x10x128xbf16, #tpu.memory_space<vmem>>, vector<1x8x8x128xbf16>
    %72 = vector.shape_cast %71 : vector<1x8x8x128xbf16> to vector<8x8x128xbf16>
    %73 = vector.shape_cast %70 : vector<8x8x128xbf16> to vector<1x8x8x128xbf16>
    tpu.vector_store %arg4[%c0_70, %c1_71, %c1_72, %c0_73], %73 {strides = array<i32>} : memref<1x10x10x128xbf16, #tpu.memory_space<vmem>>, vector<1x8x8x128xbf16>,
    return
  }
  func.func @transform_0(%arg0: i32) -> (i32, i32, i32, i32) {
    %c0_i32 = arith.constant 0 : i32
    %c0_i32_0 = arith.constant 0 : i32
    %c0_i32_1 = arith.constant 0 : i32
    %c0_i32_2 = arith.constant 0 : i32
    return %arg0, %c0_i32, %c0_i32_0, %c0_i32_1 : i32, i32, i32, i32
  }
  func.func @transform_1(%arg0: i32) -> (i32, i32, i32) {
    %c0_i32 = arith.constant 0 : i32
    %c0_i32_0 = arith.constant 0 : i32
    %c0_i32_1 = arith.constant 0 : i32
    %c0_i32_2 = arith.constant 0 : i32
    return %c0_i32, %c0_i32_0, %c0_i32_1 : i32, i32, i32
  }
  func.func @transform_2(%arg0: i32) -> (i32, i32) {
    %c0_i32 = arith.constant 0 : i32
    %c0_i32_0 = arith.constant 0 : i32
    %c0_i32_1 = arith.constant 0 : i32
    return %c0_i32, %c0_i32_0 : i32, i32
  }
  func.func @transform_3(%arg0: i32) -> (i32, i32, i32, i32) {
    %c0_i32 = arith.constant 0 : i32
    %c0_i32_0 = arith.constant 0 : i32
    %c0_i32_1 = arith.constant 0 : i32
    %c0_i32_2 = arith.constant 0 : i32
    return %arg0, %c0_i32, %c0_i32_0, %c0_i32_1 : i32, i32, i32, i32
  }
}

module attributes {stable_mosaic.version = 11 : i64} {
  func.func @_conv2_bn_scconv_add_relu_kernel(%arg0: i32, %arg1: memref<1x10x10x128xbf16, #tpu.memory_space<vmem>>, %arg2: memref<9x128x128xbf16, #tpu.memory_space<vmem>>, %arg3: memref<1x128xf32, #tpu.memory_space<vmem>>, %arg4: memref<1x8x8x128xbf16, #tpu.memory_space<vmem>>, %arg5: memref<128x128xbf16, #tpu.memory_space<vmem>>, %arg6: memref<1x8x8x128xf32, #tpu.memory_space<vmem>>) attributes {dimension_semantics = [#tpu.dimension_semantics<parallel>], iteration_bounds = array<i64: 2>, scalar_prefetch = 0 : i64, scratch_operands = 0 : i64, tpu.core_type = #tpu.core_type<tc>, window_params = [{transform_indices = @transform_0, window_bounds = array<i64: 1, 10, 10, 128>}, {pipeline_mode = #tpu.pipeline_mode<synchronous>, transform_indices = @transform_1, window_bounds = array<i64: 9, 128, 128>}, {pipeline_mode = #tpu.pipeline_mode<synchronous>, transform_indices = @transform_2, window_bounds = array<i64: 1, 128>}, {transform_indices = @transform_3, window_bounds = array<i64: 1, 8, 8, 128>}, {pipeline_mode = #tpu.pipeline_mode<synchronous>, transform_indices = @transform_4, window_bounds = array<i64: 128, 128>}, {transform_indices = @transform_5, window_bounds = array<i64: 1, 8, 8, 128>}]} {
    %c0 = arith.constant 0 : index
    %c0_0 = arith.constant 0 : index
    %c0_1 = arith.constant 0 : index
    %c0_2 = arith.constant 0 : index
    %0 = vector.load %arg1[%c0, %c0_0, %c0_1, %c0_2] : memref<1x10x10x128xbf16, #tpu.memory_space<vmem>>, vector<1x8x8x128xbf16>
    %1 = vector.shape_cast %0 : vector<1x8x8x128xbf16> to vector<8x8x128xbf16>
    %2 = vector.shape_cast %1 : vector<8x8x128xbf16> to vector<64x128xbf16>
    %c0_3 = arith.constant 0 : index
    %c0_4 = arith.constant 0 : index
    %c0_5 = arith.constant 0 : index
    %3 = vector.load %arg2[%c0_3, %c0_4, %c0_5] : memref<9x128x128xbf16, #tpu.memory_space<vmem>>, vector<1x128x128xbf16>
    %4 = vector.shape_cast %3 : vector<1x128x128xbf16> to vector<128x128xbf16>
    %cst = arith.constant dense<0.000000e+00> : vector<64x128xf32>
    %5 = tpu.matmul %2, %4, %cst {dimension_numbers = #tpu.dot_dimension_numbers<[1], [0], [0], [1], [0, 0, 1, 1], [], []>} : vector<64x128xbf16>, vector<128x128xbf16>, vector<64x128xf32> -> vector<64x128xf32>
    %c0_6 = arith.constant 0 : index
    %c0_7 = arith.constant 0 : index
    %c1 = arith.constant 1 : index
    %c0_8 = arith.constant 0 : index
    %6 = vector.load %arg1[%c0_6, %c0_7, %c1, %c0_8] : memref<1x10x10x128xbf16, #tpu.memory_space<vmem>>, vector<1x8x8x128xbf16>
    %7 = vector.shape_cast %6 : vector<1x8x8x128xbf16> to vector<8x8x128xbf16>
    %8 = vector.shape_cast %7 : vector<8x8x128xbf16> to vector<64x128xbf16>
    %c1_9 = arith.constant 1 : index
    %c0_10 = arith.constant 0 : index
    %c0_11 = arith.constant 0 : index
    %9 = vector.load %arg2[%c1_9, %c0_10, %c0_11] : memref<9x128x128xbf16, #tpu.memory_space<vmem>>, vector<1x128x128xbf16>
    %10 = vector.shape_cast %9 : vector<1x128x128xbf16> to vector<128x128xbf16>
    %cst_12 = arith.constant dense<0.000000e+00> : vector<64x128xf32>
    %11 = tpu.matmul %8, %10, %cst_12 {dimension_numbers = #tpu.dot_dimension_numbers<[1], [0], [0], [1], [0, 0, 1, 1], [], []>} : vector<64x128xbf16>, vector<128x128xbf16>, vector<64x128xf32> -> vector<64x128xf32>
    %12 = arith.addf %5, %11 : vector<64x128xf32>
    %c0_13 = arith.constant 0 : index
    %c0_14 = arith.constant 0 : index
    %c2 = arith.constant 2 : index
    %c0_15 = arith.constant 0 : index
    %13 = vector.load %arg1[%c0_13, %c0_14, %c2, %c0_15] : memref<1x10x10x128xbf16, #tpu.memory_space<vmem>>, vector<1x8x8x128xbf16>
    %14 = vector.shape_cast %13 : vector<1x8x8x128xbf16> to vector<8x8x128xbf16>
    %15 = vector.shape_cast %14 : vector<8x8x128xbf16> to vector<64x128xbf16>
    %c2_16 = arith.constant 2 : index
    %c0_17 = arith.constant 0 : index
    %c0_18 = arith.constant 0 : index
    %16 = vector.load %arg2[%c2_16, %c0_17, %c0_18] : memref<9x128x128xbf16, #tpu.memory_space<vmem>>, vector<1x128x128xbf16>
    %17 = vector.shape_cast %16 : vector<1x128x128xbf16> to vector<128x128xbf16>
    %cst_19 = arith.constant dense<0.000000e+00> : vector<64x128xf32>
    %18 = tpu.matmul %15, %17, %cst_19 {dimension_numbers = #tpu.dot_dimension_numbers<[1], [0], [0], [1], [0, 0, 1, 1], [], []>} : vector<64x128xbf16>, vector<128x128xbf16>, vector<64x128xf32> -> vector<64x128xf32>
    %19 = arith.addf %12, %18 : vector<64x128xf32>
    %c0_20 = arith.constant 0 : index
    %c1_21 = arith.constant 1 : index
    %c0_22 = arith.constant 0 : index
    %c0_23 = arith.constant 0 : index
    %20 = vector.load %arg1[%c0_20, %c1_21, %c0_22, %c0_23] : memref<1x10x10x128xbf16, #tpu.memory_space<vmem>>, vector<1x8x8x128xbf16>
    %21 = vector.shape_cast %20 : vector<1x8x8x128xbf16> to vector<8x8x128xbf16>
    %22 = vector.shape_cast %21 : vector<8x8x128xbf16> to vector<64x128xbf16>
    %c3 = arith.constant 3 : index
    %c0_24 = arith.constant 0 : index
    %c0_25 = arith.constant 0 : index
    %23 = vector.load %arg2[%c3, %c0_24, %c0_25] : memref<9x128x128xbf16, #tpu.memory_space<vmem>>, vector<1x128x128xbf16>
    %24 = vector.shape_cast %23 : vector<1x128x128xbf16> to vector<128x128xbf16>
    %cst_26 = arith.constant dense<0.000000e+00> : vector<64x128xf32>
    %25 = tpu.matmul %22, %24, %cst_26 {dimension_numbers = #tpu.dot_dimension_numbers<[1], [0], [0], [1], [0, 0, 1, 1], [], []>} : vector<64x128xbf16>, vector<128x128xbf16>, vector<64x128xf32> -> vector<64x128xf32>
    %26 = arith.addf %19, %25 : vector<64x128xf32>
    %c0_27 = arith.constant 0 : index
    %c1_28 = arith.constant 1 : index
    %c1_29 = arith.constant 1 : index
    %c0_30 = arith.constant 0 : index
    %27 = vector.load %arg1[%c0_27, %c1_28, %c1_29, %c0_30] : memref<1x10x10x128xbf16, #tpu.memory_space<vmem>>, vector<1x8x8x128xbf16>
    %28 = vector.shape_cast %27 : vector<1x8x8x128xbf16> to vector<8x8x128xbf16>
    %29 = vector.shape_cast %28 : vector<8x8x128xbf16> to vector<64x128xbf16>
    %c4 = arith.constant 4 : index
    %c0_31 = arith.constant 0 : index
    %c0_32 = arith.constant 0 : index
    %30 = vector.load %arg2[%c4, %c0_31, %c0_32] : memref<9x128x128xbf16, #tpu.memory_space<vmem>>, vector<1x128x128xbf16>
    %31 = vector.shape_cast %30 : vector<1x128x128xbf16> to vector<128x128xbf16>
    %cst_33 = arith.constant dense<0.000000e+00> : vector<64x128xf32>
    %32 = tpu.matmul %29, %31, %cst_33 {dimension_numbers = #tpu.dot_dimension_numbers<[1], [0], [0], [1], [0, 0, 1, 1], [], []>} : vector<64x128xbf16>, vector<128x128xbf16>, vector<64x128xf32> -> vector<64x128xf32>
    %33 = arith.addf %26, %32 : vector<64x128xf32>
    %c0_34 = arith.constant 0 : index
    %c1_35 = arith.constant 1 : index
    %c2_36 = arith.constant 2 : index
    %c0_37 = arith.constant 0 : index
    %34 = vector.load %arg1[%c0_34, %c1_35, %c2_36, %c0_37] : memref<1x10x10x128xbf16, #tpu.memory_space<vmem>>, vector<1x8x8x128xbf16>
    %35 = vector.shape_cast %34 : vector<1x8x8x128xbf16> to vector<8x8x128xbf16>
    %36 = vector.shape_cast %35 : vector<8x8x128xbf16> to vector<64x128xbf16>
    %c5 = arith.constant 5 : index
    %c0_38 = arith.constant 0 : index
    %c0_39 = arith.constant 0 : index
    %37 = vector.load %arg2[%c5, %c0_38, %c0_39] : memref<9x128x128xbf16, #tpu.memory_space<vmem>>, vector<1x128x128xbf16>
    %38 = vector.shape_cast %37 : vector<1x128x128xbf16> to vector<128x128xbf16>
    %cst_40 = arith.constant dense<0.000000e+00> : vector<64x128xf32>
    %39 = tpu.matmul %36, %38, %cst_40 {dimension_numbers = #tpu.dot_dimension_numbers<[1], [0], [0], [1], [0, 0, 1, 1], [], []>} : vector<64x128xbf16>, vector<128x128xbf16>, vector<64x128xf32> -> vector<64x128xf32>
    %40 = arith.addf %33, %39 : vector<64x128xf32>
    %c0_41 = arith.constant 0 : index
    %c2_42 = arith.constant 2 : index
    %c0_43 = arith.constant 0 : index
    %c0_44 = arith.constant 0 : index
    %41 = vector.load %arg1[%c0_41, %c2_42, %c0_43, %c0_44] : memref<1x10x10x128xbf16, #tpu.memory_space<vmem>>, vector<1x8x8x128xbf16>
    %42 = vector.shape_cast %41 : vector<1x8x8x128xbf16> to vector<8x8x128xbf16>
    %43 = vector.shape_cast %42 : vector<8x8x128xbf16> to vector<64x128xbf16>
    %c6 = arith.constant 6 : index
    %c0_45 = arith.constant 0 : index
    %c0_46 = arith.constant 0 : index
    %44 = vector.load %arg2[%c6, %c0_45, %c0_46] : memref<9x128x128xbf16, #tpu.memory_space<vmem>>, vector<1x128x128xbf16>
    %45 = vector.shape_cast %44 : vector<1x128x128xbf16> to vector<128x128xbf16>
    %cst_47 = arith.constant dense<0.000000e+00> : vector<64x128xf32>
    %46 = tpu.matmul %43, %45, %cst_47 {dimension_numbers = #tpu.dot_dimension_numbers<[1], [0], [0], [1], [0, 0, 1, 1], [], []>} : vector<64x128xbf16>, vector<128x128xbf16>, vector<64x128xf32> -> vector<64x128xf32>
    %47 = arith.addf %40, %46 : vector<64x128xf32>
    %c0_48 = arith.constant 0 : index
    %c2_49 = arith.constant 2 : index
    %c1_50 = arith.constant 1 : index
    %c0_51 = arith.constant 0 : index
    %48 = vector.load %arg1[%c0_48, %c2_49, %c1_50, %c0_51] : memref<1x10x10x128xbf16, #tpu.memory_space<vmem>>, vector<1x8x8x128xbf16>
    %49 = vector.shape_cast %48 : vector<1x8x8x128xbf16> to vector<8x8x128xbf16>
    %50 = vector.shape_cast %49 : vector<8x8x128xbf16> to vector<64x128xbf16>
    %c7 = arith.constant 7 : index
    %c0_52 = arith.constant 0 : index
    %c0_53 = arith.constant 0 : index
    %51 = vector.load %arg2[%c7, %c0_52, %c0_53] : memref<9x128x128xbf16, #tpu.memory_space<vmem>>, vector<1x128x128xbf16>
    %52 = vector.shape_cast %51 : vector<1x128x128xbf16> to vector<128x128xbf16>
    %cst_54 = arith.constant dense<0.000000e+00> : vector<64x128xf32>
    %53 = tpu.matmul %50, %52, %cst_54 {dimension_numbers = #tpu.dot_dimension_numbers<[1], [0], [0], [1], [0, 0, 1, 1], [], []>} : vector<64x128xbf16>, vector<128x128xbf16>, vector<64x128xf32> -> vector<64x128xf32>
    %54 = arith.addf %47, %53 : vector<64x128xf32>
    %c0_55 = arith.constant 0 : index
    %c2_56 = arith.constant 2 : index
    %c2_57 = arith.constant 2 : index
    %c0_58 = arith.constant 0 : index
    %55 = vector.load %arg1[%c0_55, %c2_56, %c2_57, %c0_58] : memref<1x10x10x128xbf16, #tpu.memory_space<vmem>>, vector<1x8x8x128xbf16>
    %56 = vector.shape_cast %55 : vector<1x8x8x128xbf16> to vector<8x8x128xbf16>
    %57 = vector.shape_cast %56 : vector<8x8x128xbf16> to vector<64x128xbf16>
    %c8 = arith.constant 8 : index
    %c0_59 = arith.constant 0 : index
    %c0_60 = arith.constant 0 : index
    %58 = vector.load %arg2[%c8, %c0_59, %c0_60] : memref<9x128x128xbf16, #tpu.memory_space<vmem>>, vector<1x128x128xbf16>
    %59 = vector.shape_cast %58 : vector<1x128x128xbf16> to vector<128x128xbf16>
    %cst_61 = arith.constant dense<0.000000e+00> : vector<64x128xf32>
    %60 = tpu.matmul %57, %59, %cst_61 {dimension_numbers = #tpu.dot_dimension_numbers<[1], [0], [0], [1], [0, 0, 1, 1], [], []>} : vector<64x128xbf16>, vector<128x128xbf16>, vector<64x128xf32> -> vector<64x128xf32>
    %61 = arith.addf %54, %60 : vector<64x128xf32>
    %c0_62 = arith.constant 0 : index
    %c0_63 = arith.constant 0 : index
    %c0_64 = arith.constant 0 : index
    %c0_65 = arith.constant 0 : index
    %62 = vector.load %arg4[%c0_62, %c0_63, %c0_64, %c0_65] : memref<1x8x8x128xbf16, #tpu.memory_space<vmem>>, vector<1x8x8x128xbf16>
    %63 = vector.shape_cast %62 : vector<1x8x8x128xbf16> to vector<8x8x128xbf16>
    %64 = vector.shape_cast %63 : vector<8x8x128xbf16> to vector<64x128xbf16>
    %c0_66 = arith.constant 0 : index
    %c0_67 = arith.constant 0 : index
    %65 = vector.load %arg5[%c0_66, %c0_67] : memref<128x128xbf16, #tpu.memory_space<vmem>>, vector<128x128xbf16>
    %cst_68 = arith.constant dense<0.000000e+00> : vector<64x128xf32>
    %66 = tpu.matmul %64, %65, %cst_68 {dimension_numbers = #tpu.dot_dimension_numbers<[1], [0], [0], [1], [0, 0, 1, 1], [], []>} : vector<64x128xbf16>, vector<128x128xbf16>, vector<64x128xf32> -> vector<64x128xf32>
    %67 = arith.addf %61, %66 : vector<64x128xf32>
    %c0_69 = arith.constant 0 : index
    %c0_70 = arith.constant 0 : index
    %68 = vector.load %arg3[%c0_69, %c0_70] : memref<1x128xf32, #tpu.memory_space<vmem>>, vector<1x128xf32>
    %69 = vector.broadcast %68 : vector<1x128xf32> to vector<64x128xf32>
    %70 = arith.addf %67, %69 : vector<64x128xf32>
    %cst_71 = arith.constant 0.000000e+00 : f32
    %71 = vector.broadcast %cst_71 : f32 to vector<64x128xf32>
    %72 = arith.maximumf %70, %71 : vector<64x128xf32>
    %73 = vector.shape_cast %72 : vector<64x128xf32> to vector<8x8x128xf32>
    %c0_72 = arith.constant 0 : index
    %c0_73 = arith.constant 0 : index
    %c0_74 = arith.constant 0 : index
    %c0_75 = arith.constant 0 : index
    %74 = vector.load %arg6[%c0_72, %c0_73, %c0_74, %c0_75] : memref<1x8x8x128xf32, #tpu.memory_space<vmem>>, vector<1x8x8x128xf32>
    %75 = vector.shape_cast %74 : vector<1x8x8x128xf32> to vector<8x8x128xf32>
    %76 = vector.shape_cast %73 : vector<8x8x128xf32> to vector<1x8x8x128xf32>
    tpu.vector_store %arg6[%c0_72, %c0_73, %c0_74, %c0_75], %76 {strides = array<i32>} : memref<1x8x8x128xf32, #tpu.memory_space<vmem>>, vector<1x8x8x128xf32>,
    return
  }
  func.func @transform_0(%arg0: i32) -> (i32, i32, i32, i32) {
    %c0_i32 = arith.constant 0 : i32
    %c0_i32_0 = arith.constant 0 : i32
    %c0_i32_1 = arith.constant 0 : i32
    %c0_i32_2 = arith.constant 0 : i32
    return %arg0, %c0_i32, %c0_i32_0, %c0_i32_1 : i32, i32, i32, i32
  }
  func.func @transform_1(%arg0: i32) -> (i32, i32, i32) {
    %c0_i32 = arith.constant 0 : i32
    %c0_i32_0 = arith.constant 0 : i32
    %c0_i32_1 = arith.constant 0 : i32
    %c0_i32_2 = arith.constant 0 : i32
    return %c0_i32, %c0_i32_0, %c0_i32_1 : i32, i32, i32
  }
  func.func @transform_2(%arg0: i32) -> (i32, i32) {
    %c0_i32 = arith.constant 0 : i32
    %c0_i32_0 = arith.constant 0 : i32
    %c0_i32_1 = arith.constant 0 : i32
    return %c0_i32, %c0_i32_0 : i32, i32
  }
  func.func @transform_3(%arg0: i32) -> (i32, i32, i32, i32) {
    %c0_i32 = arith.constant 0 : i32
    %c0_i32_0 = arith.constant 0 : i32
    %c0_i32_1 = arith.constant 0 : i32
    %c0_i32_2 = arith.constant 0 : i32
    return %arg0, %c0_i32, %c0_i32_0, %c0_i32_1 : i32, i32, i32, i32
  }
  func.func @transform_4(%arg0: i32) -> (i32, i32) {
    %c0_i32 = arith.constant 0 : i32
    %c0_i32_0 = arith.constant 0 : i32
    %c0_i32_1 = arith.constant 0 : i32
    return %c0_i32, %c0_i32_0 : i32, i32
  }
  func.func @transform_5(%arg0: i32) -> (i32, i32, i32, i32) {
    %c0_i32 = arith.constant 0 : i32
    %c0_i32_0 = arith.constant 0 : i32
    %c0_i32_1 = arith.constant 0 : i32
    %c0_i32_2 = arith.constant 0 : i32
    return %arg0, %c0_i32, %c0_i32_0, %c0_i32_1 : i32, i32, i32, i32
  }
}

</mosaic_0001>

<llo_original>
// kernel: wrn_block_forward.2
$region0: #{wrn_block_forward.2}
  #allocation0 [shape = 'u32[]', space=smem, size = 0x4, offset = 0x4, fixed_abs, tag = 'smem constant byte address 0x4 - core index']
  #allocation1 [shape = 'u32[144,128]{1,0:T(1,128)}', space=vmem, size = 0x12000, scoped, tag = 'internal scratch']
  %s0 = inlined_call_operand.vmem [shape: bf16[8,9,9,128], index: 0, kind: input, shape index: {}]
  %s1 = inlined_call_operand.vmem [shape: bf16[9,128,128], index: 1, kind: input, shape index: {}]
  %s2 = inlined_call_operand.vmem [shape: f32[1,128], index: 2, kind: input, shape index: {}]
  %s3 = inlined_call_operand.vmem [shape: bf16[2,10,10,128], index: 3, kind: output, shape index: {}]
  %s4 = sld [smem:[#allocation0]]
  $region45: #{wrn_block_forward.2} parent=0
    _
  %s6 = ssub.s32 1, %s4
  %s7 = scalar_select 0, %s6, %s4
  loop: start=0, step=1, limit=4
  $region2: #{wrn_block_forward.2} parent=0 // loop_pre_header
    _
  $region3: #{wrn_block_forward.2} parent=0 // loop_header
    %s9 = sphi 0, %s13
    %p10 = scmp.ge.s32.totalorder %s9, 4
    %s19 = sphi 0, %s21
    %s22 = sphi 0, %s19
    %s23 = sphi 0, %s22
    %s39 = sphi 0, %s23
    %s43 = sphi 0, %s43
    %s45 = sphi 0, %s43
    %s46 = sphi 0, %s45
    %s60 = sphi 0, %s46
    %s64 = sphi 0, %s64
    %s66 = sphi 0, %s64
    %s67 = sphi 0, %s66
    %s81 = sphi 0, %s67
    %s87 = sphi 0, %s89
    %s90 = sphi 0, %s87
    %s91 = sphi 0, %s90
    %s107 = sphi 0, %s91
  $region4: #{wrn_block_forward.2} parent=0 // loop_header_branch
    %12 = sbr.rel (%p10) target = $region8
  $region5: #{wrn_block_forward.2} parent=0 // loop_body
    %s14 = ssub.s32 %s9, 1
    %s15 = ssub.s32 %s9, 2
    %s16 = sadd.s32 %s9, 1
    %s17 = ssub.s32 %s9, %s16
    %p18 = scmp.eq.s32.totalorder %s17, 0
    %s20 = sadd.s32 %s19, 1
    %s21 = scalar_select %p18, %s19, %s20
    %p24 = pneg %p18
    %p25 = scmp.eq.s32.totalorder %s9, 1
    %p26 = por %p24, %p25
    %p27 = scmp.ne.s32.totalorder %s19, %s22
    %p28 = scmp.eq.s32.totalorder %s9, 0
    %p29 = por %p27, %p28
    %p30 = scmp.ne.s32.totalorder %s19, %s22
    %p31 = scmp.eq.s32.totalorder %s14, 1
    %p32 = por %p30, %p31
    %p33 = scmp.ne.s32.totalorder %s22, %s23
    %p34 = scmp.eq.s32.totalorder %s14, 0
    %p35 = por %p33, %p34
    %p36 = scmp.ne.s32.totalorder %s22, %s23
    %p37 = scmp.eq.s32.totalorder %s15, 1
    %p38 = por %p36, %p37
    %p40 = scmp.ne.s32.totalorder %s23, %s39
    %p41 = scmp.eq.s32.totalorder %s15, 0
    %p42 = por %p40, %p41
    %s44 = sadd.s32 %s43, 1
    %p47 = scmp.eq.s32.totalorder %s9, 1
    %p48 = scmp.ne.s32.totalorder %s43, %s45
    %p49 = scmp.eq.s32.totalorder %s9, 0
    %p50 = por %p48, %p49
    %p51 = scmp.ne.s32.totalorder %s43, %s45
    %p52 = scmp.eq.s32.totalorder %s14, 1
    %p53 = por %p51, %p52
    %p54 = scmp.ne.s32.totalorder %s45, %s46
    %p55 = scmp.eq.s32.totalorder %s14, 0
    %p56 = por %p54, %p55
    %p57 = scmp.ne.s32.totalorder %s45, %s46
    %p58 = scmp.eq.s32.totalorder %s15, 1
    %p59 = por %p57, %p58
    %p61 = scmp.ne.s32.totalorder %s46, %s60
    %p62 = scmp.eq.s32.totalorder %s15, 0
    %p63 = por %p61, %p62
    %s65 = sadd.s32 %s64, 1
    %p68 = scmp.eq.s32.totalorder %s9, 1
    %p69 = scmp.ne.s32.totalorder %s64, %s66
    %p70 = scmp.eq.s32.totalorder %s9, 0
    %p71 = por %p69, %p70
    %p72 = scmp.ne.s32.totalorder %s64, %s66
    %p73 = scmp.eq.s32.totalorder %s14, 1
    %p74 = por %p72, %p73
    %p75 = scmp.ne.s32.totalorder %s66, %s67
    %p76 = scmp.eq.s32.totalorder %s14, 0
    %p77 = por %p75, %p76
    %p78 = scmp.ne.s32.totalorder %s66, %s67
    %p79 = scmp.eq.s32.totalorder %s15, 1
    %p80 = por %p78, %p79
    %p82 = scmp.ne.s32.totalorder %s67, %s81
    %p83 = scmp.eq.s32.totalorder %s15, 0
    %p84 = por %p82, %p83
    %s85 = ssub.s32 %s9, %s16
    %p86 = scmp.eq.s32.totalorder %s85, 0
    %s88 = sadd.s32 %s87, 1
    %s89 = scalar_select %p86, %s87, %s88
    %p92 = pneg %p86
    %p93 = scmp.eq.s32.totalorder %s9, 1
    %p94 = por %p92, %p93
    %p95 = scmp.ne.s32.totalorder %s87, %s90
    %p96 = scmp.eq.s32.totalorder %s9, 0
    %p97 = por %p95, %p96
    %p98 = scmp.ne.s32.totalorder %s87, %s90
    %p99 = scmp.eq.s32.totalorder %s14, 1
    %p100 = por %p98, %p99
    %p101 = scmp.ne.s32.totalorder %s90, %s91
    %p102 = scmp.eq.s32.totalorder %s14, 0
    %p103 = por %p101, %p102
    %p104 = scmp.ne.s32.totalorder %s90, %s91
    %p105 = scmp.eq.s32.totalorder %s15, 1
    %p106 = por %p104, %p105
    %p108 = scmp.ne.s32.totalorder %s91, %s107
    %p109 = scmp.eq.s32.totalorder %s15, 0
    %p110 = por %p108, %p109
    %p111 = scmp.le.s32.totalorder 1, %s9
    %p112 = scmp.lt.s32.totalorder %s9, 3
    %p113 = pnand %p111, %p112
    %p114 = pneg %p113
    // Predicated region
    $region9: #{wrn_block_forward.2} parent=5 // pred_check
      _
    $region10: #{wrn_block_forward.2} parent=5 // pred_check_branch
      %116 = sbr.rel (%p113) target = $region12
    $region11: #{wrn_block_forward.2} parent=5 // pred_region
      %s117 = ssub.s32 %s9, 1
      // Predicated region
      $region13: #{wrn_block_forward.2} parent=11 // pred_check
        %p118 = pneg %p56
      $region14: #{wrn_block_forward.2} parent=11 // pred_check_branch
        %120 = sbr.rel (%p118) target = $region16
      $region15: #{wrn_block_forward.2} parent=11 // pred_region
        _
      $region16: #{wrn_block_forward.2} parent=11 // pred_fallthru
        _
      // Predicated region
      $region17: #{wrn_block_forward.2} parent=11 // pred_check
        %p121 = pneg %p77
      $region18: #{wrn_block_forward.2} parent=11 // pred_check_branch
        %123 = sbr.rel (%p121) target = $region20
      $region19: #{wrn_block_forward.2} parent=11 // pred_region
        _
      $region20: #{wrn_block_forward.2} parent=11 // pred_fallthru
        _
    $region12: #{wrn_block_forward.2} parent=5 // pred_fallthru
      _
    %p124 = scmp.lt.s32.totalorder %s9, 2
    // Predicated region
    $region21: #{wrn_block_forward.2} parent=5 // pred_check
      %p125 = pneg %p124
    $region22: #{wrn_block_forward.2} parent=5 // pred_check_branch
      %127 = sbr.rel (%p125) target = $region24
    $region23: #{wrn_block_forward.2} parent=5 // pred_region
      // Predicated region
      $region25: #{wrn_block_forward.2} parent=23 // pred_check
        %p128 = pneg %p29
      $region26: #{wrn_block_forward.2} parent=23 // pred_check_branch
        %130 = sbr.rel (%p128) target = $region28
      $region27: #{wrn_block_forward.2} parent=23 // pred_region
        %s131 = smul.u32 4, %s9
        %p132 = scmp.lt.s32.totalorder %s131, 7
        %s133 = scalar_select %p132, %s131, 7
        %s134 = smul.addr %s133, 18
        %s135 = smul.addr %s134, 4
        %s136 = scalar_lea.vmem %s0, %s135
        %s137 = smul.u32 4, %s9
      $region28: #{wrn_block_forward.2} parent=23 // pred_fallthru
        _
    $region24: #{wrn_block_forward.2} parent=5 // pred_fallthru
      _
    %p138 = scmp.le.s32.totalorder 1, %s9
    %p139 = scmp.lt.s32.totalorder %s9, 3
    %p140 = pnand %p138, %p139
    %p141 = pneg %p140
    // Predicated region
    $region29: #{wrn_block_forward.2} parent=5 // pred_check
      _
    $region30: #{wrn_block_forward.2} parent=5 // pred_check_branch
      %143 = sbr.rel (%p140) target = $region32
    $region31: #{wrn_block_forward.2} parent=5 // pred_region
      %s144 = ssub.s32 %s9, 1
      %s145 = smul.u32 4, %s14
      %p146 = scmp.lt.s32.totalorder %s145, 7
      %s147 = scalar_select %p146, %s145, 7
      %s148 = smul.addr %s147, 18
      %s149 = smul.addr %s148, 4
      %s150 = scalar_lea.vmem %s0, %s149
      %p151 = pneg %p35
      %p152 = pneg %p32
      %p153 = pneg %p56
      %p154 = pneg %p53
      %p155 = pneg %p77
      %p156 = pneg %p74
      %p157 = pneg %p103
      %p158 = pneg %p100
      %p159 = scmp.lt.s32.totalorder %s14, 1
      %s160 = scalar_select %p159, %s14, 1
      %s161 = smul.addr %s160, 20
      %s162 = smul.addr %s161, 4
      %s163 = scalar_lea.vmem %s3, %s162
      %s164 = smul.u32 4, %s14
      %p165 = scmp.lt.s32.totalorder %s164, 7
      %s166 = scalar_select %p165, %s164, 7
      %s167 = smul.addr %s166, 18
      %s168 = smul.addr %s167, 4
      %s169 = scalar_lea.vmem %s0, %s168
      %s170 = smul.u32 4, %s14
      %p171 = scmp.lt.s32.totalorder %s14, 1
      %s172 = scalar_select %p171, %s14, 1
      %s173 = smul.addr %s172, 20
      %s174 = smul.addr %s173, 4
      %s175 = scalar_lea.vmem %s3, %s174
      %v177 = vld [vmem:[%s169] sm:$0xf]
      %v178 = vld [vmem:[%s169 + $0x8] sm:$0xf]
      %v179 = vld [vmem:[%s169 + $0x10] sm:$0xf]
      %v180 = vld [vmem:[%s169 + $0x18] sm:$0xf]
      %v181 = vld [vmem:[%s169 + $0x20] sm:$0xf]
      %v182 = vld [vmem:[%s169 + $0x28] sm:$0xf]
      %v183 = vld [vmem:[%s169 + $0x30] sm:$0xf]
      %v184 = vld [vmem:[%s169 + $0x38] sm:$0xf]
      %v185 = vld [vmem:[%s1] sm:$0xf]
      %v186 = vld [vmem:[%s1 + $0x4] sm:$0xf]
      %v187 = vld [vmem:[%s1 + $0x8] sm:$0xf]
      %v188 = vld [vmem:[%s1 + $0xc] sm:$0xf]
      %v189 = vld [vmem:[%s1 + $0x10] sm:$0xf]
      %v190 = vld [vmem:[%s1 + $0x14] sm:$0xf]
      %v191 = vld [vmem:[%s1 + $0x18] sm:$0xf]
      %v192 = vld [vmem:[%s1 + $0x1c] sm:$0xf]
      %v193 = vld [vmem:[%s1 + $0x20] sm:$0xf]
      %v194 = vld [vmem:[%s1 + $0x24] sm:$0xf]
      %v195 = vld [vmem:[%s1 + $0x28] sm:$0xf]
      %v196 = vld [vmem:[%s1 + $0x2c] sm:$0xf]
      %v197 = vld [vmem:[%s1 + $0x30] sm:$0xf]
      %v198 = vld [vmem:[%s1 + $0x34] sm:$0xf]
      %v199 = vld [vmem:[%s1 + $0x38] sm:$0xf]
      %v200 = vld [vmem:[%s1 + $0x3c] sm:$0xf]
      %s201 = scalar_lea.vmem %s169, 72
      %v202 = vld [vmem:[%s201] sm:$0xf]
      %v203 = vld [vmem:[%s201 + $0x8] sm:$0xf]
      %v204 = vld [vmem:[%s201 + $0x10] sm:$0xf]
      %v205 = vld [vmem:[%s201 + $0x18] sm:$0xf]
      %v206 = vld [vmem:[%s201 + $0x20] sm:$0xf]
      %v207 = vld [vmem:[%s201 + $0x28] sm:$0xf]
      %v208 = vld [vmem:[%s201 + $0x30] sm:$0xf]
      %v209 = vld [vmem:[%s201 + $0x38] sm:$0xf]
      %s210 = scalar_lea.vmem %s1, 64
      %v211 = vld [vmem:[%s210] sm:$0xf]
      %v212 = vld [vmem:[%s210 + $0x4] sm:$0xf]
      %v213 = vld [vmem:[%s210 + $0x8] sm:$0xf]
      %v214 = vld [vmem:[%s210 + $0xc] sm:$0xf]
      %v215 = vld [vmem:[%s210 + $0x10] sm:$0xf]
      %v216 = vld [vmem:[%s210 + $0x14] sm:$0xf]
      %v217 = vld [vmem:[%s210 + $0x18] sm:$0xf]
      %v218 = vld [vmem:[%s210 + $0x1c] sm:$0xf]
      %v219 = vld [vmem:[%s210 + $0x20] sm:$0xf]
      %v220 = vld [vmem:[%s210 + $0x24] sm:$0xf]
      %v221 = vld [vmem:[%s210 + $0x28] sm:$0xf]
      %v222 = vld [vmem:[%s210 + $0x2c] sm:$0xf]
      %v223 = vld [vmem:[%s210 + $0x30] sm:$0xf]
      %v224 = vld [vmem:[%s210 + $0x34] sm:$0xf]
      %v225 = vld [vmem:[%s210 + $0x38] sm:$0xf]
      %v226 = vld [vmem:[%s210 + $0x3c] sm:$0xf]
      %v235 = vunpack.c.l.b16 %v202
      %v236 = vunpack.c.l.b16 %v203
      %v237 = vunpack.c.l.b16 %v204
      %v238 = vunpack.c.l.b16 %v205
      %v239 = vunpack.c.l.b16 %v206
      %v240 = vunpack.c.l.b16 %v207
      %v241 = vunpack.c.l.b16 %v208
      %v242 = vunpack.c.l.b16 %v209
      %v243 = vpack.c.b16 %v236, %v235
      %v244 = vpack.c.b16 %v238, %v237
      %v245 = vpack.c.b16 %v240, %v239
      %v246 = vpack.c.b16 %v242, %v241
      %v267 = vunpack.c.l.b16 %v211
      %v268 = vunpack.c.l.b16 %v212
      %v269 = vunpack.c.l.b16 %v213
      %v270 = vunpack.c.l.b16 %v214
      %v271 = vunpack.c.l.b16 %v215
      %v272 = vunpack.c.l.b16 %v216
      %v273 = vunpack.c.l.b16 %v217
      %v274 = vunpack.c.l.b16 %v218
      %v275 = vunpack.c.l.b16 %v219
      %v276 = vunpack.c.l.b16 %v220
      %v277 = vunpack.c.l.b16 %v221
      %v278 = vunpack.c.l.b16 %v222
      %v279 = vunpack.c.l.b16 %v223
      %v280 = vunpack.c.l.b16 %v224
      %v281 = vunpack.c.l.b16 %v225
      %v282 = vunpack.c.l.b16 %v226
      %v283 = vpack.c.b16 %v268, %v267
      %v284 = vpack.c.b16 %v270, %v269
      %v285 = vpack.c.b16 %v272, %v271
      %v286 = vpack.c.b16 %v274, %v273
      %v287 = vpack.c.b16 %v276, %v275
      %v288 = vpack.c.b16 %v278, %v277
      %v289 = vpack.c.b16 %v280, %v279
      %v290 = vpack.c.b16 %v282, %v281
      %299 = vmatprep.subr.bf16.mxu0 0
      %300 = vmatpush1.bf16.msra.mxu0 %v283
      %301 = vmatprep.subr.bf16.mxu0 0
      %302 = vmatpush1.bf16.msra.mxu0 %v284
      %303 = vmatprep.subr.bf16.mxu0 0
      %304 = vmatpush1.bf16.msra.mxu0 %v285
      %305 = vmatprep.subr.bf16.mxu0 0
      %306 = vmatpush1.bf16.msra.mxu0 %v286
      %307 = vmatprep.subr.bf16.mxu0 0
      %308 = vmatpush1.bf16.msra.mxu0 %v287
      %309 = vmatprep.subr.bf16.mxu0 0
      %310 = vmatpush1.bf16.msra.mxu0 %v288
      %311 = vmatprep.subr.bf16.mxu0 0
      %312 = vmatpush1.bf16.msra.mxu0 %v289
      %313 = vmatprep.subr.bf16.mxu0 0
      %314 = vmatpush1.bf16.msra.mxu0 %v290
      %315 = vmatprep.subr.bf16.mxu0 0
      %316 = vmatpush1.bf16.msra.mxu0 0
      %317 = vmatprep.subr.bf16.mxu0 0
      %318 = vmatpush1.bf16.msra.mxu0 0
      %319 = vmatprep.subr.bf16.mxu0 0
      %320 = vmatpush1.bf16.msra.mxu0 0
      %321 = vmatprep.subr.bf16.mxu0 0
      %322 = vmatpush1.bf16.msra.mxu0 0
      %323 = vmatprep.subr.bf16.mxu0 0
      %324 = vmatpush1.bf16.msra.mxu0 0
      %325 = vmatprep.subr.bf16.mxu0 0
      %326 = vmatpush1.bf16.msra.mxu0 0
      %327 = vmatprep.subr.bf16.mxu0 0
      %328 = vmatpush1.bf16.msra.mxu0 0
      %329 = vmatprep.subr.bf16.mxu0 0
      %330 = vmatpush1.bf16.msra.mxu0 0
      %331 = vmatprep.mubr.bf16.mxu0 0
      %332 = vmatmul.mubr.bf16.gmra.mrb[0].mxu0 %v243
      %v333 = vpop.f32.mrb[0].mxu0
      %v334 = vadd.f32 0.0, %v333
      %v335 = vpop.f32.mrb[0].mxu0
      %v336 = vpop.f32.mrb[0].mxu0
      %v337 = vadd.f32 0.0, %v336
      %v338 = vpop.f32.mrb[0].mxu0
      %339 = vmatprep.mubr.bf16.mxu0 0
      %340 = vmatmul.mubr.bf16.gmra.mrb[0].mxu0 %v244
      %v341 = vpop.f32.mrb[0].mxu0
      %v342 = vadd.f32 0.0, %v341
      %v343 = vpop.f32.mrb[0].mxu0
      %v344 = vpop.f32.mrb[0].mxu0
      %v345 = vadd.f32 0.0, %v344
      %v346 = vpop.f32.mrb[0].mxu0
      %347 = vmatprep.mubr.bf16.mxu0 0
      %348 = vmatmul.mubr.bf16.gmra.mrb[0].mxu0 %v245
      %v349 = vpop.f32.mrb[0].mxu0
      %v350 = vadd.f32 0.0, %v349
      %v351 = vpop.f32.mrb[0].mxu0
      %v352 = vpop.f32.mrb[0].mxu0
      %v353 = vadd.f32 0.0, %v352
      %v354 = vpop.f32.mrb[0].mxu0
      %355 = vmatprep.mubr.bf16.mxu0 0
      %356 = vmatmul.mubr.bf16.gmra.mrb[0].mxu0 %v246
      %v357 = vpop.f32.mrb[0].mxu0
      %v358 = vadd.f32 0.0, %v357
      %v359 = vpop.f32.mrb[0].mxu0
      %v360 = vpop.f32.mrb[0].mxu0
      %v361 = vadd.f32 0.0, %v360
      %v362 = vpop.f32.mrb[0].mxu0
      %363 = vdwg.mxu0
      %v372 = vunpack.c.l.b16 %v177
      %v373 = vunpack.c.l.b16 %v178
      %v374 = vunpack.c.l.b16 %v179
      %v375 = vunpack.c.l.b16 %v180
      %v376 = vunpack.c.l.b16 %v181
      %v377 = vunpack.c.l.b16 %v182
      %v378 = vunpack.c.l.b16 %v183
      %v379 = vunpack.c.l.b16 %v184
      %v380 = vpack.c.b16 %v373, %v372
      %v381 = vpack.c.b16 %v375, %v374
      %v382 = vpack.c.b16 %v377, %v376
      %v383 = vpack.c.b16 %v379, %v378
      %v404 = vunpack.c.l.b16 %v185
      %v405 = vunpack.c.l.b16 %v186
      %v406 = vunpack.c.l.b16 %v187
      %v407 = vunpack.c.l.b16 %v188
      %v408 = vunpack.c.l.b16 %v189
      %v409 = vunpack.c.l.b16 %v190
      %v410 = vunpack.c.l.b16 %v191
      %v411 = vunpack.c.l.b16 %v192
      %v412 = vunpack.c.l.b16 %v193
      %v413 = vunpack.c.l.b16 %v194
      %v414 = vunpack.c.l.b16 %v195
      %v415 = vunpack.c.l.b16 %v196
      %v416 = vunpack.c.l.b16 %v197
      %v417 = vunpack.c.l.b16 %v198
      %v418 = vunpack.c.l.b16 %v199
      %v419 = vunpack.c.l.b16 %v200
      %v420 = vpack.c.b16 %v405, %v404
      %v421 = vpack.c.b16 %v407, %v406
      %v422 = vpack.c.b16 %v409, %v408
      %v423 = vpack.c.b16 %v411, %v410
      %v424 = vpack.c.b16 %v413, %v412
      %v425 = vpack.c.b16 %v415, %v414
      %v426 = vpack.c.b16 %v417, %v416
      %v427 = vpack.c.b16 %v419, %v418
      %436 = vmatprep.subr.bf16.mxu0 0
      %437 = vmatpush1.bf16.msra.mxu0 %v420
      %438 = vmatprep.subr.bf16.mxu0 0
      %439 = vmatpush1.bf16.msra.mxu0 %v421
      %440 = vmatprep.subr.bf16.mxu0 0
      %441 = vmatpush1.bf16.msra.mxu0 %v422
      %442 = vmatprep.subr.bf16.mxu0 0
      %443 = vmatpush1.bf16.msra.mxu0 %v423
      %444 = vmatprep.subr.bf16.mxu0 0
      %445 = vmatpush1.bf16.msra.mxu0 %v424
      %446 = vmatprep.subr.bf16.mxu0 0
      %447 = vmatpush1.bf16.msra.mxu0 %v425
      %448 = vmatprep.subr.bf16.mxu0 0
      %449 = vmatpush1.bf16.msra.mxu0 %v426
      %450 = vmatprep.subr.bf16.mxu0 0
      %451 = vmatpush1.bf16.msra.mxu0 %v427
      %452 = vmatprep.subr.bf16.mxu0 0
      %453 = vmatpush1.bf16.msra.mxu0 0
      %454 = vmatprep.subr.bf16.mxu0 0
      %455 = vmatpush1.bf16.msra.mxu0 0
      %456 = vmatprep.subr.bf16.mxu0 0
      %457 = vmatpush1.bf16.msra.mxu0 0
      %458 = vmatprep.subr.bf16.mxu0 0
      %459 = vmatpush1.bf16.msra.mxu0 0
      %460 = vmatprep.subr.bf16.mxu0 0
      %461 = vmatpush1.bf16.msra.mxu0 0
      %462 = vmatprep.subr.bf16.mxu0 0
      %463 = vmatpush1.bf16.msra.mxu0 0
      %464 = vmatprep.subr.bf16.mxu0 0
      %465 = vmatpush1.bf16.msra.mxu0 0
      %466 = vmatprep.subr.bf16.mxu0 0
      %467 = vmatpush1.bf16.msra.mxu0 0
      %468 = vmatprep.mubr.bf16.mxu0 0
      %469 = vmatmul.mubr.bf16.gmra.mrb[0].mxu0 %v380
      %v470 = vpop.f32.mrb[0].mxu0
      %v471 = vadd.f32 %v334, %v470
      %v472 = vpop.f32.mrb[0].mxu0
      %v473 = vpop.f32.mrb[0].mxu0
      %v474 = vadd.f32 %v337, %v473
      %v475 = vpop.f32.mrb[0].mxu0
      %476 = vmatprep.mubr.bf16.mxu0 0
      %477 = vmatmul.mubr.bf16.gmra.mrb[0].mxu0 %v381
      %v478 = vpop.f32.mrb[0].mxu0
      %v479 = vadd.f32 %v342, %v478
      %v480 = vpop.f32.mrb[0].mxu0
      %v481 = vpop.f32.mrb[0].mxu0
      %v482 = vadd.f32 %v345, %v481
      %v483 = vpop.f32.mrb[0].mxu0
      %484 = vmatprep.mubr.bf16.mxu0 0
      %485 = vmatmul.mubr.bf16.gmra.mrb[0].mxu0 %v382
      %v486 = vpop.f32.mrb[0].mxu0
      %v487 = vadd.f32 %v350, %v486
      %v488 = vpop.f32.mrb[0].mxu0
      %v489 = vpop.f32.mrb[0].mxu0
      %v490 = vadd.f32 %v353, %v489
      %v491 = vpop.f32.mrb[0].mxu0
      %492 = vmatprep.mubr.bf16.mxu0 0
      %493 = vmatmul.mubr.bf16.gmra.mrb[0].mxu0 %v383
      %v494 = vpop.f32.mrb[0].mxu0
      %v495 = vadd.f32 %v358, %v494
      %v496 = vpop.f32.mrb[0].mxu0
      %v497 = vpop.f32.mrb[0].mxu0
      %v498 = vadd.f32 %v361, %v497
      %v499 = vpop.f32.mrb[0].mxu0
      %500 = vdwg.mxu0
      %v501 = vld [vmem:[%s169] sm:$0xf]
      %v502 = vld [vmem:[%s169 + $0x4] sm:$0x1]
      %v503 = vld [vmem:[%s169 + $0x8] sm:$0xf]
      %v504 = vld [vmem:[%s169 + $0xc] sm:$0x1]
      %v505 = vld [vmem:[%s169 + $0x10] sm:$0xf]
      %v506 = vld [vmem:[%s169 + $0x14] sm:$0x1]
      %v507 = vld [vmem:[%s169 + $0x18] sm:$0xf]
      %v508 = vld [vmem:[%s169 + $0x1c] sm:$0x1]
      %v509 = vld [vmem:[%s169 + $0x20] sm:$0xf]
      %v510 = vld [vmem:[%s169 + $0x24] sm:$0x1]
      %v511 = vld [vmem:[%s169 + $0x28] sm:$0xf]
      %v512 = vld [vmem:[%s169 + $0x2c] sm:$0x1]
      %v513 = vld [vmem:[%s169 + $0x30] sm:$0xf]
      %v514 = vld [vmem:[%s169 + $0x34] sm:$0x1]
      %v515 = vld [vmem:[%s169 + $0x38] sm:$0xf]
      %v516 = vld [vmem:[%s169 + $0x3c] sm:$0x1]
      %vm517 = vsmask.f32 3328
      %vm518 = vsmask.f32 7440
      %vm519 = vmor %vm517, %vm518
      %v521 = vshrl.u32 %v501, 16
      %v523 = vrot.slane %v521, 4
      %v524 = vshll.u32 %v501, 16
      %v526 = vrot.slane %v524, 5
      %v527 = vor.u32 %v523, %v526
      %v528 = vrot.slane %v527, 4
      %v530 = vshll.u32 %v502, 16
      %v532 = vrot.slane %v530, 5
      %v533 = vsel %vm519, %v528, %v532
      %v535 = vshrl.u32 %v503, 16
      %v537 = vrot.slane %v535, 4
      %v538 = vshll.u32 %v503, 16
      %v540 = vrot.slane %v538, 5
      %v541 = vor.u32 %v537, %v540
      %v542 = vrot.slane %v541, 4
      %v544 = vshll.u32 %v504, 16
      %v546 = vrot.slane %v544, 5
      %v547 = vsel %vm519, %v542, %v546
      %v549 = vshrl.u32 %v505, 16
      %v551 = vrot.slane %v549, 4
      %v552 = vshll.u32 %v505, 16
      %v554 = vrot.slane %v552, 5
      %v555 = vor.u32 %v551, %v554
      %v556 = vrot.slane %v555, 4
      %v558 = vshll.u32 %v506, 16
      %v560 = vrot.slane %v558, 5
      %v561 = vsel %vm519, %v556, %v560
      %v563 = vshrl.u32 %v507, 16
      %v565 = vrot.slane %v563, 4
      %v566 = vshll.u32 %v507, 16
      %v568 = vrot.slane %v566, 5
      %v569 = vor.u32 %v565, %v568
      %v570 = vrot.slane %v569, 4
      %v572 = vshll.u32 %v508, 16
      %v574 = vrot.slane %v572, 5
      %v575 = vsel %vm519, %v570, %v574
      %v577 = vshrl.u32 %v509, 16
      %v579 = vrot.slane %v577, 4
      %v580 = vshll.u32 %v509, 16
      %v582 = vrot.slane %v580, 5
      %v583 = vor.u32 %v579, %v582
      %v584 = vrot.slane %v583, 4
      %v586 = vshll.u32 %v510, 16
      %v588 = vrot.slane %v586, 5
      %v589 = vsel %vm519, %v584, %v588
      %v591 = vshrl.u32 %v511, 16
      %v593 = vrot.slane %v591, 4
      %v594 = vshll.u32 %v511, 16
      %v596 = vrot.slane %v594, 5
      %v597 = vor.u32 %v593, %v596
      %v598 = vrot.slane %v597, 4
      %v600 = vshll.u32 %v512, 16
      %v602 = vrot.slane %v600, 5
      %v603 = vsel %vm519, %v598, %v602
      %v605 = vshrl.u32 %v513, 16
      %v607 = vrot.slane %v605, 4
      %v608 = vshll.u32 %v513, 16
      %v610 = vrot.slane %v608, 5
      %v611 = vor.u32 %v607, %v610
      %v612 = vrot.slane %v611, 4
      %v614 = vshll.u32 %v514, 16
      %v616 = vrot.slane %v614, 5
      %v617 = vsel %vm519, %v612, %v616
      %v619 = vshrl.u32 %v515, 16
      %v621 = vrot.slane %v619, 4
      %v622 = vshll.u32 %v515, 16
      %v624 = vrot.slane %v622, 5
      %v625 = vor.u32 %v621, %v624
      %v626 = vrot.slane %v625, 4
      %v628 = vshll.u32 %v516, 16
      %v630 = vrot.slane %v628, 5
      %v631 = vsel %vm519, %v626, %v630
      %s632 = scalar_lea.vmem %s1, 128
      %v633 = vld [vmem:[%s632] sm:$0xf]
      %v634 = vld [vmem:[%s632 + $0x4] sm:$0xf]
      %v635 = vld [vmem:[%s632 + $0x8] sm:$0xf]
      %v636 = vld [vmem:[%s632 + $0xc] sm:$0xf]
      %v637 = vld [vmem:[%s632 + $0x10] sm:$0xf]
      %v638 = vld [vmem:[%s632 + $0x14] sm:$0xf]
      %v639 = vld [vmem:[%s632 + $0x18] sm:$0xf]
      %v640 = vld [vmem:[%s632 + $0x1c] sm:$0xf]
      %v641 = vld [vmem:[%s632 + $0x20] sm:$0xf]
      %v642 = vld [vmem:[%s632 + $0x24] sm:$0xf]
      %v643 = vld [vmem:[%s632 + $0x28] sm:$0xf]
      %v644 = vld [vmem:[%s632 + $0x2c] sm:$0xf]
      %v645 = vld [vmem:[%s632 + $0x30] sm:$0xf]
      %v646 = vld [vmem:[%s632 + $0x34] sm:$0xf]
      %v647 = vld [vmem:[%s632 + $0x38] sm:$0xf]
      %v648 = vld [vmem:[%s632 + $0x3c] sm:$0xf]
      %v649 = vunpack.c.l.b16 %v533
      %v650 = vunpack.c.l.b16 %v547
      %v651 = vunpack.c.l.b16 %v561
      %v652 = vunpack.c.l.b16 %v575
      %v653 = vunpack.c.l.b16 %v589
      %v654 = vunpack.c.l.b16 %v603
      %v655 = vunpack.c.l.b16 %v617
      %v656 = vunpack.c.l.b16 %v631
      %v657 = vpack.c.b16 %v650, %v649
      %v658 = vpack.c.b16 %v652, %v651
      %v659 = vpack.c.b16 %v654, %v653
      %v660 = vpack.c.b16 %v656, %v655
      %v681 = vunpack.c.l.b16 %v633
      %v682 = vunpack.c.l.b16 %v634
      %v683 = vunpack.c.l.b16 %v635
      %v684 = vunpack.c.l.b16 %v636
      %v685 = vunpack.c.l.b16 %v637
      %v686 = vunpack.c.l.b16 %v638
      %v687 = vunpack.c.l.b16 %v639
      %v688 = vunpack.c.l.b16 %v640
      %v689 = vunpack.c.l.b16 %v641
      %v690 = vunpack.c.l.b16 %v642
      %v691 = vunpack.c.l.b16 %v643
      %v692 = vunpack.c.l.b16 %v644
      %v693 = vunpack.c.l.b16 %v645
      %v694 = vunpack.c.l.b16 %v646
      %v695 = vunpack.c.l.b16 %v647
      %v696 = vunpack.c.l.b16 %v648
      %v697 = vpack.c.b16 %v682, %v681
      %v698 = vpack.c.b16 %v684, %v683
      %v699 = vpack.c.b16 %v686, %v685
      %v700 = vpack.c.b16 %v688, %v687
      %v701 = vpack.c.b16 %v690, %v689
      %v702 = vpack.c.b16 %v692, %v691
      %v703 = vpack.c.b16 %v694, %v693
      %v704 = vpack.c.b16 %v696, %v695
      %713 = vmatprep.subr.bf16.mxu0 0
      %714 = vmatpush1.bf16.msra.mxu0 %v697
      %715 = vmatprep.subr.bf16.mxu0 0
      %716 = vmatpush1.bf16.msra.mxu0 %v698
      %717 = vmatprep.subr.bf16.mxu0 0
      %718 = vmatpush1.bf16.msra.mxu0 %v699
      %719 = vmatprep.subr.bf16.mxu0 0
      %720 = vmatpush1.bf16.msra.mxu0 %v700
      %721 = vmatprep.subr.bf16.mxu0 0
      %722 = vmatpush1.bf16.msra.mxu0 %v701
      %723 = vmatprep.subr.bf16.mxu0 0
      %724 = vmatpush1.bf16.msra.mxu0 %v702
      %725 = vmatprep.subr.bf16.mxu0 0
      %726 = vmatpush1.bf16.msra.mxu0 %v703
      %727 = vmatprep.subr.bf16.mxu0 0
      %728 = vmatpush1.bf16.msra.mxu0 %v704
      %729 = vmatprep.subr.bf16.mxu0 0
      %730 = vmatpush1.bf16.msra.mxu0 0
      %731 = vmatprep.subr.bf16.mxu0 0
      %732 = vmatpush1.bf16.msra.mxu0 0
      %733 = vmatprep.subr.bf16.mxu0 0
      %734 = vmatpush1.bf16.msra.mxu0 0
      %735 = vmatprep.subr.bf16.mxu0 0
      %736 = vmatpush1.bf16.msra.mxu0 0
      %737 = vmatprep.subr.bf16.mxu0 0
      %738 = vmatpush1.bf16.msra.mxu0 0
      %739 = vmatprep.subr.bf16.mxu0 0
      %740 = vmatpush1.bf16.msra.mxu0 0
      %741 = vmatprep.subr.bf16.mxu0 0
      %742 = vmatpush1.bf16.msra.mxu0 0
      %743 = vmatprep.subr.bf16.mxu0 0
      %744 = vmatpush1.bf16.msra.mxu0 0
      %745 = vmatprep.mubr.bf16.mxu0 0
      %746 = vmatmul.mubr.bf16.gmra.mrb[0].mxu0 %v657
      %v747 = vpop.f32.mrb[0].mxu0
      %v748 = vadd.f32 0.0, %v747
      %v749 = vpop.f32.mrb[0].mxu0
      %v750 = vpop.f32.mrb[0].mxu0
      %v751 = vadd.f32 0.0, %v750
      %v752 = vpop.f32.mrb[0].mxu0
      %753 = vmatprep.mubr.bf16.mxu0 0
      %754 = vmatmul.mubr.bf16.gmra.mrb[0].mxu0 %v658
      %v755 = vpop.f32.mrb[0].mxu0
      %v756 = vadd.f32 0.0, %v755
      %v757 = vpop.f32.mrb[0].mxu0
      %v758 = vpop.f32.mrb[0].mxu0
      %v759 = vadd.f32 0.0, %v758
      %v760 = vpop.f32.mrb[0].mxu0
      %761 = vmatprep.mubr.bf16.mxu0 0
      %762 = vmatmul.mubr.bf16.gmra.mrb[0].mxu0 %v659
      %v763 = vpop.f32.mrb[0].mxu0
      %v764 = vadd.f32 0.0, %v763
      %v765 = vpop.f32.mrb[0].mxu0
      %v766 = vpop.f32.mrb[0].mxu0
      %v767 = vadd.f32 0.0, %v766
      %v768 = vpop.f32.mrb[0].mxu0
      %769 = vmatprep.mubr.bf16.mxu0 0
      %770 = vmatmul.mubr.bf16.gmra.mrb[0].mxu0 %v660
      %v771 = vpop.f32.mrb[0].mxu0
      %v772 = vadd.f32 0.0, %v771
      %v773 = vpop.f32.mrb[0].mxu0
      %v774 = vpop.f32.mrb[0].mxu0
      %v775 = vadd.f32 0.0, %v774
      %v776 = vpop.f32.mrb[0].mxu0
      %777 = vdwg.mxu0
      %v778 = vadd.f32 %v471, %v748
      %v779 = vadd.f32 %v474, %v751
      %v780 = vadd.f32 %v479, %v756
      %v781 = vadd.f32 %v482, %v759
      %v782 = vadd.f32 %v487, %v764
      %v783 = vadd.f32 %v490, %v767
      %v784 = vadd.f32 %v495, %v772
      %v785 = vadd.f32 %v498, %v775
      %s786 = scalar_lea.vmem %s169, 144
      %v787 = vld [vmem:[%s786] sm:$0xf]
      %v788 = vld [vmem:[%s786 + $0x8] sm:$0xf]
      %v789 = vld [vmem:[%s786 + $0x10] sm:$0xf]
      %v790 = vld [vmem:[%s786 + $0x18] sm:$0xf]
      %v791 = vld [vmem:[%s786 + $0x20] sm:$0xf]
      %v792 = vld [vmem:[%s786 + $0x28] sm:$0xf]
      %v793 = vld [vmem:[%s786 + $0x30] sm:$0xf]
      %v794 = vld [vmem:[%s786 + $0x38] sm:$0xf]
      %s795 = scalar_lea.vmem %s1, 192
      %v796 = vld [vmem:[%s795] sm:$0xf]
      %v797 = vld [vmem:[%s795 + $0x4] sm:$0xf]
      %v798 = vld [vmem:[%s795 + $0x8] sm:$0xf]
      %v799 = vld [vmem:[%s795 + $0xc] sm:$0xf]
      %v800 = vld [vmem:[%s795 + $0x10] sm:$0xf]
      %v801 = vld [vmem:[%s795 + $0x14] sm:$0xf]
      %v802 = vld [vmem:[%s795 + $0x18] sm:$0xf]
      %v803 = vld [vmem:[%s795 + $0x1c] sm:$0xf]
      %v804 = vld [vmem:[%s795 + $0x20] sm:$0xf]
      %v805 = vld [vmem:[%s795 + $0x24] sm:$0xf]
      %v806 = vld [vmem:[%s795 + $0x28] sm:$0xf]
      %v807 = vld [vmem:[%s795 + $0x2c] sm:$0xf]
      %v808 = vld [vmem:[%s795 + $0x30] sm:$0xf]
      %v809 = vld [vmem:[%s795 + $0x34] sm:$0xf]
      %v810 = vld [vmem:[%s795 + $0x38] sm:$0xf]
      %v811 = vld [vmem:[%s795 + $0x3c] sm:$0xf]
      %v820 = vunpack.c.l.b16 %v787
      %v821 = vunpack.c.l.b16 %v788
      %v822 = vunpack.c.l.b16 %v789
      %v823 = vunpack.c.l.b16 %v790
      %v824 = vunpack.c.l.b16 %v791
      %v825 = vunpack.c.l.b16 %v792
      %v826 = vunpack.c.l.b16 %v793
      %v827 = vunpack.c.l.b16 %v794
      %v828 = vpack.c.b16 %v821, %v820
      %v829 = vpack.c.b16 %v823, %v822
      %v830 = vpack.c.b16 %v825, %v824
      %v831 = vpack.c.b16 %v827, %v826
      %v852 = vunpack.c.l.b16 %v796
      %v853 = vunpack.c.l.b16 %v797
      %v854 = vunpack.c.l.b16 %v798
      %v855 = vunpack.c.l.b16 %v799
      %v856 = vunpack.c.l.b16 %v800
      %v857 = vunpack.c.l.b16 %v801
      %v858 = vunpack.c.l.b16 %v802
      %v859 = vunpack.c.l.b16 %v803
      %v860 = vunpack.c.l.b16 %v804
      %v861 = vunpack.c.l.b16 %v805
      %v862 = vunpack.c.l.b16 %v806
      %v863 = vunpack.c.l.b16 %v807
      %v864 = vunpack.c.l.b16 %v808
      %v865 = vunpack.c.l.b16 %v809
      %v866 = vunpack.c.l.b16 %v810
      %v867 = vunpack.c.l.b16 %v811
      %v868 = vpack.c.b16 %v853, %v852
      %v869 = vpack.c.b16 %v855, %v854
      %v870 = vpack.c.b16 %v857, %v856
      %v871 = vpack.c.b16 %v859, %v858
      %v872 = vpack.c.b16 %v861, %v860
      %v873 = vpack.c.b16 %v863, %v862
      %v874 = vpack.c.b16 %v865, %v864
      %v875 = vpack.c.b16 %v867, %v866
      %884 = vmatprep.subr.bf16.mxu0 0
      %885 = vmatpush1.bf16.msra.mxu0 %v868
      %886 = vmatprep.subr.bf16.mxu0 0
      %887 = vmatpush1.bf16.msra.mxu0 %v869
      %888 = vmatprep.subr.bf16.mxu0 0
      %889 = vmatpush1.bf16.msra.mxu0 %v870
      %890 = vmatprep.subr.bf16.mxu0 0
      %891 = vmatpush1.bf16.msra.mxu0 %v871
      %892 = vmatprep.subr.bf16.mxu0 0
      %893 = vmatpush1.bf16.msra.mxu0 %v872
      %894 = vmatprep.subr.bf16.mxu0 0
      %895 = vmatpush1.bf16.msra.mxu0 %v873
      %896 = vmatprep.subr.bf16.mxu0 0
      %897 = vmatpush1.bf16.msra.mxu0 %v874
      %898 = vmatprep.subr.bf16.mxu0 0
      %899 = vmatpush1.bf16.msra.mxu0 %v875
      %900 = vmatprep.subr.bf16.mxu0 0
      %901 = vmatpush1.bf16.msra.mxu0 0
      %902 = vmatprep.subr.bf16.mxu0 0
      %903 = vmatpush1.bf16.msra.mxu0 0
      %904 = vmatprep.subr.bf16.mxu0 0
      %905 = vmatpush1.bf16.msra.mxu0 0
      %906 = vmatprep.subr.bf16.mxu0 0
      %907 = vmatpush1.bf16.msra.mxu0 0
      %908 = vmatprep.subr.bf16.mxu0 0
      %909 = vmatpush1.bf16.msra.mxu0 0
      %910 = vmatprep.subr.bf16.mxu0 0
      %911 = vmatpush1.bf16.msra.mxu0 0
      %912 = vmatprep.subr.bf16.mxu0 0
      %913 = vmatpush1.bf16.msra.mxu0 0
      %914 = vmatprep.subr.bf16.mxu0 0
      %915 = vmatpush1.bf16.msra.mxu0 0
      %916 = vmatprep.mubr.bf16.mxu0 0
      %917 = vmatmul.mubr.bf16.gmra.mrb[0].mxu0 %v828
      %v918 = vpop.f32.mrb[0].mxu0
      %v919 = vadd.f32 0.0, %v918
      %v920 = vpop.f32.mrb[0].mxu0
      %v921 = vpop.f32.mrb[0].mxu0
      %v922 = vadd.f32 0.0, %v921
      %v923 = vpop.f32.mrb[0].mxu0
      %924 = vmatprep.mubr.bf16.mxu0 0
      %925 = vmatmul.mubr.bf16.gmra.mrb[0].mxu0 %v829
      %v926 = vpop.f32.mrb[0].mxu0
      %v927 = vadd.f32 0.0, %v926
      %v928 = vpop.f32.mrb[0].mxu0
      %v929 = vpop.f32.mrb[0].mxu0
      %v930 = vadd.f32 0.0, %v929
      %v931 = vpop.f32.mrb[0].mxu0
      %932 = vmatprep.mubr.bf16.mxu0 0
      %933 = vmatmul.mubr.bf16.gmra.mrb[0].mxu0 %v830
      %v934 = vpop.f32.mrb[0].mxu0
      %v935 = vadd.f32 0.0, %v934
      %v936 = vpop.f32.mrb[0].mxu0
      %v937 = vpop.f32.mrb[0].mxu0
      %v938 = vadd.f32 0.0, %v937
      %v939 = vpop.f32.mrb[0].mxu0
      %940 = vmatprep.mubr.bf16.mxu0 0
      %941 = vmatmul.mubr.bf16.gmra.mrb[0].mxu0 %v831
      %v942 = vpop.f32.mrb[0].mxu0
      %v943 = vadd.f32 0.0, %v942
      %v944 = vpop.f32.mrb[0].mxu0
      %v945 = vpop.f32.mrb[0].mxu0
      %v946 = vadd.f32 0.0, %v945
      %v947 = vpop.f32.mrb[0].mxu0
      %948 = vdwg.mxu0
      %v949 = vadd.f32 %v778, %v919
      %v950 = vadd.f32 %v779, %v922
      %v951 = vadd.f32 %v780, %v927
      %v952 = vadd.f32 %v781, %v930
      %v953 = vadd.f32 %v782, %v935
      %v954 = vadd.f32 %v783, %v938
      %v955 = vadd.f32 %v784, %v943
      %v956 = vadd.f32 %v785, %v946
      %s957 = scalar_lea.vmem %s169, 216
      %v958 = vld [vmem:[%s957] sm:$0xf]
      %v959 = vld [vmem:[%s957 + $0x8] sm:$0xf]
      %v960 = vld [vmem:[%s957 + $0x10] sm:$0xf]
      %v961 = vld [vmem:[%s957 + $0x18] sm:$0xf]
      %v962 = vld [vmem:[%s957 + $0x20] sm:$0xf]
      %v963 = vld [vmem:[%s957 + $0x28] sm:$0xf]
      %v964 = vld [vmem:[%s957 + $0x30] sm:$0xf]
      %v965 = vld [vmem:[%s957 + $0x38] sm:$0xf]
      %s966 = scalar_lea.vmem %s1, 256
      %v967 = vld [vmem:[%s966] sm:$0xf]
      %v968 = vld [vmem:[%s966 + $0x4] sm:$0xf]
      %v969 = vld [vmem:[%s966 + $0x8] sm:$0xf]
      %v970 = vld [vmem:[%s966 + $0xc] sm:$0xf]
      %v971 = vld [vmem:[%s966 + $0x10] sm:$0xf]
      %v972 = vld [vmem:[%s966 + $0x14] sm:$0xf]
      %v973 = vld [vmem:[%s966 + $0x18] sm:$0xf]
      %v974 = vld [vmem:[%s966 + $0x1c] sm:$0xf]
      %v975 = vld [vmem:[%s966 + $0x20] sm:$0xf]
      %v976 = vld [vmem:[%s966 + $0x24] sm:$0xf]
      %v977 = vld [vmem:[%s966 + $0x28] sm:$0xf]
      %v978 = vld [vmem:[%s966 + $0x2c] sm:$0xf]
      %v979 = vld [vmem:[%s966 + $0x30] sm:$0xf]
      %v980 = vld [vmem:[%s966 + $0x34] sm:$0xf]
      %v981 = vld [vmem:[%s966 + $0x38] sm:$0xf]
      %v982 = vld [vmem:[%s966 + $0x3c] sm:$0xf]
      %v991 = vunpack.c.l.b16 %v958
      %v992 = vunpack.c.l.b16 %v959
      %v993 = vunpack.c.l.b16 %v960
      %v994 = vunpack.c.l.b16 %v961
      %v995 = vunpack.c.l.b16 %v962
      %v996 = vunpack.c.l.b16 %v963
      %v997 = vunpack.c.l.b16 %v964
      %v998 = vunpack.c.l.b16 %v965
      %v999 = vpack.c.b16 %v992, %v991
      %v1000 = vpack.c.b16 %v994, %v993
      %v1001 = vpack.c.b16 %v996, %v995
      %v1002 = vpack.c.b16 %v998, %v997
      %v1023 = vunpack.c.l.b16 %v967
      %v1024 = vunpack.c.l.b16 %v968
      %v1025 = vunpack.c.l.b16 %v969
      %v1026 = vunpack.c.l.b16 %v970
      %v1027 = vunpack.c.l.b16 %v971
      %v1028 = vunpack.c.l.b16 %v972
      %v1029 = vunpack.c.l.b16 %v973
      %v1030 = vunpack.c.l.b16 %v974
      %v1031 = vunpack.c.l.b16 %v975
      %v1032 = vunpack.c.l.b16 %v976
      %v1033 = vunpack.c.l.b16 %v977
      %v1034 = vunpack.c.l.b16 %v978
      %v1035 = vunpack.c.l.b16 %v979
      %v1036 = vunpack.c.l.b16 %v980
      %v1037 = vunpack.c.l.b16 %v981
      %v1038 = vunpack.c.l.b16 %v982
      %v1039 = vpack.c.b16 %v1024, %v1023
      %v1040 = vpack.c.b16 %v1026, %v1025
      %v1041 = vpack.c.b16 %v1028, %v1027
      %v1042 = vpack.c.b16 %v1030, %v1029
      %v1043 = vpack.c.b16 %v1032, %v1031
      %v1044 = vpack.c.b16 %v1034, %v1033
      %v1045 = vpack.c.b16 %v1036, %v1035
      %v1046 = vpack.c.b16 %v1038, %v1037
      %1055 = vmatprep.subr.bf16.mxu0 0
      %1056 = vmatpush1.bf16.msra.mxu0 %v1039
      %1057 = vmatprep.subr.bf16.mxu0 0
      %1058 = vmatpush1.bf16.msra.mxu0 %v1040
      %1059 = vmatprep.subr.bf16.mxu0 0
      %1060 = vmatpush1.bf16.msra.mxu0 %v1041
      %1061 = vmatprep.subr.bf16.mxu0 0
      %1062 = vmatpush1.bf16.msra.mxu0 %v1042
      %1063 = vmatprep.subr.bf16.mxu0 0
      %1064 = vmatpush1.bf16.msra.mxu0 %v1043
      %1065 = vmatprep.subr.bf16.mxu0 0
      %1066 = vmatpush1.bf16.msra.mxu0 %v1044
      %1067 = vmatprep.subr.bf16.mxu0 0
      %1068 = vmatpush1.bf16.msra.mxu0 %v1045
      %1069 = vmatprep.subr.bf16.mxu0 0
      %1070 = vmatpush1.bf16.msra.mxu0 %v1046
      %1071 = vmatprep.subr.bf16.mxu0 0
      %1072 = vmatpush1.bf16.msra.mxu0 0
      %1073 = vmatprep.subr.bf16.mxu0 0
      %1074 = vmatpush1.bf16.msra.mxu0 0
      %1075 = vmatprep.subr.bf16.mxu0 0
      %1076 = vmatpush1.bf16.msra.mxu0 0
      %1077 = vmatprep.subr.bf16.mxu0 0
      %1078 = vmatpush1.bf16.msra.mxu0 0
      %1079 = vmatprep.subr.bf16.mxu0 0
      %1080 = vmatpush1.bf16.msra.mxu0 0
      %1081 = vmatprep.subr.bf16.mxu0 0
      %1082 = vmatpush1.bf16.msra.mxu0 0
      %1083 = vmatprep.subr.bf16.mxu0 0
      %1084 = vmatpush1.bf16.msra.mxu0 0
      %1085 = vmatprep.subr.bf16.mxu0 0
      %1086 = vmatpush1.bf16.msra.mxu0 0
      %1087 = vmatprep.mubr.bf16.mxu0 0
      %1088 = vmatmul.mubr.bf16.gmra.mrb[0].mxu0 %v999
      %v1089 = vpop.f32.mrb[0].mxu0
      %v1090 = vadd.f32 0.0, %v1089
      %v1091 = vpop.f32.mrb[0].mxu0
      %v1092 = vpop.f32.mrb[0].mxu0
      %v1093 = vadd.f32 0.0, %v1092
      %v1094 = vpop.f32.mrb[0].mxu0
      %1095 = vmatprep.mubr.bf16.mxu0 0
      %1096 = vmatmul.mubr.bf16.gmra.mrb[0].mxu0 %v1000
      %v1097 = vpop.f32.mrb[0].mxu0
      %v1098 = vadd.f32 0.0, %v1097
      %v1099 = vpop.f32.mrb[0].mxu0
      %v1100 = vpop.f32.mrb[0].mxu0
      %v1101 = vadd.f32 0.0, %v1100
      %v1102 = vpop.f32.mrb[0].mxu0
      %1103 = vmatprep.mubr.bf16.mxu0 0
      %1104 = vmatmul.mubr.bf16.gmra.mrb[0].mxu0 %v1001
      %v1105 = vpop.f32.mrb[0].mxu0
      %v1106 = vadd.f32 0.0, %v1105
      %v1107 = vpop.f32.mrb[0].mxu0
      %v1108 = vpop.f32.mrb[0].mxu0
      %v1109 = vadd.f32 0.0, %v1108
      %v1110 = vpop.f32.mrb[0].mxu0
      %1111 = vmatprep.mubr.bf16.mxu0 0
      %1112 = vmatmul.mubr.bf16.gmra.mrb[0].mxu0 %v1002
      %v1113 = vpop.f32.mrb[0].mxu0
      %v1114 = vadd.f32 0.0, %v1113
      %v1115 = vpop.f32.mrb[0].mxu0
      %v1116 = vpop.f32.mrb[0].mxu0
      %v1117 = vadd.f32 0.0, %v1116
      %v1118 = vpop.f32.mrb[0].mxu0
      %1119 = vdwg.mxu0
      %v1120 = vadd.f32 %v949, %v1090
      %v1121 = vadd.f32 %v950, %v1093
      %v1122 = vadd.f32 %v951, %v1098
      %v1123 = vadd.f32 %v952, %v1101
      %v1124 = vadd.f32 %v953, %v1106
      %v1125 = vadd.f32 %v954, %v1109
      %v1126 = vadd.f32 %v955, %v1114
      %v1127 = vadd.f32 %v956, %v1117
      %v1128 = vld [vmem:[%s786] sm:$0xf]
      %v1129 = vld [vmem:[%s786 + $0x4] sm:$0x1]
      %v1130 = vld [vmem:[%s786 + $0x8] sm:$0xf]
      %v1131 = vld [vmem:[%s786 + $0xc] sm:$0x1]
      %v1132 = vld [vmem:[%s786 + $0x10] sm:$0xf]
      %v1133 = vld [vmem:[%s786 + $0x14] sm:$0x1]
      %v1134 = vld [vmem:[%s786 + $0x18] sm:$0xf]
      %v1135 = vld [vmem:[%s786 + $0x1c] sm:$0x1]
      %v1136 = vld [vmem:[%s786 + $0x20] sm:$0xf]
      %v1137 = vld [vmem:[%s786 + $0x24] sm:$0x1]
      %v1138 = vld [vmem:[%s786 + $0x28] sm:$0xf]
      %v1139 = vld [vmem:[%s786 + $0x2c] sm:$0x1]
      %v1140 = vld [vmem:[%s786 + $0x30] sm:$0xf]
      %v1141 = vld [vmem:[%s786 + $0x34] sm:$0x1]
      %v1142 = vld [vmem:[%s786 + $0x38] sm:$0xf]
      %v1143 = vld [vmem:[%s786 + $0x3c] sm:$0x1]
      %v1145 = vshrl.u32 %v1128, 16
      %v1147 = vrot.slane %v1145, 4
      %v1148 = vshll.u32 %v1128, 16
      %v1150 = vrot.slane %v1148, 5
      %v1151 = vor.u32 %v1147, %v1150
      %v1152 = vrot.slane %v1151, 4
      %v1154 = vshll.u32 %v1129, 16
      %v1156 = vrot.slane %v1154, 5
      %v1157 = vsel %vm519, %v1152, %v1156
      %v1159 = vshrl.u32 %v1130, 16
      %v1161 = vrot.slane %v1159, 4
      %v1162 = vshll.u32 %v1130, 16
      %v1164 = vrot.slane %v1162, 5
      %v1165 = vor.u32 %v1161, %v1164
      %v1166 = vrot.slane %v1165, 4
      %v1168 = vshll.u32 %v1131, 16
      %v1170 = vrot.slane %v1168, 5
      %v1171 = vsel %vm519, %v1166, %v1170
      %v1173 = vshrl.u32 %v1132, 16
      %v1175 = vrot.slane %v1173, 4
      %v1176 = vshll.u32 %v1132, 16
      %v1178 = vrot.slane %v1176, 5
      %v1179 = vor.u32 %v1175, %v1178
      %v1180 = vrot.slane %v1179, 4
      %v1182 = vshll.u32 %v1133, 16
      %v1184 = vrot.slane %v1182, 5
      %v1185 = vsel %vm519, %v1180, %v1184
      %v1187 = vshrl.u32 %v1134, 16
      %v1189 = vrot.slane %v1187, 4
      %v1190 = vshll.u32 %v1134, 16
      %v1192 = vrot.slane %v1190, 5
      %v1193 = vor.u32 %v1189, %v1192
      %v1194 = vrot.slane %v1193, 4
      %v1196 = vshll.u32 %v1135, 16
      %v1198 = vrot.slane %v1196, 5
      %v1199 = vsel %vm519, %v1194, %v1198
      %v1201 = vshrl.u32 %v1136, 16
      %v1203 = vrot.slane %v1201, 4
      %v1204 = vshll.u32 %v1136, 16
      %v1206 = vrot.slane %v1204, 5
      %v1207 = vor.u32 %v1203, %v1206
      %v1208 = vrot.slane %v1207, 4
      %v1210 = vshll.u32 %v1137, 16
      %v1212 = vrot.slane %v1210, 5
      %v1213 = vsel %vm519, %v1208, %v1212
      %v1215 = vshrl.u32 %v1138, 16
      %v1217 = vrot.slane %v1215, 4
      %v1218 = vshll.u32 %v1138, 16
      %v1220 = vrot.slane %v1218, 5
      %v1221 = vor.u32 %v1217, %v1220
      %v1222 = vrot.slane %v1221, 4
      %v1224 = vshll.u32 %v1139, 16
      %v1226 = vrot.slane %v1224, 5
      %v1227 = vsel %vm519, %v1222, %v1226
      %v1229 = vshrl.u32 %v1140, 16
      %v1231 = vrot.slane %v1229, 4
      %v1232 = vshll.u32 %v1140, 16
      %v1234 = vrot.slane %v1232, 5
      %v1235 = vor.u32 %v1231, %v1234
      %v1236 = vrot.slane %v1235, 4
      %v1238 = vshll.u32 %v1141, 16
      %v1240 = vrot.slane %v1238, 5
      %v1241 = vsel %vm519, %v1236, %v1240
      %v1243 = vshrl.u32 %v1142, 16
      %v1245 = vrot.slane %v1243, 4
      %v1246 = vshll.u32 %v1142, 16
      %v1248 = vrot.slane %v1246, 5
      %v1249 = vor.u32 %v1245, %v1248
      %v1250 = vrot.slane %v1249, 4
      %v1252 = vshll.u32 %v1143, 16
      %v1254 = vrot.slane %v1252, 5
      %v1255 = vsel %vm519, %v1250, %v1254
      %s1256 = scalar_lea.vmem %s1, 320
      %v1257 = vld [vmem:[%s1256] sm:$0xf]
      %v1258 = vld [vmem:[%s1256 + $0x4] sm:$0xf]
      %v1259 = vld [vmem:[%s1256 + $0x8] sm:$0xf]
      %v1260 = vld [vmem:[%s1256 + $0xc] sm:$0xf]
      %v1261 = vld [vmem:[%s1256 + $0x10] sm:$0xf]
      %v1262 = vld [vmem:[%s1256 + $0x14] sm:$0xf]
      %v1263 = vld [vmem:[%s1256 + $0x18] sm:$0xf]
      %v1264 = vld [vmem:[%s1256 + $0x1c] sm:$0xf]
      %v1265 = vld [vmem:[%s1256 + $0x20] sm:$0xf]
      %v1266 = vld [vmem:[%s1256 + $0x24] sm:$0xf]
      %v1267 = vld [vmem:[%s1256 + $0x28] sm:$0xf]
      %v1268 = vld [vmem:[%s1256 + $0x2c] sm:$0xf]
      %v1269 = vld [vmem:[%s1256 + $0x30] sm:$0xf]
      %v1270 = vld [vmem:[%s1256 + $0x34] sm:$0xf]
      %v1271 = vld [vmem:[%s1256 + $0x38] sm:$0xf]
      %v1272 = vld [vmem:[%s1256 + $0x3c] sm:$0xf]
      %v1273 = vunpack.c.l.b16 %v1157
      %v1274 = vunpack.c.l.b16 %v1171
      %v1275 = vunpack.c.l.b16 %v1185
      %v1276 = vunpack.c.l.b16 %v1199
      %v1277 = vunpack.c.l.b16 %v1213
      %v1278 = vunpack.c.l.b16 %v1227
      %v1279 = vunpack.c.l.b16 %v1241
      %v1280 = vunpack.c.l.b16 %v1255
      %v1281 = vpack.c.b16 %v1274, %v1273
      %v1282 = vpack.c.b16 %v1276, %v1275
      %v1283 = vpack.c.b16 %v1278, %v1277
      %v1284 = vpack.c.b16 %v1280, %v1279
      %v1305 = vunpack.c.l.b16 %v1257
      %v1306 = vunpack.c.l.b16 %v1258
      %v1307 = vunpack.c.l.b16 %v1259
      %v1308 = vunpack.c.l.b16 %v1260
      %v1309 = vunpack.c.l.b16 %v1261
      %v1310 = vunpack.c.l.b16 %v1262
      %v1311 = vunpack.c.l.b16 %v1263
      %v1312 = vunpack.c.l.b16 %v1264
      %v1313 = vunpack.c.l.b16 %v1265
      %v1314 = vunpack.c.l.b16 %v1266
      %v1315 = vunpack.c.l.b16 %v1267
      %v1316 = vunpack.c.l.b16 %v1268
      %v1317 = vunpack.c.l.b16 %v1269
      %v1318 = vunpack.c.l.b16 %v1270
      %v1319 = vunpack.c.l.b16 %v1271
      %v1320 = vunpack.c.l.b16 %v1272
      %v1321 = vpack.c.b16 %v1306, %v1305
      %v1322 = vpack.c.b16 %v1308, %v1307
      %v1323 = vpack.c.b16 %v1310, %v1309
      %v1324 = vpack.c.b16 %v1312, %v1311
      %v1325 = vpack.c.b16 %v1314, %v1313
      %v1326 = vpack.c.b16 %v1316, %v1315
      %v1327 = vpack.c.b16 %v1318, %v1317
      %v1328 = vpack.c.b16 %v1320, %v1319
      %1337 = vmatprep.subr.bf16.mxu0 0
      %1338 = vmatpush1.bf16.msra.mxu0 %v1321
      %1339 = vmatprep.subr.bf16.mxu0 0
      %1340 = vmatpush1.bf16.msra.mxu0 %v1322
      %1341 = vmatprep.subr.bf16.mxu0 0
      %1342 = vmatpush1.bf16.msra.mxu0 %v1323
      %1343 = vmatprep.subr.bf16.mxu0 0
      %1344 = vmatpush1.bf16.msra.mxu0 %v1324
      %1345 = vmatprep.subr.bf16.mxu0 0
      %1346 = vmatpush1.bf16.msra.mxu0 %v1325
      %1347 = vmatprep.subr.bf16.mxu0 0
      %1348 = vmatpush1.bf16.msra.mxu0 %v1326
      %1349 = vmatprep.subr.bf16.mxu0 0
      %1350 = vmatpush1.bf16.msra.mxu0 %v1327
      %1351 = vmatprep.subr.bf16.mxu0 0
      %1352 = vmatpush1.bf16.msra.mxu0 %v1328
      %1353 = vmatprep.subr.bf16.mxu0 0
      %1354 = vmatpush1.bf16.msra.mxu0 0
      %1355 = vmatprep.subr.bf16.mxu0 0
      %1356 = vmatpush1.bf16.msra.mxu0 0
      %1357 = vmatprep.subr.bf16.mxu0 0
      %1358 = vmatpush1.bf16.msra.mxu0 0
      %1359 = vmatprep.subr.bf16.mxu0 0
      %1360 = vmatpush1.bf16.msra.mxu0 0
      %1361 = vmatprep.subr.bf16.mxu0 0
      %1362 = vmatpush1.bf16.msra.mxu0 0
      %1363 = vmatprep.subr.bf16.mxu0 0
      %1364 = vmatpush1.bf16.msra.mxu0 0
      %1365 = vmatprep.subr.bf16.mxu0 0
      %1366 = vmatpush1.bf16.msra.mxu0 0
      %1367 = vmatprep.subr.bf16.mxu0 0
      %1368 = vmatpush1.bf16.msra.mxu0 0
      %1369 = vmatprep.mubr.bf16.mxu0 0
      %1370 = vmatmul.mubr.bf16.gmra.mrb[0].mxu0 %v1281
      %v1371 = vpop.f32.mrb[0].mxu0
      %v1372 = vadd.f32 0.0, %v1371
      %v1373 = vpop.f32.mrb[0].mxu0
      %v1374 = vpop.f32.mrb[0].mxu0
      %v1375 = vadd.f32 0.0, %v1374
      %v1376 = vpop.f32.mrb[0].mxu0
      %1377 = vmatprep.mubr.bf16.mxu0 0
      %1378 = vmatmul.mubr.bf16.gmra.mrb[0].mxu0 %v1282
      %v1379 = vpop.f32.mrb[0].mxu0
      %v1380 = vadd.f32 0.0, %v1379
      %v1381 = vpop.f32.mrb[0].mxu0
      %v1382 = vpop.f32.mrb[0].mxu0
      %v1383 = vadd.f32 0.0, %v1382
      %v1384 = vpop.f32.mrb[0].mxu0
      %1385 = vmatprep.mubr.bf16.mxu0 0
      %1386 = vmatmul.mubr.bf16.gmra.mrb[0].mxu0 %v1283
      %v1387 = vpop.f32.mrb[0].mxu0
      %v1388 = vadd.f32 0.0, %v1387
      %v1389 = vpop.f32.mrb[0].mxu0
      %v1390 = vpop.f32.mrb[0].mxu0
      %v1391 = vadd.f32 0.0, %v1390
      %v1392 = vpop.f32.mrb[0].mxu0
      %1393 = vmatprep.mubr.bf16.mxu0 0
      %1394 = vmatmul.mubr.bf16.gmra.mrb[0].mxu0 %v1284
      %v1395 = vpop.f32.mrb[0].mxu0
      %v1396 = vadd.f32 0.0, %v1395
      %v1397 = vpop.f32.mrb[0].mxu0
      %v1398 = vpop.f32.mrb[0].mxu0
      %v1399 = vadd.f32 0.0, %v1398
      %v1400 = vpop.f32.mrb[0].mxu0
      %1401 = vdwg.mxu0
      %v1402 = vadd.f32 %v1120, %v1372
      %v1403 = vadd.f32 %v1121, %v1375
      %v1404 = vadd.f32 %v1122, %v1380
      %v1405 = vadd.f32 %v1123, %v1383
      %v1406 = vadd.f32 %v1124, %v1388
      %v1407 = vadd.f32 %v1125, %v1391
      %v1408 = vadd.f32 %v1126, %v1396
      %v1409 = vadd.f32 %v1127, %v1399
      %s1410 = scalar_lea.vmem %s169, 8
      %v1411 = vld [vmem:[%s1410] sm:$0xf]
      %v1412 = vld [vmem:[%s1410 + $0x8] sm:$0xf]
      %v1413 = vld [vmem:[%s1410 + $0x10] sm:$0xf]
      %v1414 = vld [vmem:[%s1410 + $0x18] sm:$0xf]
      %v1415 = vld [vmem:[%s1410 + $0x20] sm:$0xf]
      %v1416 = vld [vmem:[%s1410 + $0x28] sm:$0xf]
      %v1417 = vld [vmem:[%s1410 + $0x30] sm:$0xf]
      %v1418 = vld [vmem:[%s1410 + $0x38] sm:$0xf]
      %s1419 = scalar_lea.vmem %s1, 384
      %v1420 = vld [vmem:[%s1419] sm:$0xf]
      %v1421 = vld [vmem:[%s1419 + $0x4] sm:$0xf]
      %v1422 = vld [vmem:[%s1419 + $0x8] sm:$0xf]
      %v1423 = vld [vmem:[%s1419 + $0xc] sm:$0xf]
      %v1424 = vld [vmem:[%s1419 + $0x10] sm:$0xf]
      %v1425 = vld [vmem:[%s1419 + $0x14] sm:$0xf]
      %v1426 = vld [vmem:[%s1419 + $0x18] sm:$0xf]
      %v1427 = vld [vmem:[%s1419 + $0x1c] sm:$0xf]
      %v1428 = vld [vmem:[%s1419 + $0x20] sm:$0xf]
      %v1429 = vld [vmem:[%s1419 + $0x24] sm:$0xf]
      %v1430 = vld [vmem:[%s1419 + $0x28] sm:$0xf]
      %v1431 = vld [vmem:[%s1419 + $0x2c] sm:$0xf]
      %v1432 = vld [vmem:[%s1419 + $0x30] sm:$0xf]
      %v1433 = vld [vmem:[%s1419 + $0x34] sm:$0xf]
      %v1434 = vld [vmem:[%s1419 + $0x38] sm:$0xf]
      %v1435 = vld [vmem:[%s1419 + $0x3c] sm:$0xf]
      %v1444 = vunpack.c.l.b16 %v1411
      %v1445 = vunpack.c.l.b16 %v1412
      %v1446 = vunpack.c.l.b16 %v1413
      %v1447 = vunpack.c.l.b16 %v1414
      %v1448 = vunpack.c.l.b16 %v1415
      %v1449 = vunpack.c.l.b16 %v1416
      %v1450 = vunpack.c.l.b16 %v1417
      %v1451 = vunpack.c.l.b16 %v1418
      %v1452 = vpack.c.b16 %v1445, %v1444
      %v1453 = vpack.c.b16 %v1447, %v1446
      %v1454 = vpack.c.b16 %v1449, %v1448
      %v1455 = vpack.c.b16 %v1451, %v1450
      %v1476 = vunpack.c.l.b16 %v1420
      %v1477 = vunpack.c.l.b16 %v1421
      %v1478 = vunpack.c.l.b16 %v1422
      %v1479 = vunpack.c.l.b16 %v1423
      %v1480 = vunpack.c.l.b16 %v1424
      %v1481 = vunpack.c.l.b16 %v1425
      %v1482 = vunpack.c.l.b16 %v1426
      %v1483 = vunpack.c.l.b16 %v1427
      %v1484 = vunpack.c.l.b16 %v1428
      %v1485 = vunpack.c.l.b16 %v1429
      %v1486 = vunpack.c.l.b16 %v1430
      %v1487 = vunpack.c.l.b16 %v1431
      %v1488 = vunpack.c.l.b16 %v1432
      %v1489 = vunpack.c.l.b16 %v1433
      %v1490 = vunpack.c.l.b16 %v1434
      %v1491 = vunpack.c.l.b16 %v1435
      %v1492 = vpack.c.b16 %v1477, %v1476
      %v1493 = vpack.c.b16 %v1479, %v1478
      %v1494 = vpack.c.b16 %v1481, %v1480
      %v1495 = vpack.c.b16 %v1483, %v1482
      %v1496 = vpack.c.b16 %v1485, %v1484
      %v1497 = vpack.c.b16 %v1487, %v1486
      %v1498 = vpack.c.b16 %v1489, %v1488
      %v1499 = vpack.c.b16 %v1491, %v1490
      %1508 = vmatprep.subr.bf16.mxu0 0
      %1509 = vmatpush1.bf16.msra.mxu0 %v1492
      %1510 = vmatprep.subr.bf16.mxu0 0
      %1511 = vmatpush1.bf16.msra.mxu0 %v1493
      %1512 = vmatprep.subr.bf16.mxu0 0
      %1513 = vmatpush1.bf16.msra.mxu0 %v1494
      %1514 = vmatprep.subr.bf16.mxu0 0
      %1515 = vmatpush1.bf16.msra.mxu0 %v1495
      %1516 = vmatprep.subr.bf16.mxu0 0
      %1517 = vmatpush1.bf16.msra.mxu0 %v1496
      %1518 = vmatprep.subr.bf16.mxu0 0
      %1519 = vmatpush1.bf16.msra.mxu0 %v1497
      %1520 = vmatprep.subr.bf16.mxu0 0
      %1521 = vmatpush1.bf16.msra.mxu0 %v1498
      %1522 = vmatprep.subr.bf16.mxu0 0
      %1523 = vmatpush1.bf16.msra.mxu0 %v1499
      %1524 = vmatprep.subr.bf16.mxu0 0
      %1525 = vmatpush1.bf16.msra.mxu0 0
      %1526 = vmatprep.subr.bf16.mxu0 0
      %1527 = vmatpush1.bf16.msra.mxu0 0
      %1528 = vmatprep.subr.bf16.mxu0 0
      %1529 = vmatpush1.bf16.msra.mxu0 0
      %1530 = vmatprep.subr.bf16.mxu0 0
      %1531 = vmatpush1.bf16.msra.mxu0 0
      %1532 = vmatprep.subr.bf16.mxu0 0
      %1533 = vmatpush1.bf16.msra.mxu0 0
      %1534 = vmatprep.subr.bf16.mxu0 0
      %1535 = vmatpush1.bf16.msra.mxu0 0
      %1536 = vmatprep.subr.bf16.mxu0 0
      %1537 = vmatpush1.bf16.msra.mxu0 0
      %1538 = vmatprep.subr.bf16.mxu0 0
      %1539 = vmatpush1.bf16.msra.mxu0 0
      %1540 = vmatprep.mubr.bf16.mxu0 0
      %1541 = vmatmul.mubr.bf16.gmra.mrb[0].mxu0 %v1452
      %v1542 = vpop.f32.mrb[0].mxu0
      %v1543 = vadd.f32 0.0, %v1542
      %v1544 = vpop.f32.mrb[0].mxu0
      %v1545 = vpop.f32.mrb[0].mxu0
      %v1546 = vadd.f32 0.0, %v1545
      %v1547 = vpop.f32.mrb[0].mxu0
      %1548 = vmatprep.mubr.bf16.mxu0 0
      %1549 = vmatmul.mubr.bf16.gmra.mrb[0].mxu0 %v1453
      %v1550 = vpop.f32.mrb[0].mxu0
      %v1551 = vadd.f32 0.0, %v1550
      %v1552 = vpop.f32.mrb[0].mxu0
      %v1553 = vpop.f32.mrb[0].mxu0
      %v1554 = vadd.f32 0.0, %v1553
      %v1555 = vpop.f32.mrb[0].mxu0
      %1556 = vmatprep.mubr.bf16.mxu0 0
      %1557 = vmatmul.mubr.bf16.gmra.mrb[0].mxu0 %v1454
      %v1558 = vpop.f32.mrb[0].mxu0
      %v1559 = vadd.f32 0.0, %v1558
      %v1560 = vpop.f32.mrb[0].mxu0
      %v1561 = vpop.f32.mrb[0].mxu0
      %v1562 = vadd.f32 0.0, %v1561
      %v1563 = vpop.f32.mrb[0].mxu0
      %1564 = vmatprep.mubr.bf16.mxu0 0
      %1565 = vmatmul.mubr.bf16.gmra.mrb[0].mxu0 %v1455
      %v1566 = vpop.f32.mrb[0].mxu0
      %v1567 = vadd.f32 0.0, %v1566
      %v1568 = vpop.f32.mrb[0].mxu0
      %v1569 = vpop.f32.mrb[0].mxu0
      %v1570 = vadd.f32 0.0, %v1569
      %v1571 = vpop.f32.mrb[0].mxu0
      %1572 = vdwg.mxu0
      %v1573 = vadd.f32 %v1402, %v1543
      %v1574 = vadd.f32 %v1403, %v1546
      %v1575 = vadd.f32 %v1404, %v1551
      %v1576 = vadd.f32 %v1405, %v1554
      %v1577 = vadd.f32 %v1406, %v1559
      %v1578 = vadd.f32 %v1407, %v1562
      %v1579 = vadd.f32 %v1408, %v1567
      %v1580 = vadd.f32 %v1409, %v1570
      %s1581 = scalar_lea.vmem %s169, 80
      %v1582 = vld [vmem:[%s1581] sm:$0xf]
      %v1583 = vld [vmem:[%s1581 + $0x8] sm:$0xf]
      %v1584 = vld [vmem:[%s1581 + $0x10] sm:$0xf]
      %v1585 = vld [vmem:[%s1581 + $0x18] sm:$0xf]
      %v1586 = vld [vmem:[%s1581 + $0x20] sm:$0xf]
      %v1587 = vld [vmem:[%s1581 + $0x28] sm:$0xf]
      %v1588 = vld [vmem:[%s1581 + $0x30] sm:$0xf]
      %v1589 = vld [vmem:[%s1581 + $0x38] sm:$0xf]
      %s1590 = scalar_lea.vmem %s1, 448
      %v1591 = vld [vmem:[%s1590] sm:$0xf]
      %v1592 = vld [vmem:[%s1590 + $0x4] sm:$0xf]
      %v1593 = vld [vmem:[%s1590 + $0x8] sm:$0xf]
      %v1594 = vld [vmem:[%s1590 + $0xc] sm:$0xf]
      %v1595 = vld [vmem:[%s1590 + $0x10] sm:$0xf]
      %v1596 = vld [vmem:[%s1590 + $0x14] sm:$0xf]
      %v1597 = vld [vmem:[%s1590 + $0x18] sm:$0xf]
      %v1598 = vld [vmem:[%s1590 + $0x1c] sm:$0xf]
      %v1599 = vld [vmem:[%s1590 + $0x20] sm:$0xf]
      %v1600 = vld [vmem:[%s1590 + $0x24] sm:$0xf]
      %v1601 = vld [vmem:[%s1590 + $0x28] sm:$0xf]
      %v1602 = vld [vmem:[%s1590 + $0x2c] sm:$0xf]
      %v1603 = vld [vmem:[%s1590 + $0x30] sm:$0xf]
      %v1604 = vld [vmem:[%s1590 + $0x34] sm:$0xf]
      %v1605 = vld [vmem:[%s1590 + $0x38] sm:$0xf]
      %v1606 = vld [vmem:[%s1590 + $0x3c] sm:$0xf]
      %v1615 = vunpack.c.l.b16 %v1582
      %v1616 = vunpack.c.l.b16 %v1583
      %v1617 = vunpack.c.l.b16 %v1584
      %v1618 = vunpack.c.l.b16 %v1585
      %v1619 = vunpack.c.l.b16 %v1586
      %v1620 = vunpack.c.l.b16 %v1587
      %v1621 = vunpack.c.l.b16 %v1588
      %v1622 = vunpack.c.l.b16 %v1589
      %v1623 = vpack.c.b16 %v1616, %v1615
      %v1624 = vpack.c.b16 %v1618, %v1617
      %v1625 = vpack.c.b16 %v1620, %v1619
      %v1626 = vpack.c.b16 %v1622, %v1621
      %v1647 = vunpack.c.l.b16 %v1591
      %v1648 = vunpack.c.l.b16 %v1592
      %v1649 = vunpack.c.l.b16 %v1593
      %v1650 = vunpack.c.l.b16 %v1594
      %v1651 = vunpack.c.l.b16 %v1595
      %v1652 = vunpack.c.l.b16 %v1596
      %v1653 = vunpack.c.l.b16 %v1597
      %v1654 = vunpack.c.l.b16 %v1598
      %v1655 = vunpack.c.l.b16 %v1599
      %v1656 = vunpack.c.l.b16 %v1600
      %v1657 = vunpack.c.l.b16 %v1601
      %v1658 = vunpack.c.l.b16 %v1602
      %v1659 = vunpack.c.l.b16 %v1603
      %v1660 = vunpack.c.l.b16 %v1604
      %v1661 = vunpack.c.l.b16 %v1605
      %v1662 = vunpack.c.l.b16 %v1606
      %v1663 = vpack.c.b16 %v1648, %v1647
      %v1664 = vpack.c.b16 %v1650, %v1649
      %v1665 = vpack.c.b16 %v1652, %v1651
      %v1666 = vpack.c.b16 %v1654, %v1653
      %v1667 = vpack.c.b16 %v1656, %v1655
      %v1668 = vpack.c.b16 %v1658, %v1657
      %v1669 = vpack.c.b16 %v1660, %v1659
      %v1670 = vpack.c.b16 %v1662, %v1661
      %1679 = vmatprep.subr.bf16.mxu0 0
      %1680 = vmatpush1.bf16.msra.mxu0 %v1663
      %1681 = vmatprep.subr.bf16.mxu0 0
      %1682 = vmatpush1.bf16.msra.mxu0 %v1664
      %1683 = vmatprep.subr.bf16.mxu0 0
      %1684 = vmatpush1.bf16.msra.mxu0 %v1665
      %1685 = vmatprep.subr.bf16.mxu0 0
      %1686 = vmatpush1.bf16.msra.mxu0 %v1666
      %1687 = vmatprep.subr.bf16.mxu0 0
      %1688 = vmatpush1.bf16.msra.mxu0 %v1667
      %1689 = vmatprep.subr.bf16.mxu0 0
      %1690 = vmatpush1.bf16.msra.mxu0 %v1668
      %1691 = vmatprep.subr.bf16.mxu0 0
      %1692 = vmatpush1.bf16.msra.mxu0 %v1669
      %1693 = vmatprep.subr.bf16.mxu0 0
      %1694 = vmatpush1.bf16.msra.mxu0 %v1670
      %1695 = vmatprep.subr.bf16.mxu0 0
      %1696 = vmatpush1.bf16.msra.mxu0 0
      %1697 = vmatprep.subr.bf16.mxu0 0
      %1698 = vmatpush1.bf16.msra.mxu0 0
      %1699 = vmatprep.subr.bf16.mxu0 0
      %1700 = vmatpush1.bf16.msra.mxu0 0
      %1701 = vmatprep.subr.bf16.mxu0 0
      %1702 = vmatpush1.bf16.msra.mxu0 0
      %1703 = vmatprep.subr.bf16.mxu0 0
      %1704 = vmatpush1.bf16.msra.mxu0 0
      %1705 = vmatprep.subr.bf16.mxu0 0
      %1706 = vmatpush1.bf16.msra.mxu0 0
      %1707 = vmatprep.subr.bf16.mxu0 0
      %1708 = vmatpush1.bf16.msra.mxu0 0
      %1709 = vmatprep.subr.bf16.mxu0 0
      %1710 = vmatpush1.bf16.msra.mxu0 0
      %1711 = vmatprep.mubr.bf16.mxu0 0
      %1712 = vmatmul.mubr.bf16.gmra.mrb[0].mxu0 %v1623
      %v1713 = vpop.f32.mrb[0].mxu0
      %v1714 = vadd.f32 0.0, %v1713
      %v1715 = vpop.f32.mrb[0].mxu0
      %v1716 = vpop.f32.mrb[0].mxu0
      %v1717 = vadd.f32 0.0, %v1716
      %v1718 = vpop.f32.mrb[0].mxu0
      %1719 = vmatprep.mubr.bf16.mxu0 0
      %1720 = vmatmul.mubr.bf16.gmra.mrb[0].mxu0 %v1624
      %v1721 = vpop.f32.mrb[0].mxu0
      %v1722 = vadd.f32 0.0, %v1721
      %v1723 = vpop.f32.mrb[0].mxu0
      %v1724 = vpop.f32.mrb[0].mxu0
      %v1725 = vadd.f32 0.0, %v1724
      %v1726 = vpop.f32.mrb[0].mxu0
      %1727 = vmatprep.mubr.bf16.mxu0 0
      %1728 = vmatmul.mubr.bf16.gmra.mrb[0].mxu0 %v1625
      %v1729 = vpop.f32.mrb[0].mxu0
      %v1730 = vadd.f32 0.0, %v1729
      %v1731 = vpop.f32.mrb[0].mxu0
      %v1732 = vpop.f32.mrb[0].mxu0
      %v1733 = vadd.f32 0.0, %v1732
      %v1734 = vpop.f32.mrb[0].mxu0
      %1735 = vmatprep.mubr.bf16.mxu0 0
      %1736 = vmatmul.mubr.bf16.gmra.mrb[0].mxu0 %v1626
      %v1737 = vpop.f32.mrb[0].mxu0
      %v1738 = vadd.f32 0.0, %v1737
      %v1739 = vpop.f32.mrb[0].mxu0
      %v1740 = vpop.f32.mrb[0].mxu0
      %v1741 = vadd.f32 0.0, %v1740
      %v1742 = vpop.f32.mrb[0].mxu0
      %1743 = vdwg.mxu0
      %v1744 = vadd.f32 %v1573, %v1714
      %v1745 = vadd.f32 %v1574, %v1717
      %v1746 = vadd.f32 %v1575, %v1722
      %v1747 = vadd.f32 %v1576, %v1725
      %v1748 = vadd.f32 %v1577, %v1730
      %v1749 = vadd.f32 %v1578, %v1733
      %v1750 = vadd.f32 %v1579, %v1738
      %v1751 = vadd.f32 %v1580, %v1741
      %v1752 = vld [vmem:[%s1410] sm:$0xf]
      %v1753 = vld [vmem:[%s1410 + $0x4] sm:$0x1]
      %v1754 = vld [vmem:[%s1410 + $0x8] sm:$0xf]
      %v1755 = vld [vmem:[%s1410 + $0xc] sm:$0x1]
      %v1756 = vld [vmem:[%s1410 + $0x10] sm:$0xf]
      %v1757 = vld [vmem:[%s1410 + $0x14] sm:$0x1]
      %v1758 = vld [vmem:[%s1410 + $0x18] sm:$0xf]
      %v1759 = vld [vmem:[%s1410 + $0x1c] sm:$0x1]
      %v1760 = vld [vmem:[%s1410 + $0x20] sm:$0xf]
      %v1761 = vld [vmem:[%s1410 + $0x24] sm:$0x1]
      %v1762 = vld [vmem:[%s1410 + $0x28] sm:$0xf]
      %v1763 = vld [vmem:[%s1410 + $0x2c] sm:$0x1]
      %v1764 = vld [vmem:[%s1410 + $0x30] sm:$0xf]
      %v1765 = vld [vmem:[%s1410 + $0x34] sm:$0x1]
      %v1766 = vld [vmem:[%s1410 + $0x38] sm:$0xf]
      %v1767 = vld [vmem:[%s1410 + $0x3c] sm:$0x1]
      %v1769 = vshrl.u32 %v1752, 16
      %v1771 = vrot.slane %v1769, 4
      %v1772 = vshll.u32 %v1752, 16
      %v1774 = vrot.slane %v1772, 5
      %v1775 = vor.u32 %v1771, %v1774
      %v1776 = vrot.slane %v1775, 4
      %v1778 = vshll.u32 %v1753, 16
      %v1780 = vrot.slane %v1778, 5
      %v1781 = vsel %vm519, %v1776, %v1780
      %v1783 = vshrl.u32 %v1754, 16
      %v1785 = vrot.slane %v1783, 4
      %v1786 = vshll.u32 %v1754, 16
      %v1788 = vrot.slane %v1786, 5
      %v1789 = vor.u32 %v1785, %v1788
      %v1790 = vrot.slane %v1789, 4
      %v1792 = vshll.u32 %v1755, 16
      %v1794 = vrot.slane %v1792, 5
      %v1795 = vsel %vm519, %v1790, %v1794
      %v1797 = vshrl.u32 %v1756, 16
      %v1799 = vrot.slane %v1797, 4
      %v1800 = vshll.u32 %v1756, 16
      %v1802 = vrot.slane %v1800, 5
      %v1803 = vor.u32 %v1799, %v1802
      %v1804 = vrot.slane %v1803, 4
      %v1806 = vshll.u32 %v1757, 16
      %v1808 = vrot.slane %v1806, 5
      %v1809 = vsel %vm519, %v1804, %v1808
      %v1811 = vshrl.u32 %v1758, 16
      %v1813 = vrot.slane %v1811, 4
      %v1814 = vshll.u32 %v1758, 16
      %v1816 = vrot.slane %v1814, 5
      %v1817 = vor.u32 %v1813, %v1816
      %v1818 = vrot.slane %v1817, 4
      %v1820 = vshll.u32 %v1759, 16
      %v1822 = vrot.slane %v1820, 5
      %v1823 = vsel %vm519, %v1818, %v1822
      %v1825 = vshrl.u32 %v1760, 16
      %v1827 = vrot.slane %v1825, 4
      %v1828 = vshll.u32 %v1760, 16
      %v1830 = vrot.slane %v1828, 5
      %v1831 = vor.u32 %v1827, %v1830
      %v1832 = vrot.slane %v1831, 4
      %v1834 = vshll.u32 %v1761, 16
      %v1836 = vrot.slane %v1834, 5
      %v1837 = vsel %vm519, %v1832, %v1836
      %v1839 = vshrl.u32 %v1762, 16
      %v1841 = vrot.slane %v1839, 4
      %v1842 = vshll.u32 %v1762, 16
      %v1844 = vrot.slane %v1842, 5
      %v1845 = vor.u32 %v1841, %v1844
      %v1846 = vrot.slane %v1845, 4
      %v1848 = vshll.u32 %v1763, 16
      %v1850 = vrot.slane %v1848, 5
      %v1851 = vsel %vm519, %v1846, %v1850
      %v1853 = vshrl.u32 %v1764, 16
      %v1855 = vrot.slane %v1853, 4
      %v1856 = vshll.u32 %v1764, 16
      %v1858 = vrot.slane %v1856, 5
      %v1859 = vor.u32 %v1855, %v1858
      %v1860 = vrot.slane %v1859, 4
      %v1862 = vshll.u32 %v1765, 16
      %v1864 = vrot.slane %v1862, 5
      %v1865 = vsel %vm519, %v1860, %v1864
      %v1867 = vshrl.u32 %v1766, 16
      %v1869 = vrot.slane %v1867, 4
      %v1870 = vshll.u32 %v1766, 16
      %v1872 = vrot.slane %v1870, 5
      %v1873 = vor.u32 %v1869, %v1872
      %v1874 = vrot.slane %v1873, 4
      %v1876 = vshll.u32 %v1767, 16
      %v1878 = vrot.slane %v1876, 5
      %v1879 = vsel %vm519, %v1874, %v1878
      %s1880 = scalar_lea.vmem %s1, 512
      %v1881 = vld [vmem:[%s1880] sm:$0xf]
      %v1882 = vld [vmem:[%s1880 + $0x4] sm:$0xf]
      %v1883 = vld [vmem:[%s1880 + $0x8] sm:$0xf]
      %v1884 = vld [vmem:[%s1880 + $0xc] sm:$0xf]
      %v1885 = vld [vmem:[%s1880 + $0x10] sm:$0xf]
      %v1886 = vld [vmem:[%s1880 + $0x14] sm:$0xf]
      %v1887 = vld [vmem:[%s1880 + $0x18] sm:$0xf]
      %v1888 = vld [vmem:[%s1880 + $0x1c] sm:$0xf]
      %v1889 = vld [vmem:[%s1880 + $0x20] sm:$0xf]
      %v1890 = vld [vmem:[%s1880 + $0x24] sm:$0xf]
      %v1891 = vld [vmem:[%s1880 + $0x28] sm:$0xf]
      %v1892 = vld [vmem:[%s1880 + $0x2c] sm:$0xf]
      %v1893 = vld [vmem:[%s1880 + $0x30] sm:$0xf]
      %v1894 = vld [vmem:[%s1880 + $0x34] sm:$0xf]
      %v1895 = vld [vmem:[%s1880 + $0x38] sm:$0xf]
      %v1896 = vld [vmem:[%s1880 + $0x3c] sm:$0xf]
      %v1897 = vunpack.c.l.b16 %v1781
      %v1898 = vunpack.c.l.b16 %v1795
      %v1899 = vunpack.c.l.b16 %v1809
      %v1900 = vunpack.c.l.b16 %v1823
      %v1901 = vunpack.c.l.b16 %v1837
      %v1902 = vunpack.c.l.b16 %v1851
      %v1903 = vunpack.c.l.b16 %v1865
      %v1904 = vunpack.c.l.b16 %v1879
      %v1905 = vpack.c.b16 %v1898, %v1897
      %v1906 = vpack.c.b16 %v1900, %v1899
      %v1907 = vpack.c.b16 %v1902, %v1901
      %v1908 = vpack.c.b16 %v1904, %v1903
      %v1929 = vunpack.c.l.b16 %v1881
      %v1930 = vunpack.c.l.b16 %v1882
      %v1931 = vunpack.c.l.b16 %v1883
      %v1932 = vunpack.c.l.b16 %v1884
      %v1933 = vunpack.c.l.b16 %v1885
      %v1934 = vunpack.c.l.b16 %v1886
      %v1935 = vunpack.c.l.b16 %v1887
      %v1936 = vunpack.c.l.b16 %v1888
      %v1937 = vunpack.c.l.b16 %v1889
      %v1938 = vunpack.c.l.b16 %v1890
      %v1939 = vunpack.c.l.b16 %v1891
      %v1940 = vunpack.c.l.b16 %v1892
      %v1941 = vunpack.c.l.b16 %v1893
      %v1942 = vunpack.c.l.b16 %v1894
      %v1943 = vunpack.c.l.b16 %v1895
      %v1944 = vunpack.c.l.b16 %v1896
      %v1945 = vpack.c.b16 %v1930, %v1929
      %v1946 = vpack.c.b16 %v1932, %v1931
      %v1947 = vpack.c.b16 %v1934, %v1933
      %v1948 = vpack.c.b16 %v1936, %v1935
      %v1949 = vpack.c.b16 %v1938, %v1937
      %v1950 = vpack.c.b16 %v1940, %v1939
      %v1951 = vpack.c.b16 %v1942, %v1941
      %v1952 = vpack.c.b16 %v1944, %v1943
      %1961 = vmatprep.subr.bf16.mxu0 0
      %1962 = vmatpush1.bf16.msra.mxu0 %v1945
      %1963 = vmatprep.subr.bf16.mxu0 0
      %1964 = vmatpush1.bf16.msra.mxu0 %v1946
      %1965 = vmatprep.subr.bf16.mxu0 0
      %1966 = vmatpush1.bf16.msra.mxu0 %v1947
      %1967 = vmatprep.subr.bf16.mxu0 0
      %1968 = vmatpush1.bf16.msra.mxu0 %v1948
      %1969 = vmatprep.subr.bf16.mxu0 0
      %1970 = vmatpush1.bf16.msra.mxu0 %v1949
      %1971 = vmatprep.subr.bf16.mxu0 0
      %1972 = vmatpush1.bf16.msra.mxu0 %v1950
      %1973 = vmatprep.subr.bf16.mxu0 0
      %1974 = vmatpush1.bf16.msra.mxu0 %v1951
      %1975 = vmatprep.subr.bf16.mxu0 0
      %1976 = vmatpush1.bf16.msra.mxu0 %v1952
      %1977 = vmatprep.subr.bf16.mxu0 0
      %1978 = vmatpush1.bf16.msra.mxu0 0
      %1979 = vmatprep.subr.bf16.mxu0 0
      %1980 = vmatpush1.bf16.msra.mxu0 0
      %1981 = vmatprep.subr.bf16.mxu0 0
      %1982 = vmatpush1.bf16.msra.mxu0 0
      %1983 = vmatprep.subr.bf16.mxu0 0
      %1984 = vmatpush1.bf16.msra.mxu0 0
      %1985 = vmatprep.subr.bf16.mxu0 0
      %1986 = vmatpush1.bf16.msra.mxu0 0
      %1987 = vmatprep.subr.bf16.mxu0 0
      %1988 = vmatpush1.bf16.msra.mxu0 0
      %1989 = vmatprep.subr.bf16.mxu0 0
      %1990 = vmatpush1.bf16.msra.mxu0 0
      %1991 = vmatprep.subr.bf16.mxu0 0
      %1992 = vmatpush1.bf16.msra.mxu0 0
      %1993 = vmatprep.mubr.bf16.mxu0 0
      %1994 = vmatmul.mubr.bf16.gmra.mrb[0].mxu0 %v1905
      %v1995 = vpop.f32.mrb[0].mxu0
      %v1996 = vadd.f32 0.0, %v1995
      %v1997 = vpop.f32.mrb[0].mxu0
      %v1998 = vpop.f32.mrb[0].mxu0
      %v1999 = vadd.f32 0.0, %v1998
      %v2000 = vpop.f32.mrb[0].mxu0
      %2001 = vmatprep.mubr.bf16.mxu0 0
      %2002 = vmatmul.mubr.bf16.gmra.mrb[0].mxu0 %v1906
      %v2003 = vpop.f32.mrb[0].mxu0
      %v2004 = vadd.f32 0.0, %v2003
      %v2005 = vpop.f32.mrb[0].mxu0
      %v2006 = vpop.f32.mrb[0].mxu0
      %v2007 = vadd.f32 0.0, %v2006
      %v2008 = vpop.f32.mrb[0].mxu0
      %2009 = vmatprep.mubr.bf16.mxu0 0
      %2010 = vmatmul.mubr.bf16.gmra.mrb[0].mxu0 %v1907
      %v2011 = vpop.f32.mrb[0].mxu0
      %v2012 = vadd.f32 0.0, %v2011
      %v2013 = vpop.f32.mrb[0].mxu0
      %v2014 = vpop.f32.mrb[0].mxu0
      %v2015 = vadd.f32 0.0, %v2014
      %v2016 = vpop.f32.mrb[0].mxu0
      %2017 = vmatprep.mubr.bf16.mxu0 0
      %2018 = vmatmul.mubr.bf16.gmra.mrb[0].mxu0 %v1908
      %v2019 = vpop.f32.mrb[0].mxu0
      %v2020 = vadd.f32 0.0, %v2019
      %v2021 = vpop.f32.mrb[0].mxu0
      %v2022 = vpop.f32.mrb[0].mxu0
      %v2023 = vadd.f32 0.0, %v2022
      %v2024 = vpop.f32.mrb[0].mxu0
      %2025 = vdwg.mxu0
      %v2026 = vadd.f32 %v1744, %v1996
      %v2027 = vadd.f32 %v1745, %v1999
      %v2028 = vadd.f32 %v1746, %v2004
      %v2029 = vadd.f32 %v1747, %v2007
      %v2030 = vadd.f32 %v1748, %v2012
      %v2031 = vadd.f32 %v1749, %v2015
      %v2032 = vadd.f32 %v1750, %v2020
      %v2033 = vadd.f32 %v1751, %v2023
      %v2034 = vld [vmem:[%s2] sm:$0x1]
      %v2036 = vlaneseq
      %v2037 = vshrl.u32 %v2036, 7
      %v2038 = vsub.s32 0, %v2037
      %v2039 = vrot.slane %v2034, %v2038
      %v2041 = vadd.f32 %v2026, %v2039
      %v2042 = vadd.f32 %v2027, %v2039
      %v2043 = vadd.f32 %v2028, %v2039
      %v2044 = vadd.f32 %v2029, %v2039
      %v2045 = vadd.f32 %v2030, %v2039
      %v2046 = vadd.f32 %v2031, %v2039
      %v2047 = vadd.f32 %v2032, %v2039
      %v2048 = vadd.f32 %v2033, %v2039
      %v2049 = vmax.f32 %v2041, 0.0
      %v2050 = vmax.f32 %v2042, 0.0
      %v2051 = vmax.f32 %v2043, 0.0
      %v2052 = vmax.f32 %v2044, 0.0
      %v2053 = vmax.f32 %v2045, 0.0
      %v2054 = vmax.f32 %v2046, 0.0
      %v2055 = vmax.f32 %v2047, 0.0
      %v2056 = vmax.f32 %v2048, 0.0
      %2057 = vst [vmem:[%s175] sm:$0xf] 0
      %2058 = vst [vmem:[%s175 + $0x4] sm:$0x1] 0
      %2059 = vst [vmem:[%s175 + $0x8] sm:$0xf] 0
      %2060 = vst [vmem:[%s175 + $0xc] sm:$0x1] 0
      %2061 = vst [vmem:[%s175 + $0x10] sm:$0xf] 0
      %2062 = vst [vmem:[%s175 + $0x14] sm:$0x1] 0
      %2063 = vst [vmem:[%s175 + $0x18] sm:$0xf] 0
      %2064 = vst [vmem:[%s175 + $0x1c] sm:$0x1] 0
      %2065 = vst [vmem:[%s175 + $0x20] sm:$0xf] 0
      %2066 = vst [vmem:[%s175 + $0x24] sm:$0x1] 0
      %2067 = vst [vmem:[%s175 + $0x28] sm:$0xf] 0
      %2068 = vst [vmem:[%s175 + $0x2c] sm:$0x1] 0
      %2069 = vst [vmem:[%s175 + $0x30] sm:$0xf] 0
      %2070 = vst [vmem:[%s175 + $0x34] sm:$0x1] 0
      %2071 = vst [vmem:[%s175 + $0x38] sm:$0xf] 0
      %2072 = vst [vmem:[%s175 + $0x3c] sm:$0x1] 0
      %2073 = vst [vmem:[%s175 + $0x40] sm:$0xf] 0
      %2074 = vst [vmem:[%s175 + $0x44] sm:$0x1] 0
      %2075 = vst [vmem:[%s175 + $0x48] sm:$0xf] 0
      %2076 = vst [vmem:[%s175 + $0x4c] sm:$0x1] 0
      %v2077 = vpack.c.bf16 %v2049, %v2049
      %v2078 = vpack.c.bf16 %v2050, %v2050
      %v2079 = vpack.c.bf16 %v2051, %v2051
      %v2080 = vpack.c.bf16 %v2052, %v2052
      %v2081 = vpack.c.bf16 %v2053, %v2053
      %v2082 = vpack.c.bf16 %v2054, %v2054
      %v2083 = vpack.c.bf16 %v2055, %v2055
      %v2084 = vpack.c.bf16 %v2056, %v2056
      %v2093 = vunpack.c.l.b16 %v2077
      %v2094 = vunpack.c.l.b16 %v2078
      %v2095 = vunpack.c.l.b16 %v2079
      %v2096 = vunpack.c.l.b16 %v2080
      %v2097 = vunpack.c.l.b16 %v2081
      %v2098 = vunpack.c.l.b16 %v2082
      %v2099 = vunpack.c.l.b16 %v2083
      %v2100 = vunpack.c.l.b16 %v2084
      %v2101 = vpack.c.b16 %v2093, %v2093
      %v2102 = vpack.c.b16 %v2094, %v2094
      %v2103 = vpack.c.b16 %v2095, %v2095
      %v2104 = vpack.c.b16 %v2096, %v2096
      %v2105 = vpack.c.b16 %v2097, %v2097
      %v2106 = vpack.c.b16 %v2098, %v2098
      %v2107 = vpack.c.b16 %v2099, %v2099
      %v2108 = vpack.c.b16 %v2100, %v2100
      %v2110 = vshrl.u32 %v2101, 16
      %v2112 = vrot.slane %v2110, 7
      %v2113 = vshll.u32 %v2101, 16
      %v2115 = vor.u32 %v2112, %v2113
      %v2116 = vrot.slane %v2112, 4
      %v2118 = vshrl.u32 %v2102, 16
      %v2120 = vrot.slane %v2118, 7
      %v2121 = vshll.u32 %v2102, 16
      %v2123 = vor.u32 %v2120, %v2121
      %v2124 = vrot.slane %v2120, 4
      %v2126 = vshrl.u32 %v2103, 16
      %v2128 = vrot.slane %v2126, 7
      %v2129 = vshll.u32 %v2103, 16
      %v2131 = vor.u32 %v2128, %v2129
      %v2132 = vrot.slane %v2128, 4
      %v2134 = vshrl.u32 %v2104, 16
      %v2136 = vrot.slane %v2134, 7
      %v2137 = vshll.u32 %v2104, 16
      %v2139 = vor.u32 %v2136, %v2137
      %v2140 = vrot.slane %v2136, 4
      %v2142 = vshrl.u32 %v2105, 16
      %v2144 = vrot.slane %v2142, 7
      %v2145 = vshll.u32 %v2105, 16
      %v2147 = vor.u32 %v2144, %v2145
      %v2148 = vrot.slane %v2144, 4
      %v2150 = vshrl.u32 %v2106, 16
      %v2152 = vrot.slane %v2150, 7
      %v2153 = vshll.u32 %v2106, 16
      %v2155 = vor.u32 %v2152, %v2153
      %v2156 = vrot.slane %v2152, 4
      %v2158 = vshrl.u32 %v2107, 16
      %v2160 = vrot.slane %v2158, 7
      %v2161 = vshll.u32 %v2107, 16
      %v2163 = vor.u32 %v2160, %v2161
      %v2164 = vrot.slane %v2160, 4
      %v2166 = vshrl.u32 %v2108, 16
      %v2168 = vrot.slane %v2166, 7
      %v2169 = vshll.u32 %v2108, 16
      %v2171 = vor.u32 %v2168, %v2169
      %v2172 = vrot.slane %v2168, 4
      %s2189 = scalar_lea.vmem %s175, 8
      %vm2190 = vcmask 1043456
      %vm2191 = vsmask.f32 7938
      %vm2192 = vmand %vm2190, %vm2191
      %v2193 = vld [vmem:[%s2189] sm:$0xf]
      %v2194 = vsel %vm2192, %v2115, %v2193
      %2195 = vst [vmem:[%s2189] sm:$0xf] %v2194
      %vm2196 = vcmask 1040384
      %vm2197 = vsmask.f32 256
      %vm2198 = vmand %vm2196, %vm2197
      %v2199 = vld [vmem:[%s2189 + $0x4] sm:$0x1]
      %v2200 = vsel %vm2198, %v2116, %v2199
      %2201 = vst [vmem:[%s2189 + $0x4] sm:$0x1] %v2200
      %v2202 = vld [vmem:[%s2189 + $0x8] sm:$0xf]
      %v2203 = vsel %vm2192, %v2123, %v2202
      %2204 = vst [vmem:[%s2189 + $0x8] sm:$0xf] %v2203
      %v2205 = vld [vmem:[%s2189 + $0xc] sm:$0x1]
      %v2206 = vsel %vm2198, %v2124, %v2205
      %2207 = vst [vmem:[%s2189 + $0xc] sm:$0x1] %v2206
      %v2208 = vld [vmem:[%s2189 + $0x10] sm:$0xf]
      %v2209 = vsel %vm2192, %v2131, %v2208
      %2210 = vst [vmem:[%s2189 + $0x10] sm:$0xf] %v2209
      %v2211 = vld [vmem:[%s2189 + $0x14] sm:$0x1]
      %v2212 = vsel %vm2198, %v2132, %v2211
      %2213 = vst [vmem:[%s2189 + $0x14] sm:$0x1] %v2212
      %v2214 = vld [vmem:[%s2189 + $0x18] sm:$0xf]
      %v2215 = vsel %vm2192, %v2139, %v2214
      %2216 = vst [vmem:[%s2189 + $0x18] sm:$0xf] %v2215
      %v2217 = vld [vmem:[%s2189 + $0x1c] sm:$0x1]
      %v2218 = vsel %vm2198, %v2140, %v2217
      %2219 = vst [vmem:[%s2189 + $0x1c] sm:$0x1] %v2218
      %v2220 = vld [vmem:[%s2189 + $0x20] sm:$0xf]
      %v2221 = vsel %vm2192, %v2147, %v2220
      %2222 = vst [vmem:[%s2189 + $0x20] sm:$0xf] %v2221
      %v2223 = vld [vmem:[%s2189 + $0x24] sm:$0x1]
      %v2224 = vsel %vm2198, %v2148, %v2223
      %2225 = vst [vmem:[%s2189 + $0x24] sm:$0x1] %v2224
      %v2226 = vld [vmem:[%s2189 + $0x28] sm:$0xf]
      %v2227 = vsel %vm2192, %v2155, %v2226
      %2228 = vst [vmem:[%s2189 + $0x28] sm:$0xf] %v2227
      %v2229 = vld [vmem:[%s2189 + $0x2c] sm:$0x1]
      %v2230 = vsel %vm2198, %v2156, %v2229
      %2231 = vst [vmem:[%s2189 + $0x2c] sm:$0x1] %v2230
      %v2232 = vld [vmem:[%s2189 + $0x30] sm:$0xf]
      %v2233 = vsel %vm2192, %v2163, %v2232
      %2234 = vst [vmem:[%s2189 + $0x30] sm:$0xf] %v2233
      %v2235 = vld [vmem:[%s2189 + $0x34] sm:$0x1]
      %v2236 = vsel %vm2198, %v2164, %v2235
      %2237 = vst [vmem:[%s2189 + $0x34] sm:$0x1] %v2236
      %v2238 = vld [vmem:[%s2189 + $0x38] sm:$0xf]
      %v2239 = vsel %vm2192, %v2171, %v2238
      %2240 = vst [vmem:[%s2189 + $0x38] sm:$0xf] %v2239
      %v2241 = vld [vmem:[%s2189 + $0x3c] sm:$0x1]
      %v2242 = vsel %vm2198, %v2172, %v2241
      %2243 = vst [vmem:[%s2189 + $0x3c] sm:$0x1] %v2242
      %p2244 = scmp.lt.s32.totalorder %s14, 1
      %s2245 = scalar_select %p2244, %s14, 1
      %s2246 = smul.addr %s2245, 20
      %s2247 = smul.addr %s2246, 4
      %s2248 = scalar_lea.vmem %s3, %s2247
      // Predicated region
      $region33: #{wrn_block_forward.2} parent=31 // pred_check
        %p2249 = pneg %p100
      $region34: #{wrn_block_forward.2} parent=31 // pred_check_branch
        %2251 = sbr.rel (%p2249) target = $region36
      $region35: #{wrn_block_forward.2} parent=31 // pred_region
        _
      $region36: #{wrn_block_forward.2} parent=31 // pred_fallthru
        _
    $region32: #{wrn_block_forward.2} parent=5 // pred_fallthru
      _
    %p2252 = scmp.le.s32.totalorder 2, %s9
    // Predicated region
    $region37: #{wrn_block_forward.2} parent=5 // pred_check
      %p2253 = pneg %p2252
    $region38: #{wrn_block_forward.2} parent=5 // pred_check_branch
      %2255 = sbr.rel (%p2253) target = $region40
    $region39: #{wrn_block_forward.2} parent=5 // pred_region
      %s2256 = ssub.s32 %s9, 2
      // Predicated region
      $region41: #{wrn_block_forward.2} parent=39 // pred_check
        %p2257 = pneg %p106
      $region42: #{wrn_block_forward.2} parent=39 // pred_check_branch
        %2259 = sbr.rel (%p2257) target = $region44
      $region43: #{wrn_block_forward.2} parent=39 // pred_region
        %p2260 = scmp.lt.s32.totalorder %s15, 1
        %s2261 = scalar_select %p2260, %s15, 1
        %s2262 = smul.addr %s2261, 20
        %s2263 = smul.addr %s2262, 4
        %s2264 = scalar_lea.vmem %s3, %s2263
      $region44: #{wrn_block_forward.2} parent=39 // pred_fallthru
        _
    $region40: #{wrn_block_forward.2} parent=5 // pred_fallthru
      _
  $region6: #{wrn_block_forward.2} parent=0 // loop_footer
    %s13 = sadd.s32 1, %s9
  $region7: #{wrn_block_forward.2} parent=0 // loop_footer_branch
    %8 = sbr.rel target = $region3
  $region8: #{wrn_block_forward.2} parent=0 // loop_exit
    _

// kernel: wrn_block_forward.3
$region0: #{wrn_block_forward.3}
  #allocation0 [shape = 'u32[]', space=smem, size = 0x4, offset = 0x4, fixed_abs, tag = 'smem constant byte address 0x4 - core index']
  #allocation1 [shape = 'u32[144,128]{1,0:T(1,128)}', space=vmem, size = 0x12000, scoped, tag = 'internal scratch']
  %s0 = inlined_call_operand.vmem [shape: bf16[2,10,10,128], index: 0, kind: input, shape index: {}]
  %s1 = inlined_call_operand.vmem [shape: bf16[9,128,128], index: 1, kind: input, shape index: {}]
  %s2 = inlined_call_operand.vmem [shape: f32[1,128], index: 2, kind: input, shape index: {}]
  %s3 = inlined_call_operand.vmem [shape: bf16[2,8,8,128], index: 3, kind: input, shape index: {}]
  %s4 = inlined_call_operand.vmem [shape: bf16[128,128], index: 4, kind: input, shape index: {}]
  %s5 = inlined_call_operand.vmem [shape: f32[2,8,8,128], index: 5, kind: output, shape index: {}]
  %s6 = sld [smem:[#allocation0]]
  $region53: #{wrn_block_forward.3} parent=0
    _
  %s8 = ssub.s32 1, %s6
  %s9 = scalar_select 0, %s8, %s6
  loop: start=0, step=1, limit=4
  $region2: #{wrn_block_forward.3} parent=0 // loop_pre_header
    _
  $region3: #{wrn_block_forward.3} parent=0 // loop_header
    %s11 = sphi 0, %s15
    %p12 = scmp.ge.s32.totalorder %s11, 4
    %s21 = sphi 0, %s23
    %s24 = sphi 0, %s21
    %s25 = sphi 0, %s24
    %s41 = sphi 0, %s25
    %s45 = sphi 0, %s45
    %s47 = sphi 0, %s45
    %s48 = sphi 0, %s47
    %s62 = sphi 0, %s48
    %s66 = sphi 0, %s66
    %s68 = sphi 0, %s66
    %s69 = sphi 0, %s68
    %s83 = sphi 0, %s69
    %s89 = sphi 0, %s91
    %s92 = sphi 0, %s89
    %s93 = sphi 0, %s92
    %s109 = sphi 0, %s93
    %s113 = sphi 0, %s113
    %s115 = sphi 0, %s113
    %s116 = sphi 0, %s115
    %s130 = sphi 0, %s116
    %s136 = sphi 0, %s138
    %s139 = sphi 0, %s136
    %s140 = sphi 0, %s139
    %s156 = sphi 0, %s140
  $region4: #{wrn_block_forward.3} parent=0 // loop_header_branch
    %14 = sbr.rel (%p12) target = $region8
  $region5: #{wrn_block_forward.3} parent=0 // loop_body
    %s16 = ssub.s32 %s11, 1
    %s17 = ssub.s32 %s11, 2
    %s18 = sadd.s32 %s11, 1
    %s19 = ssub.s32 %s11, %s18
    %p20 = scmp.eq.s32.totalorder %s19, 0
    %s22 = sadd.s32 %s21, 1
    %s23 = scalar_select %p20, %s21, %s22
    %p26 = pneg %p20
    %p27 = scmp.eq.s32.totalorder %s11, 1
    %p28 = por %p26, %p27
    %p29 = scmp.ne.s32.totalorder %s21, %s24
    %p30 = scmp.eq.s32.totalorder %s11, 0
    %p31 = por %p29, %p30
    %p32 = scmp.ne.s32.totalorder %s21, %s24
    %p33 = scmp.eq.s32.totalorder %s16, 1
    %p34 = por %p32, %p33
    %p35 = scmp.ne.s32.totalorder %s24, %s25
    %p36 = scmp.eq.s32.totalorder %s16, 0
    %p37 = por %p35, %p36
    %p38 = scmp.ne.s32.totalorder %s24, %s25
    %p39 = scmp.eq.s32.totalorder %s17, 1
    %p40 = por %p38, %p39
    %p42 = scmp.ne.s32.totalorder %s25, %s41
    %p43 = scmp.eq.s32.totalorder %s17, 0
    %p44 = por %p42, %p43
    %s46 = sadd.s32 %s45, 1
    %p49 = scmp.eq.s32.totalorder %s11, 1
    %p50 = scmp.ne.s32.totalorder %s45, %s47
    %p51 = scmp.eq.s32.totalorder %s11, 0
    %p52 = por %p50, %p51
    %p53 = scmp.ne.s32.totalorder %s45, %s47
    %p54 = scmp.eq.s32.totalorder %s16, 1
    %p55 = por %p53, %p54
    %p56 = scmp.ne.s32.totalorder %s47, %s48
    %p57 = scmp.eq.s32.totalorder %s16, 0
    %p58 = por %p56, %p57
    %p59 = scmp.ne.s32.totalorder %s47, %s48
    %p60 = scmp.eq.s32.totalorder %s17, 1
    %p61 = por %p59, %p60
    %p63 = scmp.ne.s32.totalorder %s48, %s62
    %p64 = scmp.eq.s32.totalorder %s17, 0
    %p65 = por %p63, %p64
    %s67 = sadd.s32 %s66, 1
    %p70 = scmp.eq.s32.totalorder %s11, 1
    %p71 = scmp.ne.s32.totalorder %s66, %s68
    %p72 = scmp.eq.s32.totalorder %s11, 0
    %p73 = por %p71, %p72
    %p74 = scmp.ne.s32.totalorder %s66, %s68
    %p75 = scmp.eq.s32.totalorder %s16, 1
    %p76 = por %p74, %p75
    %p77 = scmp.ne.s32.totalorder %s68, %s69
    %p78 = scmp.eq.s32.totalorder %s16, 0
    %p79 = por %p77, %p78
    %p80 = scmp.ne.s32.totalorder %s68, %s69
    %p81 = scmp.eq.s32.totalorder %s17, 1
    %p82 = por %p80, %p81
    %p84 = scmp.ne.s32.totalorder %s69, %s83
    %p85 = scmp.eq.s32.totalorder %s17, 0
    %p86 = por %p84, %p85
    %s87 = ssub.s32 %s11, %s18
    %p88 = scmp.eq.s32.totalorder %s87, 0
    %s90 = sadd.s32 %s89, 1
    %s91 = scalar_select %p88, %s89, %s90
    %p94 = pneg %p88
    %p95 = scmp.eq.s32.totalorder %s11, 1
    %p96 = por %p94, %p95
    %p97 = scmp.ne.s32.totalorder %s89, %s92
    %p98 = scmp.eq.s32.totalorder %s11, 0
    %p99 = por %p97, %p98
    %p100 = scmp.ne.s32.totalorder %s89, %s92
    %p101 = scmp.eq.s32.totalorder %s16, 1
    %p102 = por %p100, %p101
    %p103 = scmp.ne.s32.totalorder %s92, %s93
    %p104 = scmp.eq.s32.totalorder %s16, 0
    %p105 = por %p103, %p104
    %p106 = scmp.ne.s32.totalorder %s92, %s93
    %p107 = scmp.eq.s32.totalorder %s17, 1
    %p108 = por %p106, %p107
    %p110 = scmp.ne.s32.totalorder %s93, %s109
    %p111 = scmp.eq.s32.totalorder %s17, 0
    %p112 = por %p110, %p111
    %s114 = sadd.s32 %s113, 1
    %p117 = scmp.eq.s32.totalorder %s11, 1
    %p118 = scmp.ne.s32.totalorder %s113, %s115
    %p119 = scmp.eq.s32.totalorder %s11, 0
    %p120 = por %p118, %p119
    %p121 = scmp.ne.s32.totalorder %s113, %s115
    %p122 = scmp.eq.s32.totalorder %s16, 1
    %p123 = por %p121, %p122
    %p124 = scmp.ne.s32.totalorder %s115, %s116
    %p125 = scmp.eq.s32.totalorder %s16, 0
    %p126 = por %p124, %p125
    %p127 = scmp.ne.s32.totalorder %s115, %s116
    %p128 = scmp.eq.s32.totalorder %s17, 1
    %p129 = por %p127, %p128
    %p131 = scmp.ne.s32.totalorder %s116, %s130
    %p132 = scmp.eq.s32.totalorder %s17, 0
    %p133 = por %p131, %p132
    %s134 = ssub.s32 %s11, %s18
    %p135 = scmp.eq.s32.totalorder %s134, 0
    %s137 = sadd.s32 %s136, 1
    %s138 = scalar_select %p135, %s136, %s137
    %p141 = pneg %p135
    %p142 = scmp.eq.s32.totalorder %s11, 1
    %p143 = por %p141, %p142
    %p144 = scmp.ne.s32.totalorder %s136, %s139
    %p145 = scmp.eq.s32.totalorder %s11, 0
    %p146 = por %p144, %p145
    %p147 = scmp.ne.s32.totalorder %s136, %s139
    %p148 = scmp.eq.s32.totalorder %s16, 1
    %p149 = por %p147, %p148
    %p150 = scmp.ne.s32.totalorder %s139, %s140
    %p151 = scmp.eq.s32.totalorder %s16, 0
    %p152 = por %p150, %p151
    %p153 = scmp.ne.s32.totalorder %s139, %s140
    %p154 = scmp.eq.s32.totalorder %s17, 1
    %p155 = por %p153, %p154
    %p157 = scmp.ne.s32.totalorder %s140, %s156
    %p158 = scmp.eq.s32.totalorder %s17, 0
    %p159 = por %p157, %p158
    %p160 = scmp.le.s32.totalorder 1, %s11
    %p161 = scmp.lt.s32.totalorder %s11, 3
    %p162 = pnand %p160, %p161
    %p163 = pneg %p162
    // Predicated region
    $region9: #{wrn_block_forward.3} parent=5 // pred_check
      _
    $region10: #{wrn_block_forward.3} parent=5 // pred_check_branch
      %165 = sbr.rel (%p162) target = $region12
    $region11: #{wrn_block_forward.3} parent=5 // pred_region
      %s166 = ssub.s32 %s11, 1
      // Predicated region
      $region13: #{wrn_block_forward.3} parent=11 // pred_check
        %p167 = pneg %p58
      $region14: #{wrn_block_forward.3} parent=11 // pred_check_branch
        %169 = sbr.rel (%p167) target = $region16
      $region15: #{wrn_block_forward.3} parent=11 // pred_region
        _
      $region16: #{wrn_block_forward.3} parent=11 // pred_fallthru
        _
      // Predicated region
      $region17: #{wrn_block_forward.3} parent=11 // pred_check
        %p170 = pneg %p79
      $region18: #{wrn_block_forward.3} parent=11 // pred_check_branch
        %172 = sbr.rel (%p170) target = $region20
      $region19: #{wrn_block_forward.3} parent=11 // pred_region
        _
      $region20: #{wrn_block_forward.3} parent=11 // pred_fallthru
        _
      // Predicated region
      $region21: #{wrn_block_forward.3} parent=11 // pred_check
        %p173 = pneg %p126
      $region22: #{wrn_block_forward.3} parent=11 // pred_check_branch
        %175 = sbr.rel (%p173) target = $region24
      $region23: #{wrn_block_forward.3} parent=11 // pred_region
        _
      $region24: #{wrn_block_forward.3} parent=11 // pred_fallthru
        _
    $region12: #{wrn_block_forward.3} parent=5 // pred_fallthru
      _
    %p176 = scmp.lt.s32.totalorder %s11, 2
    // Predicated region
    $region25: #{wrn_block_forward.3} parent=5 // pred_check
      %p177 = pneg %p176
    $region26: #{wrn_block_forward.3} parent=5 // pred_check_branch
      %179 = sbr.rel (%p177) target = $region28
    $region27: #{wrn_block_forward.3} parent=5 // pred_region
      // Predicated region
      $region29: #{wrn_block_forward.3} parent=27 // pred_check
        %p180 = pneg %p31
      $region30: #{wrn_block_forward.3} parent=27 // pred_check_branch
        %182 = sbr.rel (%p180) target = $region32
      $region31: #{wrn_block_forward.3} parent=27 // pred_region
        %p183 = scmp.lt.s32.totalorder %s11, 1
        %s184 = scalar_select %p183, %s11, 1
        %s185 = smul.addr %s184, 20
        %s186 = smul.addr %s185, 4
        %s187 = scalar_lea.vmem %s0, %s186
      $region32: #{wrn_block_forward.3} parent=27 // pred_fallthru
        _
      // Predicated region
      $region33: #{wrn_block_forward.3} parent=27 // pred_check
        %p188 = pneg %p99
      $region34: #{wrn_block_forward.3} parent=27 // pred_check_branch
        %190 = sbr.rel (%p188) target = $region36
      $region35: #{wrn_block_forward.3} parent=27 // pred_region
        %p191 = scmp.lt.s32.totalorder %s11, 1
        %s192 = scalar_select %p191, %s11, 1
        %s193 = smul.addr %s192, 8
        %s194 = smul.addr %s193, 4
        %s195 = scalar_lea.vmem %s3, %s194
      $region36: #{wrn_block_forward.3} parent=27 // pred_fallthru
        _
    $region28: #{wrn_block_forward.3} parent=5 // pred_fallthru
      _
    %p196 = scmp.le.s32.totalorder 1, %s11
    %p197 = scmp.lt.s32.totalorder %s11, 3
    %p198 = pnand %p196, %p197
    %p199 = pneg %p198
    // Predicated region
    $region37: #{wrn_block_forward.3} parent=5 // pred_check
      _
    $region38: #{wrn_block_forward.3} parent=5 // pred_check_branch
      %201 = sbr.rel (%p198) target = $region40
    $region39: #{wrn_block_forward.3} parent=5 // pred_region
      %s202 = ssub.s32 %s11, 1
      %p203 = scmp.lt.s32.totalorder %s16, 1
      %s204 = scalar_select %p203, %s16, 1
      %s205 = smul.addr %s204, 20
      %s206 = smul.addr %s205, 4
      %s207 = scalar_lea.vmem %s0, %s206
      %p208 = pneg %p37
      %p209 = pneg %p34
      %p210 = pneg %p58
      %p211 = pneg %p55
      %p212 = pneg %p79
      %p213 = pneg %p76
      %p214 = scmp.lt.s32.totalorder %s16, 1
      %s215 = scalar_select %p214, %s16, 1
      %s216 = smul.addr %s215, 8
      %s217 = smul.addr %s216, 4
      %s218 = scalar_lea.vmem %s3, %s217
      %p219 = pneg %p105
      %p220 = pneg %p102
      %p221 = pneg %p126
      %p222 = pneg %p123
      %p223 = pneg %p152
      %p224 = pneg %p149
      %p225 = scmp.lt.s32.totalorder %s16, 1
      %s226 = scalar_select %p225, %s16, 1
      %s227 = smul.addr %s226, 8
      %s228 = smul.addr %s227, 8
      %s229 = scalar_lea.vmem %s5, %s228
      %p230 = scmp.lt.s32.totalorder %s16, 1
      %s231 = scalar_select %p230, %s16, 1
      %s232 = smul.addr %s231, 20
      %s233 = smul.addr %s232, 4
      %s234 = scalar_lea.vmem %s0, %s233
      %p235 = scmp.lt.s32.totalorder %s16, 1
      %s236 = scalar_select %p235, %s16, 1
      %s237 = smul.addr %s236, 8
      %s238 = smul.addr %s237, 4
      %s239 = scalar_lea.vmem %s3, %s238
      %p240 = scmp.lt.s32.totalorder %s16, 1
      %s241 = scalar_select %p240, %s16, 1
      %s242 = smul.addr %s241, 8
      %s243 = smul.addr %s242, 8
      %s244 = scalar_lea.vmem %s5, %s243
      %v246 = vld [vmem:[%s234] sm:$0xf]
      %v247 = vld [vmem:[%s234 + $0x8] sm:$0xf]
      %v248 = vld [vmem:[%s234 + $0x10] sm:$0xf]
      %v249 = vld [vmem:[%s234 + $0x18] sm:$0xf]
      %v250 = vld [vmem:[%s234 + $0x20] sm:$0xf]
      %v251 = vld [vmem:[%s234 + $0x28] sm:$0xf]
      %v252 = vld [vmem:[%s234 + $0x30] sm:$0xf]
      %v253 = vld [vmem:[%s234 + $0x38] sm:$0xf]
      %v254 = vld [vmem:[%s1] sm:$0xf]
      %v255 = vld [vmem:[%s1 + $0x4] sm:$0xf]
      %v256 = vld [vmem:[%s1 + $0x8] sm:$0xf]
      %v257 = vld [vmem:[%s1 + $0xc] sm:$0xf]
      %v258 = vld [vmem:[%s1 + $0x10] sm:$0xf]
      %v259 = vld [vmem:[%s1 + $0x14] sm:$0xf]
      %v260 = vld [vmem:[%s1 + $0x18] sm:$0xf]
      %v261 = vld [vmem:[%s1 + $0x1c] sm:$0xf]
      %v262 = vld [vmem:[%s1 + $0x20] sm:$0xf]
      %v263 = vld [vmem:[%s1 + $0x24] sm:$0xf]
      %v264 = vld [vmem:[%s1 + $0x28] sm:$0xf]
      %v265 = vld [vmem:[%s1 + $0x2c] sm:$0xf]
      %v266 = vld [vmem:[%s1 + $0x30] sm:$0xf]
      %v267 = vld [vmem:[%s1 + $0x34] sm:$0xf]
      %v268 = vld [vmem:[%s1 + $0x38] sm:$0xf]
      %v269 = vld [vmem:[%s1 + $0x3c] sm:$0xf]
      %v270 = vld [vmem:[%s234 + $0x4] sm:$0x1]
      %v271 = vld [vmem:[%s234 + $0xc] sm:$0x1]
      %v272 = vld [vmem:[%s234 + $0x14] sm:$0x1]
      %v273 = vld [vmem:[%s234 + $0x1c] sm:$0x1]
      %v274 = vld [vmem:[%s234 + $0x24] sm:$0x1]
      %v275 = vld [vmem:[%s234 + $0x2c] sm:$0x1]
      %v276 = vld [vmem:[%s234 + $0x34] sm:$0x1]
      %v277 = vld [vmem:[%s234 + $0x3c] sm:$0x1]
      %vm278 = vsmask.f32 3328
      %vm279 = vsmask.f32 7440
      %vm280 = vmor %vm278, %vm279
      %v282 = vshrl.u32 %v246, 16
      %v284 = vrot.slane %v282, 4
      %v285 = vshll.u32 %v246, 16
      %v287 = vrot.slane %v285, 5
      %v288 = vor.u32 %v284, %v287
      %v289 = vrot.slane %v288, 4
      %v291 = vshll.u32 %v270, 16
      %v293 = vrot.slane %v291, 5
      %v294 = vsel %vm280, %v289, %v293
      %v296 = vshrl.u32 %v247, 16
      %v298 = vrot.slane %v296, 4
      %v299 = vshll.u32 %v247, 16
      %v301 = vrot.slane %v299, 5
      %v302 = vor.u32 %v298, %v301
      %v303 = vrot.slane %v302, 4
      %v305 = vshll.u32 %v271, 16
      %v307 = vrot.slane %v305, 5
      %v308 = vsel %vm280, %v303, %v307
      %v310 = vshrl.u32 %v248, 16
      %v312 = vrot.slane %v310, 4
      %v313 = vshll.u32 %v248, 16
      %v315 = vrot.slane %v313, 5
      %v316 = vor.u32 %v312, %v315
      %v317 = vrot.slane %v316, 4
      %v319 = vshll.u32 %v272, 16
      %v321 = vrot.slane %v319, 5
      %v322 = vsel %vm280, %v317, %v321
      %v324 = vshrl.u32 %v249, 16
      %v326 = vrot.slane %v324, 4
      %v327 = vshll.u32 %v249, 16
      %v329 = vrot.slane %v327, 5
      %v330 = vor.u32 %v326, %v329
      %v331 = vrot.slane %v330, 4
      %v333 = vshll.u32 %v273, 16
      %v335 = vrot.slane %v333, 5
      %v336 = vsel %vm280, %v331, %v335
      %v338 = vshrl.u32 %v250, 16
      %v340 = vrot.slane %v338, 4
      %v341 = vshll.u32 %v250, 16
      %v343 = vrot.slane %v341, 5
      %v344 = vor.u32 %v340, %v343
      %v345 = vrot.slane %v344, 4
      %v347 = vshll.u32 %v274, 16
      %v349 = vrot.slane %v347, 5
      %v350 = vsel %vm280, %v345, %v349
      %v352 = vshrl.u32 %v251, 16
      %v354 = vrot.slane %v352, 4
      %v355 = vshll.u32 %v251, 16
      %v357 = vrot.slane %v355, 5
      %v358 = vor.u32 %v354, %v357
      %v359 = vrot.slane %v358, 4
      %v361 = vshll.u32 %v275, 16
      %v363 = vrot.slane %v361, 5
      %v364 = vsel %vm280, %v359, %v363
      %v366 = vshrl.u32 %v252, 16
      %v368 = vrot.slane %v366, 4
      %v369 = vshll.u32 %v252, 16
      %v371 = vrot.slane %v369, 5
      %v372 = vor.u32 %v368, %v371
      %v373 = vrot.slane %v372, 4
      %v375 = vshll.u32 %v276, 16
      %v377 = vrot.slane %v375, 5
      %v378 = vsel %vm280, %v373, %v377
      %v380 = vshrl.u32 %v253, 16
      %v382 = vrot.slane %v380, 4
      %v383 = vshll.u32 %v253, 16
      %v385 = vrot.slane %v383, 5
      %v386 = vor.u32 %v382, %v385
      %v387 = vrot.slane %v386, 4
      %v389 = vshll.u32 %v277, 16
      %v391 = vrot.slane %v389, 5
      %v392 = vsel %vm280, %v387, %v391
      %s393 = scalar_lea.vmem %s1, 64
      %v394 = vld [vmem:[%s393] sm:$0xf]
      %v395 = vld [vmem:[%s393 + $0x4] sm:$0xf]
      %v396 = vld [vmem:[%s393 + $0x8] sm:$0xf]
      %v397 = vld [vmem:[%s393 + $0xc] sm:$0xf]
      %v398 = vld [vmem:[%s393 + $0x10] sm:$0xf]
      %v399 = vld [vmem:[%s393 + $0x14] sm:$0xf]
      %v400 = vld [vmem:[%s393 + $0x18] sm:$0xf]
      %v401 = vld [vmem:[%s393 + $0x1c] sm:$0xf]
      %v402 = vld [vmem:[%s393 + $0x20] sm:$0xf]
      %v403 = vld [vmem:[%s393 + $0x24] sm:$0xf]
      %v404 = vld [vmem:[%s393 + $0x28] sm:$0xf]
      %v405 = vld [vmem:[%s393 + $0x2c] sm:$0xf]
      %v406 = vld [vmem:[%s393 + $0x30] sm:$0xf]
      %v407 = vld [vmem:[%s393 + $0x34] sm:$0xf]
      %v408 = vld [vmem:[%s393 + $0x38] sm:$0xf]
      %v409 = vld [vmem:[%s393 + $0x3c] sm:$0xf]
      %v410 = vunpack.c.l.b16 %v294
      %v411 = vunpack.c.l.b16 %v308
      %v412 = vunpack.c.l.b16 %v322
      %v413 = vunpack.c.l.b16 %v336
      %v414 = vunpack.c.l.b16 %v350
      %v415 = vunpack.c.l.b16 %v364
      %v416 = vunpack.c.l.b16 %v378
      %v417 = vunpack.c.l.b16 %v392
      %v418 = vpack.c.b16 %v411, %v410
      %v419 = vpack.c.b16 %v413, %v412
      %v420 = vpack.c.b16 %v415, %v414
      %v421 = vpack.c.b16 %v417, %v416
      %v442 = vunpack.c.l.b16 %v394
      %v443 = vunpack.c.l.b16 %v395
      %v444 = vunpack.c.l.b16 %v396
      %v445 = vunpack.c.l.b16 %v397
      %v446 = vunpack.c.l.b16 %v398
      %v447 = vunpack.c.l.b16 %v399
      %v448 = vunpack.c.l.b16 %v400
      %v449 = vunpack.c.l.b16 %v401
      %v450 = vunpack.c.l.b16 %v402
      %v451 = vunpack.c.l.b16 %v403
      %v452 = vunpack.c.l.b16 %v404
      %v453 = vunpack.c.l.b16 %v405
      %v454 = vunpack.c.l.b16 %v406
      %v455 = vunpack.c.l.b16 %v407
      %v456 = vunpack.c.l.b16 %v408
      %v457 = vunpack.c.l.b16 %v409
      %v458 = vpack.c.b16 %v443, %v442
      %v459 = vpack.c.b16 %v445, %v444
      %v460 = vpack.c.b16 %v447, %v446
      %v461 = vpack.c.b16 %v449, %v448
      %v462 = vpack.c.b16 %v451, %v450
      %v463 = vpack.c.b16 %v453, %v452
      %v464 = vpack.c.b16 %v455, %v454
      %v465 = vpack.c.b16 %v457, %v456
      %474 = vmatprep.subr.bf16.mxu0 0
      %475 = vmatpush1.bf16.msra.mxu0 %v458
      %476 = vmatprep.subr.bf16.mxu0 0
      %477 = vmatpush1.bf16.msra.mxu0 %v459
      %478 = vmatprep.subr.bf16.mxu0 0
      %479 = vmatpush1.bf16.msra.mxu0 %v460
      %480 = vmatprep.subr.bf16.mxu0 0
      %481 = vmatpush1.bf16.msra.mxu0 %v461
      %482 = vmatprep.subr.bf16.mxu0 0
      %483 = vmatpush1.bf16.msra.mxu0 %v462
      %484 = vmatprep.subr.bf16.mxu0 0
      %485 = vmatpush1.bf16.msra.mxu0 %v463
      %486 = vmatprep.subr.bf16.mxu0 0
      %487 = vmatpush1.bf16.msra.mxu0 %v464
      %488 = vmatprep.subr.bf16.mxu0 0
      %489 = vmatpush1.bf16.msra.mxu0 %v465
      %490 = vmatprep.subr.bf16.mxu0 0
      %491 = vmatpush1.bf16.msra.mxu0 0
      %492 = vmatprep.subr.bf16.mxu0 0
      %493 = vmatpush1.bf16.msra.mxu0 0
      %494 = vmatprep.subr.bf16.mxu0 0
      %495 = vmatpush1.bf16.msra.mxu0 0
      %496 = vmatprep.subr.bf16.mxu0 0
      %497 = vmatpush1.bf16.msra.mxu0 0
      %498 = vmatprep.subr.bf16.mxu0 0
      %499 = vmatpush1.bf16.msra.mxu0 0
      %500 = vmatprep.subr.bf16.mxu0 0
      %501 = vmatpush1.bf16.msra.mxu0 0
      %502 = vmatprep.subr.bf16.mxu0 0
      %503 = vmatpush1.bf16.msra.mxu0 0
      %504 = vmatprep.subr.bf16.mxu0 0
      %505 = vmatpush1.bf16.msra.mxu0 0
      %506 = vmatprep.mubr.bf16.mxu0 0
      %507 = vmatmul.mubr.bf16.gmra.mrb[0].mxu0 %v418
      %v508 = vpop.f32.mrb[0].mxu0
      %v509 = vadd.f32 0.0, %v508
      %v510 = vpop.f32.mrb[0].mxu0
      %v511 = vpop.f32.mrb[0].mxu0
      %v512 = vadd.f32 0.0, %v511
      %v513 = vpop.f32.mrb[0].mxu0
      %514 = vmatprep.mubr.bf16.mxu0 0
      %515 = vmatmul.mubr.bf16.gmra.mrb[0].mxu0 %v419
      %v516 = vpop.f32.mrb[0].mxu0
      %v517 = vadd.f32 0.0, %v516
      %v518 = vpop.f32.mrb[0].mxu0
      %v519 = vpop.f32.mrb[0].mxu0
      %v520 = vadd.f32 0.0, %v519
      %v521 = vpop.f32.mrb[0].mxu0
      %522 = vmatprep.mubr.bf16.mxu0 0
      %523 = vmatmul.mubr.bf16.gmra.mrb[0].mxu0 %v420
      %v524 = vpop.f32.mrb[0].mxu0
      %v525 = vadd.f32 0.0, %v524
      %v526 = vpop.f32.mrb[0].mxu0
      %v527 = vpop.f32.mrb[0].mxu0
      %v528 = vadd.f32 0.0, %v527
      %v529 = vpop.f32.mrb[0].mxu0
      %530 = vmatprep.mubr.bf16.mxu0 0
      %531 = vmatmul.mubr.bf16.gmra.mrb[0].mxu0 %v421
      %v532 = vpop.f32.mrb[0].mxu0
      %v533 = vadd.f32 0.0, %v532
      %v534 = vpop.f32.mrb[0].mxu0
      %v535 = vpop.f32.mrb[0].mxu0
      %v536 = vadd.f32 0.0, %v535
      %v537 = vpop.f32.mrb[0].mxu0
      %538 = vdwg.mxu0
      %v547 = vunpack.c.l.b16 %v246
      %v548 = vunpack.c.l.b16 %v247
      %v549 = vunpack.c.l.b16 %v248
      %v550 = vunpack.c.l.b16 %v249
      %v551 = vunpack.c.l.b16 %v250
      %v552 = vunpack.c.l.b16 %v251
      %v553 = vunpack.c.l.b16 %v252
      %v554 = vunpack.c.l.b16 %v253
      %v555 = vpack.c.b16 %v548, %v547
      %v556 = vpack.c.b16 %v550, %v549
      %v557 = vpack.c.b16 %v552, %v551
      %v558 = vpack.c.b16 %v554, %v553
      %v579 = vunpack.c.l.b16 %v254
      %v580 = vunpack.c.l.b16 %v255
      %v581 = vunpack.c.l.b16 %v256
      %v582 = vunpack.c.l.b16 %v257
      %v583 = vunpack.c.l.b16 %v258
      %v584 = vunpack.c.l.b16 %v259
      %v585 = vunpack.c.l.b16 %v260
      %v586 = vunpack.c.l.b16 %v261
      %v587 = vunpack.c.l.b16 %v262
      %v588 = vunpack.c.l.b16 %v263
      %v589 = vunpack.c.l.b16 %v264
      %v590 = vunpack.c.l.b16 %v265
      %v591 = vunpack.c.l.b16 %v266
      %v592 = vunpack.c.l.b16 %v267
      %v593 = vunpack.c.l.b16 %v268
      %v594 = vunpack.c.l.b16 %v269
      %v595 = vpack.c.b16 %v580, %v579
      %v596 = vpack.c.b16 %v582, %v581
      %v597 = vpack.c.b16 %v584, %v583
      %v598 = vpack.c.b16 %v586, %v585
      %v599 = vpack.c.b16 %v588, %v587
      %v600 = vpack.c.b16 %v590, %v589
      %v601 = vpack.c.b16 %v592, %v591
      %v602 = vpack.c.b16 %v594, %v593
      %611 = vmatprep.subr.bf16.mxu0 0
      %612 = vmatpush1.bf16.msra.mxu0 %v595
      %613 = vmatprep.subr.bf16.mxu0 0
      %614 = vmatpush1.bf16.msra.mxu0 %v596
      %615 = vmatprep.subr.bf16.mxu0 0
      %616 = vmatpush1.bf16.msra.mxu0 %v597
      %617 = vmatprep.subr.bf16.mxu0 0
      %618 = vmatpush1.bf16.msra.mxu0 %v598
      %619 = vmatprep.subr.bf16.mxu0 0
      %620 = vmatpush1.bf16.msra.mxu0 %v599
      %621 = vmatprep.subr.bf16.mxu0 0
      %622 = vmatpush1.bf16.msra.mxu0 %v600
      %623 = vmatprep.subr.bf16.mxu0 0
      %624 = vmatpush1.bf16.msra.mxu0 %v601
      %625 = vmatprep.subr.bf16.mxu0 0
      %626 = vmatpush1.bf16.msra.mxu0 %v602
      %627 = vmatprep.subr.bf16.mxu0 0
      %628 = vmatpush1.bf16.msra.mxu0 0
      %629 = vmatprep.subr.bf16.mxu0 0
      %630 = vmatpush1.bf16.msra.mxu0 0
      %631 = vmatprep.subr.bf16.mxu0 0
      %632 = vmatpush1.bf16.msra.mxu0 0
      %633 = vmatprep.subr.bf16.mxu0 0
      %634 = vmatpush1.bf16.msra.mxu0 0
      %635 = vmatprep.subr.bf16.mxu0 0
      %636 = vmatpush1.bf16.msra.mxu0 0
      %637 = vmatprep.subr.bf16.mxu0 0
      %638 = vmatpush1.bf16.msra.mxu0 0
      %639 = vmatprep.subr.bf16.mxu0 0
      %640 = vmatpush1.bf16.msra.mxu0 0
      %641 = vmatprep.subr.bf16.mxu0 0
      %642 = vmatpush1.bf16.msra.mxu0 0
      %643 = vmatprep.mubr.bf16.mxu0 0
      %644 = vmatmul.mubr.bf16.gmra.mrb[0].mxu0 %v555
      %v645 = vpop.f32.mrb[0].mxu0
      %v646 = vadd.f32 %v509, %v645
      %v647 = vpop.f32.mrb[0].mxu0
      %v648 = vpop.f32.mrb[0].mxu0
      %v649 = vadd.f32 %v512, %v648
      %v650 = vpop.f32.mrb[0].mxu0
      %651 = vmatprep.mubr.bf16.mxu0 0
      %652 = vmatmul.mubr.bf16.gmra.mrb[0].mxu0 %v556
      %v653 = vpop.f32.mrb[0].mxu0
      %v654 = vadd.f32 %v517, %v653
      %v655 = vpop.f32.mrb[0].mxu0
      %v656 = vpop.f32.mrb[0].mxu0
      %v657 = vadd.f32 %v520, %v656
      %v658 = vpop.f32.mrb[0].mxu0
      %659 = vmatprep.mubr.bf16.mxu0 0
      %660 = vmatmul.mubr.bf16.gmra.mrb[0].mxu0 %v557
      %v661 = vpop.f32.mrb[0].mxu0
      %v662 = vadd.f32 %v525, %v661
      %v663 = vpop.f32.mrb[0].mxu0
      %v664 = vpop.f32.mrb[0].mxu0
      %v665 = vadd.f32 %v528, %v664
      %v666 = vpop.f32.mrb[0].mxu0
      %667 = vmatprep.mubr.bf16.mxu0 0
      %668 = vmatmul.mubr.bf16.gmra.mrb[0].mxu0 %v558
      %v669 = vpop.f32.mrb[0].mxu0
      %v670 = vadd.f32 %v533, %v669
      %v671 = vpop.f32.mrb[0].mxu0
      %v672 = vpop.f32.mrb[0].mxu0
      %v673 = vadd.f32 %v536, %v672
      %v674 = vpop.f32.mrb[0].mxu0
      %675 = vdwg.mxu0
      %v676 = vld [vmem:[%s234] sm:$0xe]
      %v677 = vld [vmem:[%s234 + $0x8] sm:$0xe]
      %v678 = vld [vmem:[%s234 + $0x10] sm:$0xe]
      %v679 = vld [vmem:[%s234 + $0x18] sm:$0xe]
      %v680 = vld [vmem:[%s234 + $0x20] sm:$0xe]
      %v681 = vld [vmem:[%s234 + $0x28] sm:$0xe]
      %v682 = vld [vmem:[%s234 + $0x30] sm:$0xe]
      %v683 = vld [vmem:[%s234 + $0x38] sm:$0xe]
      %vm700 = vcmask 1042432
      %vm701 = vcmask 1046532
      %vm702 = vmor %vm700, %vm701
      %v703 = vrot.slane %v676, 5
      %v704 = vrot.slane %v703, 4
      %v705 = vrot.slane %v270, 5
      %v706 = vsel %vm702, %v704, %v705
      %v707 = vrot.slane %v677, 5
      %v708 = vrot.slane %v707, 4
      %v709 = vrot.slane %v271, 5
      %v710 = vsel %vm702, %v708, %v709
      %v711 = vrot.slane %v678, 5
      %v712 = vrot.slane %v711, 4
      %v713 = vrot.slane %v272, 5
      %v714 = vsel %vm702, %v712, %v713
      %v715 = vrot.slane %v679, 5
      %v716 = vrot.slane %v715, 4
      %v717 = vrot.slane %v273, 5
      %v718 = vsel %vm702, %v716, %v717
      %v719 = vrot.slane %v680, 5
      %v720 = vrot.slane %v719, 4
      %v721 = vrot.slane %v274, 5
      %v722 = vsel %vm702, %v720, %v721
      %v723 = vrot.slane %v681, 5
      %v724 = vrot.slane %v723, 4
      %v725 = vrot.slane %v275, 5
      %v726 = vsel %vm702, %v724, %v725
      %v727 = vrot.slane %v682, 5
      %v728 = vrot.slane %v727, 4
      %v729 = vrot.slane %v276, 5
      %v730 = vsel %vm702, %v728, %v729
      %v731 = vrot.slane %v683, 5
      %v732 = vrot.slane %v731, 4
      %v733 = vrot.slane %v277, 5
      %v734 = vsel %vm702, %v732, %v733
      %s735 = scalar_lea.vmem %s1, 128
      %v736 = vld [vmem:[%s735] sm:$0xf]
      %v737 = vld [vmem:[%s735 + $0x4] sm:$0xf]
      %v738 = vld [vmem:[%s735 + $0x8] sm:$0xf]
      %v739 = vld [vmem:[%s735 + $0xc] sm:$0xf]
      %v740 = vld [vmem:[%s735 + $0x10] sm:$0xf]
      %v741 = vld [vmem:[%s735 + $0x14] sm:$0xf]
      %v742 = vld [vmem:[%s735 + $0x18] sm:$0xf]
      %v743 = vld [vmem:[%s735 + $0x1c] sm:$0xf]
      %v744 = vld [vmem:[%s735 + $0x20] sm:$0xf]
      %v745 = vld [vmem:[%s735 + $0x24] sm:$0xf]
      %v746 = vld [vmem:[%s735 + $0x28] sm:$0xf]
      %v747 = vld [vmem:[%s735 + $0x2c] sm:$0xf]
      %v748 = vld [vmem:[%s735 + $0x30] sm:$0xf]
      %v749 = vld [vmem:[%s735 + $0x34] sm:$0xf]
      %v750 = vld [vmem:[%s735 + $0x38] sm:$0xf]
      %v751 = vld [vmem:[%s735 + $0x3c] sm:$0xf]
      %v752 = vunpack.c.l.b16 %v706
      %v753 = vunpack.c.l.b16 %v710
      %v754 = vunpack.c.l.b16 %v714
      %v755 = vunpack.c.l.b16 %v718
      %v756 = vunpack.c.l.b16 %v722
      %v757 = vunpack.c.l.b16 %v726
      %v758 = vunpack.c.l.b16 %v730
      %v759 = vunpack.c.l.b16 %v734
      %v760 = vpack.c.b16 %v753, %v752
      %v761 = vpack.c.b16 %v755, %v754
      %v762 = vpack.c.b16 %v757, %v756
      %v763 = vpack.c.b16 %v759, %v758
      %v784 = vunpack.c.l.b16 %v736
      %v785 = vunpack.c.l.b16 %v737
      %v786 = vunpack.c.l.b16 %v738
      %v787 = vunpack.c.l.b16 %v739
      %v788 = vunpack.c.l.b16 %v740
      %v789 = vunpack.c.l.b16 %v741
      %v790 = vunpack.c.l.b16 %v742
      %v791 = vunpack.c.l.b16 %v743
      %v792 = vunpack.c.l.b16 %v744
      %v793 = vunpack.c.l.b16 %v745
      %v794 = vunpack.c.l.b16 %v746
      %v795 = vunpack.c.l.b16 %v747
      %v796 = vunpack.c.l.b16 %v748
      %v797 = vunpack.c.l.b16 %v749
      %v798 = vunpack.c.l.b16 %v750
      %v799 = vunpack.c.l.b16 %v751
      %v800 = vpack.c.b16 %v785, %v784
      %v801 = vpack.c.b16 %v787, %v786
      %v802 = vpack.c.b16 %v789, %v788
      %v803 = vpack.c.b16 %v791, %v790
      %v804 = vpack.c.b16 %v793, %v792
      %v805 = vpack.c.b16 %v795, %v794
      %v806 = vpack.c.b16 %v797, %v796
      %v807 = vpack.c.b16 %v799, %v798
      %816 = vmatprep.subr.bf16.mxu0 0
      %817 = vmatpush1.bf16.msra.mxu0 %v800
      %818 = vmatprep.subr.bf16.mxu0 0
      %819 = vmatpush1.bf16.msra.mxu0 %v801
      %820 = vmatprep.subr.bf16.mxu0 0
      %821 = vmatpush1.bf16.msra.mxu0 %v802
      %822 = vmatprep.subr.bf16.mxu0 0
      %823 = vmatpush1.bf16.msra.mxu0 %v803
      %824 = vmatprep.subr.bf16.mxu0 0
      %825 = vmatpush1.bf16.msra.mxu0 %v804
      %826 = vmatprep.subr.bf16.mxu0 0
      %827 = vmatpush1.bf16.msra.mxu0 %v805
      %828 = vmatprep.subr.bf16.mxu0 0
      %829 = vmatpush1.bf16.msra.mxu0 %v806
      %830 = vmatprep.subr.bf16.mxu0 0
      %831 = vmatpush1.bf16.msra.mxu0 %v807
      %832 = vmatprep.subr.bf16.mxu0 0
      %833 = vmatpush1.bf16.msra.mxu0 0
      %834 = vmatprep.subr.bf16.mxu0 0
      %835 = vmatpush1.bf16.msra.mxu0 0
      %836 = vmatprep.subr.bf16.mxu0 0
      %837 = vmatpush1.bf16.msra.mxu0 0
      %838 = vmatprep.subr.bf16.mxu0 0
      %839 = vmatpush1.bf16.msra.mxu0 0
      %840 = vmatprep.subr.bf16.mxu0 0
      %841 = vmatpush1.bf16.msra.mxu0 0
      %842 = vmatprep.subr.bf16.mxu0 0
      %843 = vmatpush1.bf16.msra.mxu0 0
      %844 = vmatprep.subr.bf16.mxu0 0
      %845 = vmatpush1.bf16.msra.mxu0 0
      %846 = vmatprep.subr.bf16.mxu0 0
      %847 = vmatpush1.bf16.msra.mxu0 0
      %848 = vmatprep.mubr.bf16.mxu0 0
      %849 = vmatmul.mubr.bf16.gmra.mrb[0].mxu0 %v760
      %v850 = vpop.f32.mrb[0].mxu0
      %v851 = vadd.f32 0.0, %v850
      %v852 = vpop.f32.mrb[0].mxu0
      %v853 = vpop.f32.mrb[0].mxu0
      %v854 = vadd.f32 0.0, %v853
      %v855 = vpop.f32.mrb[0].mxu0
      %856 = vmatprep.mubr.bf16.mxu0 0
      %857 = vmatmul.mubr.bf16.gmra.mrb[0].mxu0 %v761
      %v858 = vpop.f32.mrb[0].mxu0
      %v859 = vadd.f32 0.0, %v858
      %v860 = vpop.f32.mrb[0].mxu0
      %v861 = vpop.f32.mrb[0].mxu0
      %v862 = vadd.f32 0.0, %v861
      %v863 = vpop.f32.mrb[0].mxu0
      %864 = vmatprep.mubr.bf16.mxu0 0
      %865 = vmatmul.mubr.bf16.gmra.mrb[0].mxu0 %v762
      %v866 = vpop.f32.mrb[0].mxu0
      %v867 = vadd.f32 0.0, %v866
      %v868 = vpop.f32.mrb[0].mxu0
      %v869 = vpop.f32.mrb[0].mxu0
      %v870 = vadd.f32 0.0, %v869
      %v871 = vpop.f32.mrb[0].mxu0
      %872 = vmatprep.mubr.bf16.mxu0 0
      %873 = vmatmul.mubr.bf16.gmra.mrb[0].mxu0 %v763
      %v874 = vpop.f32.mrb[0].mxu0
      %v875 = vadd.f32 0.0, %v874
      %v876 = vpop.f32.mrb[0].mxu0
      %v877 = vpop.f32.mrb[0].mxu0
      %v878 = vadd.f32 0.0, %v877
      %v879 = vpop.f32.mrb[0].mxu0
      %880 = vdwg.mxu0
      %v881 = vadd.f32 %v646, %v851
      %v882 = vadd.f32 %v649, %v854
      %v883 = vadd.f32 %v654, %v859
      %v884 = vadd.f32 %v657, %v862
      %v885 = vadd.f32 %v662, %v867
      %v886 = vadd.f32 %v665, %v870
      %v887 = vadd.f32 %v670, %v875
      %v888 = vadd.f32 %v673, %v878
      %s889 = scalar_lea.vmem %s234, 8
      %v890 = vld [vmem:[%s889] sm:$0xf]
      %v891 = vld [vmem:[%s889 + $0x8] sm:$0xf]
      %v892 = vld [vmem:[%s889 + $0x10] sm:$0xf]
      %v893 = vld [vmem:[%s889 + $0x18] sm:$0xf]
      %v894 = vld [vmem:[%s889 + $0x20] sm:$0xf]
      %v895 = vld [vmem:[%s889 + $0x28] sm:$0xf]
      %v896 = vld [vmem:[%s889 + $0x30] sm:$0xf]
      %v897 = vld [vmem:[%s889 + $0x38] sm:$0xf]
      %s898 = scalar_lea.vmem %s1, 192
      %v899 = vld [vmem:[%s898] sm:$0xf]
      %v900 = vld [vmem:[%s898 + $0x4] sm:$0xf]
      %v901 = vld [vmem:[%s898 + $0x8] sm:$0xf]
      %v902 = vld [vmem:[%s898 + $0xc] sm:$0xf]
      %v903 = vld [vmem:[%s898 + $0x10] sm:$0xf]
      %v904 = vld [vmem:[%s898 + $0x14] sm:$0xf]
      %v905 = vld [vmem:[%s898 + $0x18] sm:$0xf]
      %v906 = vld [vmem:[%s898 + $0x1c] sm:$0xf]
      %v907 = vld [vmem:[%s898 + $0x20] sm:$0xf]
      %v908 = vld [vmem:[%s898 + $0x24] sm:$0xf]
      %v909 = vld [vmem:[%s898 + $0x28] sm:$0xf]
      %v910 = vld [vmem:[%s898 + $0x2c] sm:$0xf]
      %v911 = vld [vmem:[%s898 + $0x30] sm:$0xf]
      %v912 = vld [vmem:[%s898 + $0x34] sm:$0xf]
      %v913 = vld [vmem:[%s898 + $0x38] sm:$0xf]
      %v914 = vld [vmem:[%s898 + $0x3c] sm:$0xf]
      %v923 = vunpack.c.l.b16 %v890
      %v924 = vunpack.c.l.b16 %v891
      %v925 = vunpack.c.l.b16 %v892
      %v926 = vunpack.c.l.b16 %v893
      %v927 = vunpack.c.l.b16 %v894
      %v928 = vunpack.c.l.b16 %v895
      %v929 = vunpack.c.l.b16 %v896
      %v930 = vunpack.c.l.b16 %v897
      %v931 = vpack.c.b16 %v924, %v923
      %v932 = vpack.c.b16 %v926, %v925
      %v933 = vpack.c.b16 %v928, %v927
      %v934 = vpack.c.b16 %v930, %v929
      %v955 = vunpack.c.l.b16 %v899
      %v956 = vunpack.c.l.b16 %v900
      %v957 = vunpack.c.l.b16 %v901
      %v958 = vunpack.c.l.b16 %v902
      %v959 = vunpack.c.l.b16 %v903
      %v960 = vunpack.c.l.b16 %v904
      %v961 = vunpack.c.l.b16 %v905
      %v962 = vunpack.c.l.b16 %v906
      %v963 = vunpack.c.l.b16 %v907
      %v964 = vunpack.c.l.b16 %v908
      %v965 = vunpack.c.l.b16 %v909
      %v966 = vunpack.c.l.b16 %v910
      %v967 = vunpack.c.l.b16 %v911
      %v968 = vunpack.c.l.b16 %v912
      %v969 = vunpack.c.l.b16 %v913
      %v970 = vunpack.c.l.b16 %v914
      %v971 = vpack.c.b16 %v956, %v955
      %v972 = vpack.c.b16 %v958, %v957
      %v973 = vpack.c.b16 %v960, %v959
      %v974 = vpack.c.b16 %v962, %v961
      %v975 = vpack.c.b16 %v964, %v963
      %v976 = vpack.c.b16 %v966, %v965
      %v977 = vpack.c.b16 %v968, %v967
      %v978 = vpack.c.b16 %v970, %v969
      %987 = vmatprep.subr.bf16.mxu0 0
      %988 = vmatpush1.bf16.msra.mxu0 %v971
      %989 = vmatprep.subr.bf16.mxu0 0
      %990 = vmatpush1.bf16.msra.mxu0 %v972
      %991 = vmatprep.subr.bf16.mxu0 0
      %992 = vmatpush1.bf16.msra.mxu0 %v973
      %993 = vmatprep.subr.bf16.mxu0 0
      %994 = vmatpush1.bf16.msra.mxu0 %v974
      %995 = vmatprep.subr.bf16.mxu0 0
      %996 = vmatpush1.bf16.msra.mxu0 %v975
      %997 = vmatprep.subr.bf16.mxu0 0
      %998 = vmatpush1.bf16.msra.mxu0 %v976
      %999 = vmatprep.subr.bf16.mxu0 0
      %1000 = vmatpush1.bf16.msra.mxu0 %v977
      %1001 = vmatprep.subr.bf16.mxu0 0
      %1002 = vmatpush1.bf16.msra.mxu0 %v978
      %1003 = vmatprep.subr.bf16.mxu0 0
      %1004 = vmatpush1.bf16.msra.mxu0 0
      %1005 = vmatprep.subr.bf16.mxu0 0
      %1006 = vmatpush1.bf16.msra.mxu0 0
      %1007 = vmatprep.subr.bf16.mxu0 0
      %1008 = vmatpush1.bf16.msra.mxu0 0
      %1009 = vmatprep.subr.bf16.mxu0 0
      %1010 = vmatpush1.bf16.msra.mxu0 0
      %1011 = vmatprep.subr.bf16.mxu0 0
      %1012 = vmatpush1.bf16.msra.mxu0 0
      %1013 = vmatprep.subr.bf16.mxu0 0
      %1014 = vmatpush1.bf16.msra.mxu0 0
      %1015 = vmatprep.subr.bf16.mxu0 0
      %1016 = vmatpush1.bf16.msra.mxu0 0
      %1017 = vmatprep.subr.bf16.mxu0 0
      %1018 = vmatpush1.bf16.msra.mxu0 0
      %1019 = vmatprep.mubr.bf16.mxu0 0
      %1020 = vmatmul.mubr.bf16.gmra.mrb[0].mxu0 %v931
      %v1021 = vpop.f32.mrb[0].mxu0
      %v1022 = vadd.f32 0.0, %v1021
      %v1023 = vpop.f32.mrb[0].mxu0
      %v1024 = vpop.f32.mrb[0].mxu0
      %v1025 = vadd.f32 0.0, %v1024
      %v1026 = vpop.f32.mrb[0].mxu0
      %1027 = vmatprep.mubr.bf16.mxu0 0
      %1028 = vmatmul.mubr.bf16.gmra.mrb[0].mxu0 %v932
      %v1029 = vpop.f32.mrb[0].mxu0
      %v1030 = vadd.f32 0.0, %v1029
      %v1031 = vpop.f32.mrb[0].mxu0
      %v1032 = vpop.f32.mrb[0].mxu0
      %v1033 = vadd.f32 0.0, %v1032
      %v1034 = vpop.f32.mrb[0].mxu0
      %1035 = vmatprep.mubr.bf16.mxu0 0
      %1036 = vmatmul.mubr.bf16.gmra.mrb[0].mxu0 %v933
      %v1037 = vpop.f32.mrb[0].mxu0
      %v1038 = vadd.f32 0.0, %v1037
      %v1039 = vpop.f32.mrb[0].mxu0
      %v1040 = vpop.f32.mrb[0].mxu0
      %v1041 = vadd.f32 0.0, %v1040
      %v1042 = vpop.f32.mrb[0].mxu0
      %1043 = vmatprep.mubr.bf16.mxu0 0
      %1044 = vmatmul.mubr.bf16.gmra.mrb[0].mxu0 %v934
      %v1045 = vpop.f32.mrb[0].mxu0
      %v1046 = vadd.f32 0.0, %v1045
      %v1047 = vpop.f32.mrb[0].mxu0
      %v1048 = vpop.f32.mrb[0].mxu0
      %v1049 = vadd.f32 0.0, %v1048
      %v1050 = vpop.f32.mrb[0].mxu0
      %1051 = vdwg.mxu0
      %v1052 = vadd.f32 %v881, %v1022
      %v1053 = vadd.f32 %v882, %v1025
      %v1054 = vadd.f32 %v883, %v1030
      %v1055 = vadd.f32 %v884, %v1033
      %v1056 = vadd.f32 %v885, %v1038
      %v1057 = vadd.f32 %v886, %v1041
      %v1058 = vadd.f32 %v887, %v1046
      %v1059 = vadd.f32 %v888, %v1049
      %v1060 = vld [vmem:[%s889] sm:$0xf]
      %v1061 = vld [vmem:[%s889 + $0x4] sm:$0x1]
      %v1062 = vld [vmem:[%s889 + $0x8] sm:$0xf]
      %v1063 = vld [vmem:[%s889 + $0xc] sm:$0x1]
      %v1064 = vld [vmem:[%s889 + $0x10] sm:$0xf]
      %v1065 = vld [vmem:[%s889 + $0x14] sm:$0x1]
      %v1066 = vld [vmem:[%s889 + $0x18] sm:$0xf]
      %v1067 = vld [vmem:[%s889 + $0x1c] sm:$0x1]
      %v1068 = vld [vmem:[%s889 + $0x20] sm:$0xf]
      %v1069 = vld [vmem:[%s889 + $0x24] sm:$0x1]
      %v1070 = vld [vmem:[%s889 + $0x28] sm:$0xf]
      %v1071 = vld [vmem:[%s889 + $0x2c] sm:$0x1]
      %v1072 = vld [vmem:[%s889 + $0x30] sm:$0xf]
      %v1073 = vld [vmem:[%s889 + $0x34] sm:$0x1]
      %v1074 = vld [vmem:[%s889 + $0x38] sm:$0xf]
      %v1075 = vld [vmem:[%s889 + $0x3c] sm:$0x1]
      %v1077 = vshrl.u32 %v1060, 16
      %v1079 = vrot.slane %v1077, 4
      %v1080 = vshll.u32 %v1060, 16
      %v1082 = vrot.slane %v1080, 5
      %v1083 = vor.u32 %v1079, %v1082
      %v1084 = vrot.slane %v1083, 4
      %v1086 = vshll.u32 %v1061, 16
      %v1088 = vrot.slane %v1086, 5
      %v1089 = vsel %vm280, %v1084, %v1088
      %v1091 = vshrl.u32 %v1062, 16
      %v1093 = vrot.slane %v1091, 4
      %v1094 = vshll.u32 %v1062, 16
      %v1096 = vrot.slane %v1094, 5
      %v1097 = vor.u32 %v1093, %v1096
      %v1098 = vrot.slane %v1097, 4
      %v1100 = vshll.u32 %v1063, 16
      %v1102 = vrot.slane %v1100, 5
      %v1103 = vsel %vm280, %v1098, %v1102
      %v1105 = vshrl.u32 %v1064, 16
      %v1107 = vrot.slane %v1105, 4
      %v1108 = vshll.u32 %v1064, 16
      %v1110 = vrot.slane %v1108, 5
      %v1111 = vor.u32 %v1107, %v1110
      %v1112 = vrot.slane %v1111, 4
      %v1114 = vshll.u32 %v1065, 16
      %v1116 = vrot.slane %v1114, 5
      %v1117 = vsel %vm280, %v1112, %v1116
      %v1119 = vshrl.u32 %v1066, 16
      %v1121 = vrot.slane %v1119, 4
      %v1122 = vshll.u32 %v1066, 16
      %v1124 = vrot.slane %v1122, 5
      %v1125 = vor.u32 %v1121, %v1124
      %v1126 = vrot.slane %v1125, 4
      %v1128 = vshll.u32 %v1067, 16
      %v1130 = vrot.slane %v1128, 5
      %v1131 = vsel %vm280, %v1126, %v1130
      %v1133 = vshrl.u32 %v1068, 16
      %v1135 = vrot.slane %v1133, 4
      %v1136 = vshll.u32 %v1068, 16
      %v1138 = vrot.slane %v1136, 5
      %v1139 = vor.u32 %v1135, %v1138
      %v1140 = vrot.slane %v1139, 4
      %v1142 = vshll.u32 %v1069, 16
      %v1144 = vrot.slane %v1142, 5
      %v1145 = vsel %vm280, %v1140, %v1144
      %v1147 = vshrl.u32 %v1070, 16
      %v1149 = vrot.slane %v1147, 4
      %v1150 = vshll.u32 %v1070, 16
      %v1152 = vrot.slane %v1150, 5
      %v1153 = vor.u32 %v1149, %v1152
      %v1154 = vrot.slane %v1153, 4
      %v1156 = vshll.u32 %v1071, 16
      %v1158 = vrot.slane %v1156, 5
      %v1159 = vsel %vm280, %v1154, %v1158
      %v1161 = vshrl.u32 %v1072, 16
      %v1163 = vrot.slane %v1161, 4
      %v1164 = vshll.u32 %v1072, 16
      %v1166 = vrot.slane %v1164, 5
      %v1167 = vor.u32 %v1163, %v1166
      %v1168 = vrot.slane %v1167, 4
      %v1170 = vshll.u32 %v1073, 16
      %v1172 = vrot.slane %v1170, 5
      %v1173 = vsel %vm280, %v1168, %v1172
      %v1175 = vshrl.u32 %v1074, 16
      %v1177 = vrot.slane %v1175, 4
      %v1178 = vshll.u32 %v1074, 16
      %v1180 = vrot.slane %v1178, 5
      %v1181 = vor.u32 %v1177, %v1180
      %v1182 = vrot.slane %v1181, 4
      %v1184 = vshll.u32 %v1075, 16
      %v1186 = vrot.slane %v1184, 5
      %v1187 = vsel %vm280, %v1182, %v1186
      %s1188 = scalar_lea.vmem %s1, 256
      %v1189 = vld [vmem:[%s1188] sm:$0xf]
      %v1190 = vld [vmem:[%s1188 + $0x4] sm:$0xf]
      %v1191 = vld [vmem:[%s1188 + $0x8] sm:$0xf]
      %v1192 = vld [vmem:[%s1188 + $0xc] sm:$0xf]
      %v1193 = vld [vmem:[%s1188 + $0x10] sm:$0xf]
      %v1194 = vld [vmem:[%s1188 + $0x14] sm:$0xf]
      %v1195 = vld [vmem:[%s1188 + $0x18] sm:$0xf]
      %v1196 = vld [vmem:[%s1188 + $0x1c] sm:$0xf]
      %v1197 = vld [vmem:[%s1188 + $0x20] sm:$0xf]
      %v1198 = vld [vmem:[%s1188 + $0x24] sm:$0xf]
      %v1199 = vld [vmem:[%s1188 + $0x28] sm:$0xf]
      %v1200 = vld [vmem:[%s1188 + $0x2c] sm:$0xf]
      %v1201 = vld [vmem:[%s1188 + $0x30] sm:$0xf]
      %v1202 = vld [vmem:[%s1188 + $0x34] sm:$0xf]
      %v1203 = vld [vmem:[%s1188 + $0x38] sm:$0xf]
      %v1204 = vld [vmem:[%s1188 + $0x3c] sm:$0xf]
      %v1205 = vunpack.c.l.b16 %v1089
      %v1206 = vunpack.c.l.b16 %v1103
      %v1207 = vunpack.c.l.b16 %v1117
      %v1208 = vunpack.c.l.b16 %v1131
      %v1209 = vunpack.c.l.b16 %v1145
      %v1210 = vunpack.c.l.b16 %v1159
      %v1211 = vunpack.c.l.b16 %v1173
      %v1212 = vunpack.c.l.b16 %v1187
      %v1213 = vpack.c.b16 %v1206, %v1205
      %v1214 = vpack.c.b16 %v1208, %v1207
      %v1215 = vpack.c.b16 %v1210, %v1209
      %v1216 = vpack.c.b16 %v1212, %v1211
      %v1237 = vunpack.c.l.b16 %v1189
      %v1238 = vunpack.c.l.b16 %v1190
      %v1239 = vunpack.c.l.b16 %v1191
      %v1240 = vunpack.c.l.b16 %v1192
      %v1241 = vunpack.c.l.b16 %v1193
      %v1242 = vunpack.c.l.b16 %v1194
      %v1243 = vunpack.c.l.b16 %v1195
      %v1244 = vunpack.c.l.b16 %v1196
      %v1245 = vunpack.c.l.b16 %v1197
      %v1246 = vunpack.c.l.b16 %v1198
      %v1247 = vunpack.c.l.b16 %v1199
      %v1248 = vunpack.c.l.b16 %v1200
      %v1249 = vunpack.c.l.b16 %v1201
      %v1250 = vunpack.c.l.b16 %v1202
      %v1251 = vunpack.c.l.b16 %v1203
      %v1252 = vunpack.c.l.b16 %v1204
      %v1253 = vpack.c.b16 %v1238, %v1237
      %v1254 = vpack.c.b16 %v1240, %v1239
      %v1255 = vpack.c.b16 %v1242, %v1241
      %v1256 = vpack.c.b16 %v1244, %v1243
      %v1257 = vpack.c.b16 %v1246, %v1245
      %v1258 = vpack.c.b16 %v1248, %v1247
      %v1259 = vpack.c.b16 %v1250, %v1249
      %v1260 = vpack.c.b16 %v1252, %v1251
      %1269 = vmatprep.subr.bf16.mxu0 0
      %1270 = vmatpush1.bf16.msra.mxu0 %v1253
      %1271 = vmatprep.subr.bf16.mxu0 0
      %1272 = vmatpush1.bf16.msra.mxu0 %v1254
      %1273 = vmatprep.subr.bf16.mxu0 0
      %1274 = vmatpush1.bf16.msra.mxu0 %v1255
      %1275 = vmatprep.subr.bf16.mxu0 0
      %1276 = vmatpush1.bf16.msra.mxu0 %v1256
      %1277 = vmatprep.subr.bf16.mxu0 0
      %1278 = vmatpush1.bf16.msra.mxu0 %v1257
      %1279 = vmatprep.subr.bf16.mxu0 0
      %1280 = vmatpush1.bf16.msra.mxu0 %v1258
      %1281 = vmatprep.subr.bf16.mxu0 0
      %1282 = vmatpush1.bf16.msra.mxu0 %v1259
      %1283 = vmatprep.subr.bf16.mxu0 0
      %1284 = vmatpush1.bf16.msra.mxu0 %v1260
      %1285 = vmatprep.subr.bf16.mxu0 0
      %1286 = vmatpush1.bf16.msra.mxu0 0
      %1287 = vmatprep.subr.bf16.mxu0 0
      %1288 = vmatpush1.bf16.msra.mxu0 0
      %1289 = vmatprep.subr.bf16.mxu0 0
      %1290 = vmatpush1.bf16.msra.mxu0 0
      %1291 = vmatprep.subr.bf16.mxu0 0
      %1292 = vmatpush1.bf16.msra.mxu0 0
      %1293 = vmatprep.subr.bf16.mxu0 0
      %1294 = vmatpush1.bf16.msra.mxu0 0
      %1295 = vmatprep.subr.bf16.mxu0 0
      %1296 = vmatpush1.bf16.msra.mxu0 0
      %1297 = vmatprep.subr.bf16.mxu0 0
      %1298 = vmatpush1.bf16.msra.mxu0 0
      %1299 = vmatprep.subr.bf16.mxu0 0
      %1300 = vmatpush1.bf16.msra.mxu0 0
      %1301 = vmatprep.mubr.bf16.mxu0 0
      %1302 = vmatmul.mubr.bf16.gmra.mrb[0].mxu0 %v1213
      %v1303 = vpop.f32.mrb[0].mxu0
      %v1304 = vadd.f32 0.0, %v1303
      %v1305 = vpop.f32.mrb[0].mxu0
      %v1306 = vpop.f32.mrb[0].mxu0
      %v1307 = vadd.f32 0.0, %v1306
      %v1308 = vpop.f32.mrb[0].mxu0
      %1309 = vmatprep.mubr.bf16.mxu0 0
      %1310 = vmatmul.mubr.bf16.gmra.mrb[0].mxu0 %v1214
      %v1311 = vpop.f32.mrb[0].mxu0
      %v1312 = vadd.f32 0.0, %v1311
      %v1313 = vpop.f32.mrb[0].mxu0
      %v1314 = vpop.f32.mrb[0].mxu0
      %v1315 = vadd.f32 0.0, %v1314
      %v1316 = vpop.f32.mrb[0].mxu0
      %1317 = vmatprep.mubr.bf16.mxu0 0
      %1318 = vmatmul.mubr.bf16.gmra.mrb[0].mxu0 %v1215
      %v1319 = vpop.f32.mrb[0].mxu0
      %v1320 = vadd.f32 0.0, %v1319
      %v1321 = vpop.f32.mrb[0].mxu0
      %v1322 = vpop.f32.mrb[0].mxu0
      %v1323 = vadd.f32 0.0, %v1322
      %v1324 = vpop.f32.mrb[0].mxu0
      %1325 = vmatprep.mubr.bf16.mxu0 0
      %1326 = vmatmul.mubr.bf16.gmra.mrb[0].mxu0 %v1216
      %v1327 = vpop.f32.mrb[0].mxu0
      %v1328 = vadd.f32 0.0, %v1327
      %v1329 = vpop.f32.mrb[0].mxu0
      %v1330 = vpop.f32.mrb[0].mxu0
      %v1331 = vadd.f32 0.0, %v1330
      %v1332 = vpop.f32.mrb[0].mxu0
      %1333 = vdwg.mxu0
      %v1334 = vadd.f32 %v1052, %v1304
      %v1335 = vadd.f32 %v1053, %v1307
      %v1336 = vadd.f32 %v1054, %v1312
      %v1337 = vadd.f32 %v1055, %v1315
      %v1338 = vadd.f32 %v1056, %v1320
      %v1339 = vadd.f32 %v1057, %v1323
      %v1340 = vadd.f32 %v1058, %v1328
      %v1341 = vadd.f32 %v1059, %v1331
      %v1342 = vld [vmem:[%s889] sm:$0xe]
      %v1343 = vld [vmem:[%s889 + $0x8] sm:$0xe]
      %v1344 = vld [vmem:[%s889 + $0x10] sm:$0xe]
      %v1345 = vld [vmem:[%s889 + $0x18] sm:$0xe]
      %v1346 = vld [vmem:[%s889 + $0x20] sm:$0xe]
      %v1347 = vld [vmem:[%s889 + $0x28] sm:$0xe]
      %v1348 = vld [vmem:[%s889 + $0x30] sm:$0xe]
      %v1349 = vld [vmem:[%s889 + $0x38] sm:$0xe]
      %v1366 = vrot.slane %v1342, 5
      %v1367 = vrot.slane %v1366, 4
      %v1368 = vrot.slane %v1061, 5
      %v1369 = vsel %vm702, %v1367, %v1368
      %v1370 = vrot.slane %v1343, 5
      %v1371 = vrot.slane %v1370, 4
      %v1372 = vrot.slane %v1063, 5
      %v1373 = vsel %vm702, %v1371, %v1372
      %v1374 = vrot.slane %v1344, 5
      %v1375 = vrot.slane %v1374, 4
      %v1376 = vrot.slane %v1065, 5
      %v1377 = vsel %vm702, %v1375, %v1376
      %v1378 = vrot.slane %v1345, 5
      %v1379 = vrot.slane %v1378, 4
      %v1380 = vrot.slane %v1067, 5
      %v1381 = vsel %vm702, %v1379, %v1380
      %v1382 = vrot.slane %v1346, 5
      %v1383 = vrot.slane %v1382, 4
      %v1384 = vrot.slane %v1069, 5
      %v1385 = vsel %vm702, %v1383, %v1384
      %v1386 = vrot.slane %v1347, 5
      %v1387 = vrot.slane %v1386, 4
      %v1388 = vrot.slane %v1071, 5
      %v1389 = vsel %vm702, %v1387, %v1388
      %v1390 = vrot.slane %v1348, 5
      %v1391 = vrot.slane %v1390, 4
      %v1392 = vrot.slane %v1073, 5
      %v1393 = vsel %vm702, %v1391, %v1392
      %v1394 = vrot.slane %v1349, 5
      %v1395 = vrot.slane %v1394, 4
      %v1396 = vrot.slane %v1075, 5
      %v1397 = vsel %vm702, %v1395, %v1396
      %s1398 = scalar_lea.vmem %s1, 320
      %v1399 = vld [vmem:[%s1398] sm:$0xf]
      %v1400 = vld [vmem:[%s1398 + $0x4] sm:$0xf]
      %v1401 = vld [vmem:[%s1398 + $0x8] sm:$0xf]
      %v1402 = vld [vmem:[%s1398 + $0xc] sm:$0xf]
      %v1403 = vld [vmem:[%s1398 + $0x10] sm:$0xf]
      %v1404 = vld [vmem:[%s1398 + $0x14] sm:$0xf]
      %v1405 = vld [vmem:[%s1398 + $0x18] sm:$0xf]
      %v1406 = vld [vmem:[%s1398 + $0x1c] sm:$0xf]
      %v1407 = vld [vmem:[%s1398 + $0x20] sm:$0xf]
      %v1408 = vld [vmem:[%s1398 + $0x24] sm:$0xf]
      %v1409 = vld [vmem:[%s1398 + $0x28] sm:$0xf]
      %v1410 = vld [vmem:[%s1398 + $0x2c] sm:$0xf]
      %v1411 = vld [vmem:[%s1398 + $0x30] sm:$0xf]
      %v1412 = vld [vmem:[%s1398 + $0x34] sm:$0xf]
      %v1413 = vld [vmem:[%s1398 + $0x38] sm:$0xf]
      %v1414 = vld [vmem:[%s1398 + $0x3c] sm:$0xf]
      %v1415 = vunpack.c.l.b16 %v1369
      %v1416 = vunpack.c.l.b16 %v1373
      %v1417 = vunpack.c.l.b16 %v1377
      %v1418 = vunpack.c.l.b16 %v1381
      %v1419 = vunpack.c.l.b16 %v1385
      %v1420 = vunpack.c.l.b16 %v1389
      %v1421 = vunpack.c.l.b16 %v1393
      %v1422 = vunpack.c.l.b16 %v1397
      %v1423 = vpack.c.b16 %v1416, %v1415
      %v1424 = vpack.c.b16 %v1418, %v1417
      %v1425 = vpack.c.b16 %v1420, %v1419
      %v1426 = vpack.c.b16 %v1422, %v1421
      %v1447 = vunpack.c.l.b16 %v1399
      %v1448 = vunpack.c.l.b16 %v1400
      %v1449 = vunpack.c.l.b16 %v1401
      %v1450 = vunpack.c.l.b16 %v1402
      %v1451 = vunpack.c.l.b16 %v1403
      %v1452 = vunpack.c.l.b16 %v1404
      %v1453 = vunpack.c.l.b16 %v1405
      %v1454 = vunpack.c.l.b16 %v1406
      %v1455 = vunpack.c.l.b16 %v1407
      %v1456 = vunpack.c.l.b16 %v1408
      %v1457 = vunpack.c.l.b16 %v1409
      %v1458 = vunpack.c.l.b16 %v1410
      %v1459 = vunpack.c.l.b16 %v1411
      %v1460 = vunpack.c.l.b16 %v1412
      %v1461 = vunpack.c.l.b16 %v1413
      %v1462 = vunpack.c.l.b16 %v1414
      %v1463 = vpack.c.b16 %v1448, %v1447
      %v1464 = vpack.c.b16 %v1450, %v1449
      %v1465 = vpack.c.b16 %v1452, %v1451
      %v1466 = vpack.c.b16 %v1454, %v1453
      %v1467 = vpack.c.b16 %v1456, %v1455
      %v1468 = vpack.c.b16 %v1458, %v1457
      %v1469 = vpack.c.b16 %v1460, %v1459
      %v1470 = vpack.c.b16 %v1462, %v1461
      %1479 = vmatprep.subr.bf16.mxu0 0
      %1480 = vmatpush1.bf16.msra.mxu0 %v1463
      %1481 = vmatprep.subr.bf16.mxu0 0
      %1482 = vmatpush1.bf16.msra.mxu0 %v1464
      %1483 = vmatprep.subr.bf16.mxu0 0
      %1484 = vmatpush1.bf16.msra.mxu0 %v1465
      %1485 = vmatprep.subr.bf16.mxu0 0
      %1486 = vmatpush1.bf16.msra.mxu0 %v1466
      %1487 = vmatprep.subr.bf16.mxu0 0
      %1488 = vmatpush1.bf16.msra.mxu0 %v1467
      %1489 = vmatprep.subr.bf16.mxu0 0
      %1490 = vmatpush1.bf16.msra.mxu0 %v1468
      %1491 = vmatprep.subr.bf16.mxu0 0
      %1492 = vmatpush1.bf16.msra.mxu0 %v1469
      %1493 = vmatprep.subr.bf16.mxu0 0
      %1494 = vmatpush1.bf16.msra.mxu0 %v1470
      %1495 = vmatprep.subr.bf16.mxu0 0
      %1496 = vmatpush1.bf16.msra.mxu0 0
      %1497 = vmatprep.subr.bf16.mxu0 0
      %1498 = vmatpush1.bf16.msra.mxu0 0
      %1499 = vmatprep.subr.bf16.mxu0 0
      %1500 = vmatpush1.bf16.msra.mxu0 0
      %1501 = vmatprep.subr.bf16.mxu0 0
      %1502 = vmatpush1.bf16.msra.mxu0 0
      %1503 = vmatprep.subr.bf16.mxu0 0
      %1504 = vmatpush1.bf16.msra.mxu0 0
      %1505 = vmatprep.subr.bf16.mxu0 0
      %1506 = vmatpush1.bf16.msra.mxu0 0
      %1507 = vmatprep.subr.bf16.mxu0 0
      %1508 = vmatpush1.bf16.msra.mxu0 0
      %1509 = vmatprep.subr.bf16.mxu0 0
      %1510 = vmatpush1.bf16.msra.mxu0 0
      %1511 = vmatprep.mubr.bf16.mxu0 0
      %1512 = vmatmul.mubr.bf16.gmra.mrb[0].mxu0 %v1423
      %v1513 = vpop.f32.mrb[0].mxu0
      %v1514 = vadd.f32 0.0, %v1513
      %v1515 = vpop.f32.mrb[0].mxu0
      %v1516 = vpop.f32.mrb[0].mxu0
      %v1517 = vadd.f32 0.0, %v1516
      %v1518 = vpop.f32.mrb[0].mxu0
      %1519 = vmatprep.mubr.bf16.mxu0 0
      %1520 = vmatmul.mubr.bf16.gmra.mrb[0].mxu0 %v1424
      %v1521 = vpop.f32.mrb[0].mxu0
      %v1522 = vadd.f32 0.0, %v1521
      %v1523 = vpop.f32.mrb[0].mxu0
      %v1524 = vpop.f32.mrb[0].mxu0
      %v1525 = vadd.f32 0.0, %v1524
      %v1526 = vpop.f32.mrb[0].mxu0
      %1527 = vmatprep.mubr.bf16.mxu0 0
      %1528 = vmatmul.mubr.bf16.gmra.mrb[0].mxu0 %v1425
      %v1529 = vpop.f32.mrb[0].mxu0
      %v1530 = vadd.f32 0.0, %v1529
      %v1531 = vpop.f32.mrb[0].mxu0
      %v1532 = vpop.f32.mrb[0].mxu0
      %v1533 = vadd.f32 0.0, %v1532
      %v1534 = vpop.f32.mrb[0].mxu0
      %1535 = vmatprep.mubr.bf16.mxu0 0
      %1536 = vmatmul.mubr.bf16.gmra.mrb[0].mxu0 %v1426
      %v1537 = vpop.f32.mrb[0].mxu0
      %v1538 = vadd.f32 0.0, %v1537
      %v1539 = vpop.f32.mrb[0].mxu0
      %v1540 = vpop.f32.mrb[0].mxu0
      %v1541 = vadd.f32 0.0, %v1540
      %v1542 = vpop.f32.mrb[0].mxu0
      %1543 = vdwg.mxu0
      %v1544 = vadd.f32 %v1334, %v1514
      %v1545 = vadd.f32 %v1335, %v1517
      %v1546 = vadd.f32 %v1336, %v1522
      %v1547 = vadd.f32 %v1337, %v1525
      %v1548 = vadd.f32 %v1338, %v1530
      %v1549 = vadd.f32 %v1339, %v1533
      %v1550 = vadd.f32 %v1340, %v1538
      %v1551 = vadd.f32 %v1341, %v1541
      %s1552 = scalar_lea.vmem %s234, 16
      %v1553 = vld [vmem:[%s1552] sm:$0xf]
      %v1554 = vld [vmem:[%s1552 + $0x8] sm:$0xf]
      %v1555 = vld [vmem:[%s1552 + $0x10] sm:$0xf]
      %v1556 = vld [vmem:[%s1552 + $0x18] sm:$0xf]
      %v1557 = vld [vmem:[%s1552 + $0x20] sm:$0xf]
      %v1558 = vld [vmem:[%s1552 + $0x28] sm:$0xf]
      %v1559 = vld [vmem:[%s1552 + $0x30] sm:$0xf]
      %v1560 = vld [vmem:[%s1552 + $0x38] sm:$0xf]
      %s1561 = scalar_lea.vmem %s1, 384
      %v1562 = vld [vmem:[%s1561] sm:$0xf]
      %v1563 = vld [vmem:[%s1561 + $0x4] sm:$0xf]
      %v1564 = vld [vmem:[%s1561 + $0x8] sm:$0xf]
      %v1565 = vld [vmem:[%s1561 + $0xc] sm:$0xf]
      %v1566 = vld [vmem:[%s1561 + $0x10] sm:$0xf]
      %v1567 = vld [vmem:[%s1561 + $0x14] sm:$0xf]
      %v1568 = vld [vmem:[%s1561 + $0x18] sm:$0xf]
      %v1569 = vld [vmem:[%s1561 + $0x1c] sm:$0xf]
      %v1570 = vld [vmem:[%s1561 + $0x20] sm:$0xf]
      %v1571 = vld [vmem:[%s1561 + $0x24] sm:$0xf]
      %v1572 = vld [vmem:[%s1561 + $0x28] sm:$0xf]
      %v1573 = vld [vmem:[%s1561 + $0x2c] sm:$0xf]
      %v1574 = vld [vmem:[%s1561 + $0x30] sm:$0xf]
      %v1575 = vld [vmem:[%s1561 + $0x34] sm:$0xf]
      %v1576 = vld [vmem:[%s1561 + $0x38] sm:$0xf]
      %v1577 = vld [vmem:[%s1561 + $0x3c] sm:$0xf]
      %v1586 = vunpack.c.l.b16 %v1553
      %v1587 = vunpack.c.l.b16 %v1554
      %v1588 = vunpack.c.l.b16 %v1555
      %v1589 = vunpack.c.l.b16 %v1556
      %v1590 = vunpack.c.l.b16 %v1557
      %v1591 = vunpack.c.l.b16 %v1558
      %v1592 = vunpack.c.l.b16 %v1559
      %v1593 = vunpack.c.l.b16 %v1560
      %v1594 = vpack.c.b16 %v1587, %v1586
      %v1595 = vpack.c.b16 %v1589, %v1588
      %v1596 = vpack.c.b16 %v1591, %v1590
      %v1597 = vpack.c.b16 %v1593, %v1592
      %v1618 = vunpack.c.l.b16 %v1562
      %v1619 = vunpack.c.l.b16 %v1563
      %v1620 = vunpack.c.l.b16 %v1564
      %v1621 = vunpack.c.l.b16 %v1565
      %v1622 = vunpack.c.l.b16 %v1566
      %v1623 = vunpack.c.l.b16 %v1567
      %v1624 = vunpack.c.l.b16 %v1568
      %v1625 = vunpack.c.l.b16 %v1569
      %v1626 = vunpack.c.l.b16 %v1570
      %v1627 = vunpack.c.l.b16 %v1571
      %v1628 = vunpack.c.l.b16 %v1572
      %v1629 = vunpack.c.l.b16 %v1573
      %v1630 = vunpack.c.l.b16 %v1574
      %v1631 = vunpack.c.l.b16 %v1575
      %v1632 = vunpack.c.l.b16 %v1576
      %v1633 = vunpack.c.l.b16 %v1577
      %v1634 = vpack.c.b16 %v1619, %v1618
      %v1635 = vpack.c.b16 %v1621, %v1620
      %v1636 = vpack.c.b16 %v1623, %v1622
      %v1637 = vpack.c.b16 %v1625, %v1624
      %v1638 = vpack.c.b16 %v1627, %v1626
      %v1639 = vpack.c.b16 %v1629, %v1628
      %v1640 = vpack.c.b16 %v1631, %v1630
      %v1641 = vpack.c.b16 %v1633, %v1632
      %1650 = vmatprep.subr.bf16.mxu0 0
      %1651 = vmatpush1.bf16.msra.mxu0 %v1634
      %1652 = vmatprep.subr.bf16.mxu0 0
      %1653 = vmatpush1.bf16.msra.mxu0 %v1635
      %1654 = vmatprep.subr.bf16.mxu0 0
      %1655 = vmatpush1.bf16.msra.mxu0 %v1636
      %1656 = vmatprep.subr.bf16.mxu0 0
      %1657 = vmatpush1.bf16.msra.mxu0 %v1637
      %1658 = vmatprep.subr.bf16.mxu0 0
      %1659 = vmatpush1.bf16.msra.mxu0 %v1638
      %1660 = vmatprep.subr.bf16.mxu0 0
      %1661 = vmatpush1.bf16.msra.mxu0 %v1639
      %1662 = vmatprep.subr.bf16.mxu0 0
      %1663 = vmatpush1.bf16.msra.mxu0 %v1640
      %1664 = vmatprep.subr.bf16.mxu0 0
      %1665 = vmatpush1.bf16.msra.mxu0 %v1641
      %1666 = vmatprep.subr.bf16.mxu0 0
      %1667 = vmatpush1.bf16.msra.mxu0 0
      %1668 = vmatprep.subr.bf16.mxu0 0
      %1669 = vmatpush1.bf16.msra.mxu0 0
      %1670 = vmatprep.subr.bf16.mxu0 0
      %1671 = vmatpush1.bf16.msra.mxu0 0
      %1672 = vmatprep.subr.bf16.mxu0 0
      %1673 = vmatpush1.bf16.msra.mxu0 0
      %1674 = vmatprep.subr.bf16.mxu0 0
      %1675 = vmatpush1.bf16.msra.mxu0 0
      %1676 = vmatprep.subr.bf16.mxu0 0
      %1677 = vmatpush1.bf16.msra.mxu0 0
      %1678 = vmatprep.subr.bf16.mxu0 0
      %1679 = vmatpush1.bf16.msra.mxu0 0
      %1680 = vmatprep.subr.bf16.mxu0 0
      %1681 = vmatpush1.bf16.msra.mxu0 0
      %1682 = vmatprep.mubr.bf16.mxu0 0
      %1683 = vmatmul.mubr.bf16.gmra.mrb[0].mxu0 %v1594
      %v1684 = vpop.f32.mrb[0].mxu0
      %v1685 = vadd.f32 0.0, %v1684
      %v1686 = vpop.f32.mrb[0].mxu0
      %v1687 = vpop.f32.mrb[0].mxu0
      %v1688 = vadd.f32 0.0, %v1687
      %v1689 = vpop.f32.mrb[0].mxu0
      %1690 = vmatprep.mubr.bf16.mxu0 0
      %1691 = vmatmul.mubr.bf16.gmra.mrb[0].mxu0 %v1595
      %v1692 = vpop.f32.mrb[0].mxu0
      %v1693 = vadd.f32 0.0, %v1692
      %v1694 = vpop.f32.mrb[0].mxu0
      %v1695 = vpop.f32.mrb[0].mxu0
      %v1696 = vadd.f32 0.0, %v1695
      %v1697 = vpop.f32.mrb[0].mxu0
      %1698 = vmatprep.mubr.bf16.mxu0 0
      %1699 = vmatmul.mubr.bf16.gmra.mrb[0].mxu0 %v1596
      %v1700 = vpop.f32.mrb[0].mxu0
      %v1701 = vadd.f32 0.0, %v1700
      %v1702 = vpop.f32.mrb[0].mxu0
      %v1703 = vpop.f32.mrb[0].mxu0
      %v1704 = vadd.f32 0.0, %v1703
      %v1705 = vpop.f32.mrb[0].mxu0
      %1706 = vmatprep.mubr.bf16.mxu0 0
      %1707 = vmatmul.mubr.bf16.gmra.mrb[0].mxu0 %v1597
      %v1708 = vpop.f32.mrb[0].mxu0
      %v1709 = vadd.f32 0.0, %v1708
      %v1710 = vpop.f32.mrb[0].mxu0
      %v1711 = vpop.f32.mrb[0].mxu0
      %v1712 = vadd.f32 0.0, %v1711
      %v1713 = vpop.f32.mrb[0].mxu0
      %1714 = vdwg.mxu0
      %v1715 = vadd.f32 %v1544, %v1685
      %v1716 = vadd.f32 %v1545, %v1688
      %v1717 = vadd.f32 %v1546, %v1693
      %v1718 = vadd.f32 %v1547, %v1696
      %v1719 = vadd.f32 %v1548, %v1701
      %v1720 = vadd.f32 %v1549, %v1704
      %v1721 = vadd.f32 %v1550, %v1709
      %v1722 = vadd.f32 %v1551, %v1712
      %v1723 = vld [vmem:[%s1552] sm:$0xf]
      %v1724 = vld [vmem:[%s1552 + $0x4] sm:$0x1]
      %v1725 = vld [vmem:[%s1552 + $0x8] sm:$0xf]
      %v1726 = vld [vmem:[%s1552 + $0xc] sm:$0x1]
      %v1727 = vld [vmem:[%s1552 + $0x10] sm:$0xf]
      %v1728 = vld [vmem:[%s1552 + $0x14] sm:$0x1]
      %v1729 = vld [vmem:[%s1552 + $0x18] sm:$0xf]
      %v1730 = vld [vmem:[%s1552 + $0x1c] sm:$0x1]
      %v1731 = vld [vmem:[%s1552 + $0x20] sm:$0xf]
      %v1732 = vld [vmem:[%s1552 + $0x24] sm:$0x1]
      %v1733 = vld [vmem:[%s1552 + $0x28] sm:$0xf]
      %v1734 = vld [vmem:[%s1552 + $0x2c] sm:$0x1]
      %v1735 = vld [vmem:[%s1552 + $0x30] sm:$0xf]
      %v1736 = vld [vmem:[%s1552 + $0x34] sm:$0x1]
      %v1737 = vld [vmem:[%s1552 + $0x38] sm:$0xf]
      %v1738 = vld [vmem:[%s1552 + $0x3c] sm:$0x1]
      %v1740 = vshrl.u32 %v1723, 16
      %v1742 = vrot.slane %v1740, 4
      %v1743 = vshll.u32 %v1723, 16
      %v1745 = vrot.slane %v1743, 5
      %v1746 = vor.u32 %v1742, %v1745
      %v1747 = vrot.slane %v1746, 4
      %v1749 = vshll.u32 %v1724, 16
      %v1751 = vrot.slane %v1749, 5
      %v1752 = vsel %vm280, %v1747, %v1751
      %v1754 = vshrl.u32 %v1725, 16
      %v1756 = vrot.slane %v1754, 4
      %v1757 = vshll.u32 %v1725, 16
      %v1759 = vrot.slane %v1757, 5
      %v1760 = vor.u32 %v1756, %v1759
      %v1761 = vrot.slane %v1760, 4
      %v1763 = vshll.u32 %v1726, 16
      %v1765 = vrot.slane %v1763, 5
      %v1766 = vsel %vm280, %v1761, %v1765
      %v1768 = vshrl.u32 %v1727, 16
      %v1770 = vrot.slane %v1768, 4
      %v1771 = vshll.u32 %v1727, 16
      %v1773 = vrot.slane %v1771, 5
      %v1774 = vor.u32 %v1770, %v1773
      %v1775 = vrot.slane %v1774, 4
      %v1777 = vshll.u32 %v1728, 16
      %v1779 = vrot.slane %v1777, 5
      %v1780 = vsel %vm280, %v1775, %v1779
      %v1782 = vshrl.u32 %v1729, 16
      %v1784 = vrot.slane %v1782, 4
      %v1785 = vshll.u32 %v1729, 16
      %v1787 = vrot.slane %v1785, 5
      %v1788 = vor.u32 %v1784, %v1787
      %v1789 = vrot.slane %v1788, 4
      %v1791 = vshll.u32 %v1730, 16
      %v1793 = vrot.slane %v1791, 5
      %v1794 = vsel %vm280, %v1789, %v1793
      %v1796 = vshrl.u32 %v1731, 16
      %v1798 = vrot.slane %v1796, 4
      %v1799 = vshll.u32 %v1731, 16
      %v1801 = vrot.slane %v1799, 5
      %v1802 = vor.u32 %v1798, %v1801
      %v1803 = vrot.slane %v1802, 4
      %v1805 = vshll.u32 %v1732, 16
      %v1807 = vrot.slane %v1805, 5
      %v1808 = vsel %vm280, %v1803, %v1807
      %v1810 = vshrl.u32 %v1733, 16
      %v1812 = vrot.slane %v1810, 4
      %v1813 = vshll.u32 %v1733, 16
      %v1815 = vrot.slane %v1813, 5
      %v1816 = vor.u32 %v1812, %v1815
      %v1817 = vrot.slane %v1816, 4
      %v1819 = vshll.u32 %v1734, 16
      %v1821 = vrot.slane %v1819, 5
      %v1822 = vsel %vm280, %v1817, %v1821
      %v1824 = vshrl.u32 %v1735, 16
      %v1826 = vrot.slane %v1824, 4
      %v1827 = vshll.u32 %v1735, 16
      %v1829 = vrot.slane %v1827, 5
      %v1830 = vor.u32 %v1826, %v1829
      %v1831 = vrot.slane %v1830, 4
      %v1833 = vshll.u32 %v1736, 16
      %v1835 = vrot.slane %v1833, 5
      %v1836 = vsel %vm280, %v1831, %v1835
      %v1838 = vshrl.u32 %v1737, 16
      %v1840 = vrot.slane %v1838, 4
      %v1841 = vshll.u32 %v1737, 16
      %v1843 = vrot.slane %v1841, 5
      %v1844 = vor.u32 %v1840, %v1843
      %v1845 = vrot.slane %v1844, 4
      %v1847 = vshll.u32 %v1738, 16
      %v1849 = vrot.slane %v1847, 5
      %v1850 = vsel %vm280, %v1845, %v1849
      %s1851 = scalar_lea.vmem %s1, 448
      %v1852 = vld [vmem:[%s1851] sm:$0xf]
      %v1853 = vld [vmem:[%s1851 + $0x4] sm:$0xf]
      %v1854 = vld [vmem:[%s1851 + $0x8] sm:$0xf]
      %v1855 = vld [vmem:[%s1851 + $0xc] sm:$0xf]
      %v1856 = vld [vmem:[%s1851 + $0x10] sm:$0xf]
      %v1857 = vld [vmem:[%s1851 + $0x14] sm:$0xf]
      %v1858 = vld [vmem:[%s1851 + $0x18] sm:$0xf]
      %v1859 = vld [vmem:[%s1851 + $0x1c] sm:$0xf]
      %v1860 = vld [vmem:[%s1851 + $0x20] sm:$0xf]
      %v1861 = vld [vmem:[%s1851 + $0x24] sm:$0xf]
      %v1862 = vld [vmem:[%s1851 + $0x28] sm:$0xf]
      %v1863 = vld [vmem:[%s1851 + $0x2c] sm:$0xf]
      %v1864 = vld [vmem:[%s1851 + $0x30] sm:$0xf]
      %v1865 = vld [vmem:[%s1851 + $0x34] sm:$0xf]
      %v1866 = vld [vmem:[%s1851 + $0x38] sm:$0xf]
      %v1867 = vld [vmem:[%s1851 + $0x3c] sm:$0xf]
      %v1868 = vunpack.c.l.b16 %v1752
      %v1869 = vunpack.c.l.b16 %v1766
      %v1870 = vunpack.c.l.b16 %v1780
      %v1871 = vunpack.c.l.b16 %v1794
      %v1872 = vunpack.c.l.b16 %v1808
      %v1873 = vunpack.c.l.b16 %v1822
      %v1874 = vunpack.c.l.b16 %v1836
      %v1875 = vunpack.c.l.b16 %v1850
      %v1876 = vpack.c.b16 %v1869, %v1868
      %v1877 = vpack.c.b16 %v1871, %v1870
      %v1878 = vpack.c.b16 %v1873, %v1872
      %v1879 = vpack.c.b16 %v1875, %v1874
      %v1900 = vunpack.c.l.b16 %v1852
      %v1901 = vunpack.c.l.b16 %v1853
      %v1902 = vunpack.c.l.b16 %v1854
      %v1903 = vunpack.c.l.b16 %v1855
      %v1904 = vunpack.c.l.b16 %v1856
      %v1905 = vunpack.c.l.b16 %v1857
      %v1906 = vunpack.c.l.b16 %v1858
      %v1907 = vunpack.c.l.b16 %v1859
      %v1908 = vunpack.c.l.b16 %v1860
      %v1909 = vunpack.c.l.b16 %v1861
      %v1910 = vunpack.c.l.b16 %v1862
      %v1911 = vunpack.c.l.b16 %v1863
      %v1912 = vunpack.c.l.b16 %v1864
      %v1913 = vunpack.c.l.b16 %v1865
      %v1914 = vunpack.c.l.b16 %v1866
      %v1915 = vunpack.c.l.b16 %v1867
      %v1916 = vpack.c.b16 %v1901, %v1900
      %v1917 = vpack.c.b16 %v1903, %v1902
      %v1918 = vpack.c.b16 %v1905, %v1904
      %v1919 = vpack.c.b16 %v1907, %v1906
      %v1920 = vpack.c.b16 %v1909, %v1908
      %v1921 = vpack.c.b16 %v1911, %v1910
      %v1922 = vpack.c.b16 %v1913, %v1912
      %v1923 = vpack.c.b16 %v1915, %v1914
      %1932 = vmatprep.subr.bf16.mxu0 0
      %1933 = vmatpush1.bf16.msra.mxu0 %v1916
      %1934 = vmatprep.subr.bf16.mxu0 0
      %1935 = vmatpush1.bf16.msra.mxu0 %v1917
      %1936 = vmatprep.subr.bf16.mxu0 0
      %1937 = vmatpush1.bf16.msra.mxu0 %v1918
      %1938 = vmatprep.subr.bf16.mxu0 0
      %1939 = vmatpush1.bf16.msra.mxu0 %v1919
      %1940 = vmatprep.subr.bf16.mxu0 0
      %1941 = vmatpush1.bf16.msra.mxu0 %v1920
      %1942 = vmatprep.subr.bf16.mxu0 0
      %1943 = vmatpush1.bf16.msra.mxu0 %v1921
      %1944 = vmatprep.subr.bf16.mxu0 0
      %1945 = vmatpush1.bf16.msra.mxu0 %v1922
      %1946 = vmatprep.subr.bf16.mxu0 0
      %1947 = vmatpush1.bf16.msra.mxu0 %v1923
      %1948 = vmatprep.subr.bf16.mxu0 0
      %1949 = vmatpush1.bf16.msra.mxu0 0
      %1950 = vmatprep.subr.bf16.mxu0 0
      %1951 = vmatpush1.bf16.msra.mxu0 0
      %1952 = vmatprep.subr.bf16.mxu0 0
      %1953 = vmatpush1.bf16.msra.mxu0 0
      %1954 = vmatprep.subr.bf16.mxu0 0
      %1955 = vmatpush1.bf16.msra.mxu0 0
      %1956 = vmatprep.subr.bf16.mxu0 0
      %1957 = vmatpush1.bf16.msra.mxu0 0
      %1958 = vmatprep.subr.bf16.mxu0 0
      %1959 = vmatpush1.bf16.msra.mxu0 0
      %1960 = vmatprep.subr.bf16.mxu0 0
      %1961 = vmatpush1.bf16.msra.mxu0 0
      %1962 = vmatprep.subr.bf16.mxu0 0
      %1963 = vmatpush1.bf16.msra.mxu0 0
      %1964 = vmatprep.mubr.bf16.mxu0 0
      %1965 = vmatmul.mubr.bf16.gmra.mrb[0].mxu0 %v1876
      %v1966 = vpop.f32.mrb[0].mxu0
      %v1967 = vadd.f32 0.0, %v1966
      %v1968 = vpop.f32.mrb[0].mxu0
      %v1969 = vpop.f32.mrb[0].mxu0
      %v1970 = vadd.f32 0.0, %v1969
      %v1971 = vpop.f32.mrb[0].mxu0
      %1972 = vmatprep.mubr.bf16.mxu0 0
      %1973 = vmatmul.mubr.bf16.gmra.mrb[0].mxu0 %v1877
      %v1974 = vpop.f32.mrb[0].mxu0
      %v1975 = vadd.f32 0.0, %v1974
      %v1976 = vpop.f32.mrb[0].mxu0
      %v1977 = vpop.f32.mrb[0].mxu0
      %v1978 = vadd.f32 0.0, %v1977
      %v1979 = vpop.f32.mrb[0].mxu0
      %1980 = vmatprep.mubr.bf16.mxu0 0
      %1981 = vmatmul.mubr.bf16.gmra.mrb[0].mxu0 %v1878
      %v1982 = vpop.f32.mrb[0].mxu0
      %v1983 = vadd.f32 0.0, %v1982
      %v1984 = vpop.f32.mrb[0].mxu0
      %v1985 = vpop.f32.mrb[0].mxu0
      %v1986 = vadd.f32 0.0, %v1985
      %v1987 = vpop.f32.mrb[0].mxu0
      %1988 = vmatprep.mubr.bf16.mxu0 0
      %1989 = vmatmul.mubr.bf16.gmra.mrb[0].mxu0 %v1879
      %v1990 = vpop.f32.mrb[0].mxu0
      %v1991 = vadd.f32 0.0, %v1990
      %v1992 = vpop.f32.mrb[0].mxu0
      %v1993 = vpop.f32.mrb[0].mxu0
      %v1994 = vadd.f32 0.0, %v1993
      %v1995 = vpop.f32.mrb[0].mxu0
      %1996 = vdwg.mxu0
      %v1997 = vadd.f32 %v1715, %v1967
      %v1998 = vadd.f32 %v1716, %v1970
      %v1999 = vadd.f32 %v1717, %v1975
      %v2000 = vadd.f32 %v1718, %v1978
      %v2001 = vadd.f32 %v1719, %v1983
      %v2002 = vadd.f32 %v1720, %v1986
      %v2003 = vadd.f32 %v1721, %v1991
      %v2004 = vadd.f32 %v1722, %v1994
      %v2005 = vld [vmem:[%s1552] sm:$0xe]
      %v2006 = vld [vmem:[%s1552 + $0x8] sm:$0xe]
      %v2007 = vld [vmem:[%s1552 + $0x10] sm:$0xe]
      %v2008 = vld [vmem:[%s1552 + $0x18] sm:$0xe]
      %v2009 = vld [vmem:[%s1552 + $0x20] sm:$0xe]
      %v2010 = vld [vmem:[%s1552 + $0x28] sm:$0xe]
      %v2011 = vld [vmem:[%s1552 + $0x30] sm:$0xe]
      %v2012 = vld [vmem:[%s1552 + $0x38] sm:$0xe]
      %v2029 = vrot.slane %v2005, 5
      %v2030 = vrot.slane %v2029, 4
      %v2031 = vrot.slane %v1724, 5
      %v2032 = vsel %vm702, %v2030, %v2031
      %v2033 = vrot.slane %v2006, 5
      %v2034 = vrot.slane %v2033, 4
      %v2035 = vrot.slane %v1726, 5
      %v2036 = vsel %vm702, %v2034, %v2035
      %v2037 = vrot.slane %v2007, 5
      %v2038 = vrot.slane %v2037, 4
      %v2039 = vrot.slane %v1728, 5
      %v2040 = vsel %vm702, %v2038, %v2039
      %v2041 = vrot.slane %v2008, 5
      %v2042 = vrot.slane %v2041, 4
      %v2043 = vrot.slane %v1730, 5
      %v2044 = vsel %vm702, %v2042, %v2043
      %v2045 = vrot.slane %v2009, 5
      %v2046 = vrot.slane %v2045, 4
      %v2047 = vrot.slane %v1732, 5
      %v2048 = vsel %vm702, %v2046, %v2047
      %v2049 = vrot.slane %v2010, 5
      %v2050 = vrot.slane %v2049, 4
      %v2051 = vrot.slane %v1734, 5
      %v2052 = vsel %vm702, %v2050, %v2051
      %v2053 = vrot.slane %v2011, 5
      %v2054 = vrot.slane %v2053, 4
      %v2055 = vrot.slane %v1736, 5
      %v2056 = vsel %vm702, %v2054, %v2055
      %v2057 = vrot.slane %v2012, 5
      %v2058 = vrot.slane %v2057, 4
      %v2059 = vrot.slane %v1738, 5
      %v2060 = vsel %vm702, %v2058, %v2059
      %s2061 = scalar_lea.vmem %s1, 512
      %v2062 = vld [vmem:[%s2061] sm:$0xf]
      %v2063 = vld [vmem:[%s2061 + $0x4] sm:$0xf]
      %v2064 = vld [vmem:[%s2061 + $0x8] sm:$0xf]
      %v2065 = vld [vmem:[%s2061 + $0xc] sm:$0xf]
      %v2066 = vld [vmem:[%s2061 + $0x10] sm:$0xf]
      %v2067 = vld [vmem:[%s2061 + $0x14] sm:$0xf]
      %v2068 = vld [vmem:[%s2061 + $0x18] sm:$0xf]
      %v2069 = vld [vmem:[%s2061 + $0x1c] sm:$0xf]
      %v2070 = vld [vmem:[%s2061 + $0x20] sm:$0xf]
      %v2071 = vld [vmem:[%s2061 + $0x24] sm:$0xf]
      %v2072 = vld [vmem:[%s2061 + $0x28] sm:$0xf]
      %v2073 = vld [vmem:[%s2061 + $0x2c] sm:$0xf]
      %v2074 = vld [vmem:[%s2061 + $0x30] sm:$0xf]
      %v2075 = vld [vmem:[%s2061 + $0x34] sm:$0xf]
      %v2076 = vld [vmem:[%s2061 + $0x38] sm:$0xf]
      %v2077 = vld [vmem:[%s2061 + $0x3c] sm:$0xf]
      %v2078 = vunpack.c.l.b16 %v2032
      %v2079 = vunpack.c.l.b16 %v2036
      %v2080 = vunpack.c.l.b16 %v2040
      %v2081 = vunpack.c.l.b16 %v2044
      %v2082 = vunpack.c.l.b16 %v2048
      %v2083 = vunpack.c.l.b16 %v2052
      %v2084 = vunpack.c.l.b16 %v2056
      %v2085 = vunpack.c.l.b16 %v2060
      %v2086 = vpack.c.b16 %v2079, %v2078
      %v2087 = vpack.c.b16 %v2081, %v2080
      %v2088 = vpack.c.b16 %v2083, %v2082
      %v2089 = vpack.c.b16 %v2085, %v2084
      %v2110 = vunpack.c.l.b16 %v2062
      %v2111 = vunpack.c.l.b16 %v2063
      %v2112 = vunpack.c.l.b16 %v2064
      %v2113 = vunpack.c.l.b16 %v2065
      %v2114 = vunpack.c.l.b16 %v2066
      %v2115 = vunpack.c.l.b16 %v2067
      %v2116 = vunpack.c.l.b16 %v2068
      %v2117 = vunpack.c.l.b16 %v2069
      %v2118 = vunpack.c.l.b16 %v2070
      %v2119 = vunpack.c.l.b16 %v2071
      %v2120 = vunpack.c.l.b16 %v2072
      %v2121 = vunpack.c.l.b16 %v2073
      %v2122 = vunpack.c.l.b16 %v2074
      %v2123 = vunpack.c.l.b16 %v2075
      %v2124 = vunpack.c.l.b16 %v2076
      %v2125 = vunpack.c.l.b16 %v2077
      %v2126 = vpack.c.b16 %v2111, %v2110
      %v2127 = vpack.c.b16 %v2113, %v2112
      %v2128 = vpack.c.b16 %v2115, %v2114
      %v2129 = vpack.c.b16 %v2117, %v2116
      %v2130 = vpack.c.b16 %v2119, %v2118
      %v2131 = vpack.c.b16 %v2121, %v2120
      %v2132 = vpack.c.b16 %v2123, %v2122
      %v2133 = vpack.c.b16 %v2125, %v2124
      %2142 = vmatprep.subr.bf16.mxu0 0
      %2143 = vmatpush1.bf16.msra.mxu0 %v2126
      %2144 = vmatprep.subr.bf16.mxu0 0
      %2145 = vmatpush1.bf16.msra.mxu0 %v2127
      %2146 = vmatprep.subr.bf16.mxu0 0
      %2147 = vmatpush1.bf16.msra.mxu0 %v2128
      %2148 = vmatprep.subr.bf16.mxu0 0
      %2149 = vmatpush1.bf16.msra.mxu0 %v2129
      %2150 = vmatprep.subr.bf16.mxu0 0
      %2151 = vmatpush1.bf16.msra.mxu0 %v2130
      %2152 = vmatprep.subr.bf16.mxu0 0
      %2153 = vmatpush1.bf16.msra.mxu0 %v2131
      %2154 = vmatprep.subr.bf16.mxu0 0
      %2155 = vmatpush1.bf16.msra.mxu0 %v2132
      %2156 = vmatprep.subr.bf16.mxu0 0
      %2157 = vmatpush1.bf16.msra.mxu0 %v2133
      %2158 = vmatprep.subr.bf16.mxu0 0
      %2159 = vmatpush1.bf16.msra.mxu0 0
      %2160 = vmatprep.subr.bf16.mxu0 0
      %2161 = vmatpush1.bf16.msra.mxu0 0
      %2162 = vmatprep.subr.bf16.mxu0 0
      %2163 = vmatpush1.bf16.msra.mxu0 0
      %2164 = vmatprep.subr.bf16.mxu0 0
      %2165 = vmatpush1.bf16.msra.mxu0 0
      %2166 = vmatprep.subr.bf16.mxu0 0
      %2167 = vmatpush1.bf16.msra.mxu0 0
      %2168 = vmatprep.subr.bf16.mxu0 0
      %2169 = vmatpush1.bf16.msra.mxu0 0
      %2170 = vmatprep.subr.bf16.mxu0 0
      %2171 = vmatpush1.bf16.msra.mxu0 0
      %2172 = vmatprep.subr.bf16.mxu0 0
      %2173 = vmatpush1.bf16.msra.mxu0 0
      %2174 = vmatprep.mubr.bf16.mxu0 0
      %2175 = vmatmul.mubr.bf16.gmra.mrb[0].mxu0 %v2086
      %v2176 = vpop.f32.mrb[0].mxu0
      %v2177 = vadd.f32 0.0, %v2176
      %v2178 = vpop.f32.mrb[0].mxu0
      %v2179 = vpop.f32.mrb[0].mxu0
      %v2180 = vadd.f32 0.0, %v2179
      %v2181 = vpop.f32.mrb[0].mxu0
      %2182 = vmatprep.mubr.bf16.mxu0 0
      %2183 = vmatmul.mubr.bf16.gmra.mrb[0].mxu0 %v2087
      %v2184 = vpop.f32.mrb[0].mxu0
      %v2185 = vadd.f32 0.0, %v2184
      %v2186 = vpop.f32.mrb[0].mxu0
      %v2187 = vpop.f32.mrb[0].mxu0
      %v2188 = vadd.f32 0.0, %v2187
      %v2189 = vpop.f32.mrb[0].mxu0
      %2190 = vmatprep.mubr.bf16.mxu0 0
      %2191 = vmatmul.mubr.bf16.gmra.mrb[0].mxu0 %v2088
      %v2192 = vpop.f32.mrb[0].mxu0
      %v2193 = vadd.f32 0.0, %v2192
      %v2194 = vpop.f32.mrb[0].mxu0
      %v2195 = vpop.f32.mrb[0].mxu0
      %v2196 = vadd.f32 0.0, %v2195
      %v2197 = vpop.f32.mrb[0].mxu0
      %2198 = vmatprep.mubr.bf16.mxu0 0
      %2199 = vmatmul.mubr.bf16.gmra.mrb[0].mxu0 %v2089
      %v2200 = vpop.f32.mrb[0].mxu0
      %v2201 = vadd.f32 0.0, %v2200
      %v2202 = vpop.f32.mrb[0].mxu0
      %v2203 = vpop.f32.mrb[0].mxu0
      %v2204 = vadd.f32 0.0, %v2203
      %v2205 = vpop.f32.mrb[0].mxu0
      %2206 = vdwg.mxu0
      %v2207 = vadd.f32 %v1997, %v2177
      %v2208 = vadd.f32 %v1998, %v2180
      %v2209 = vadd.f32 %v1999, %v2185
      %v2210 = vadd.f32 %v2000, %v2188
      %v2211 = vadd.f32 %v2001, %v2193
      %v2212 = vadd.f32 %v2002, %v2196
      %v2213 = vadd.f32 %v2003, %v2201
      %v2214 = vadd.f32 %v2004, %v2204
      %v2215 = vld [vmem:[%s239] sm:$0xf]
      %v2216 = vld [vmem:[%s239 + $0x4] sm:$0xf]
      %v2217 = vld [vmem:[%s239 + $0x8] sm:$0xf]
      %v2218 = vld [vmem:[%s239 + $0xc] sm:$0xf]
      %v2219 = vld [vmem:[%s239 + $0x10] sm:$0xf]
      %v2220 = vld [vmem:[%s239 + $0x14] sm:$0xf]
      %v2221 = vld [vmem:[%s239 + $0x18] sm:$0xf]
      %v2222 = vld [vmem:[%s239 + $0x1c] sm:$0xf]
      %v2223 = vld [vmem:[%s4] sm:$0xf]
      %v2224 = vld [vmem:[%s4 + $0x4] sm:$0xf]
      %v2225 = vld [vmem:[%s4 + $0x8] sm:$0xf]
      %v2226 = vld [vmem:[%s4 + $0xc] sm:$0xf]
      %v2227 = vld [vmem:[%s4 + $0x10] sm:$0xf]
      %v2228 = vld [vmem:[%s4 + $0x14] sm:$0xf]
      %v2229 = vld [vmem:[%s4 + $0x18] sm:$0xf]
      %v2230 = vld [vmem:[%s4 + $0x1c] sm:$0xf]
      %v2231 = vld [vmem:[%s4 + $0x20] sm:$0xf]
      %v2232 = vld [vmem:[%s4 + $0x24] sm:$0xf]
      %v2233 = vld [vmem:[%s4 + $0x28] sm:$0xf]
      %v2234 = vld [vmem:[%s4 + $0x2c] sm:$0xf]
      %v2235 = vld [vmem:[%s4 + $0x30] sm:$0xf]
      %v2236 = vld [vmem:[%s4 + $0x34] sm:$0xf]
      %v2237 = vld [vmem:[%s4 + $0x38] sm:$0xf]
      %v2238 = vld [vmem:[%s4 + $0x3c] sm:$0xf]
      %v2247 = vunpack.c.l.b16 %v2215
      %v2248 = vunpack.c.l.b16 %v2216
      %v2249 = vunpack.c.l.b16 %v2217
      %v2250 = vunpack.c.l.b16 %v2218
      %v2251 = vunpack.c.l.b16 %v2219
      %v2252 = vunpack.c.l.b16 %v2220
      %v2253 = vunpack.c.l.b16 %v2221
      %v2254 = vunpack.c.l.b16 %v2222
      %v2255 = vpack.c.b16 %v2248, %v2247
      %v2256 = vpack.c.b16 %v2250, %v2249
      %v2257 = vpack.c.b16 %v2252, %v2251
      %v2258 = vpack.c.b16 %v2254, %v2253
      %v2279 = vunpack.c.l.b16 %v2223
      %v2280 = vunpack.c.l.b16 %v2224
      %v2281 = vunpack.c.l.b16 %v2225
      %v2282 = vunpack.c.l.b16 %v2226
      %v2283 = vunpack.c.l.b16 %v2227
      %v2284 = vunpack.c.l.b16 %v2228
      %v2285 = vunpack.c.l.b16 %v2229
      %v2286 = vunpack.c.l.b16 %v2230
      %v2287 = vunpack.c.l.b16 %v2231
      %v2288 = vunpack.c.l.b16 %v2232
      %v2289 = vunpack.c.l.b16 %v2233
      %v2290 = vunpack.c.l.b16 %v2234
      %v2291 = vunpack.c.l.b16 %v2235
      %v2292 = vunpack.c.l.b16 %v2236
      %v2293 = vunpack.c.l.b16 %v2237
      %v2294 = vunpack.c.l.b16 %v2238
      %v2295 = vpack.c.b16 %v2280, %v2279
      %v2296 = vpack.c.b16 %v2282, %v2281
      %v2297 = vpack.c.b16 %v2284, %v2283
      %v2298 = vpack.c.b16 %v2286, %v2285
      %v2299 = vpack.c.b16 %v2288, %v2287
      %v2300 = vpack.c.b16 %v2290, %v2289
      %v2301 = vpack.c.b16 %v2292, %v2291
      %v2302 = vpack.c.b16 %v2294, %v2293
      %2311 = vmatprep.subr.bf16.mxu0 0
      %2312 = vmatpush1.bf16.msra.mxu0 %v2295
      %2313 = vmatprep.subr.bf16.mxu0 0
      %2314 = vmatpush1.bf16.msra.mxu0 %v2296
      %2315 = vmatprep.subr.bf16.mxu0 0
      %2316 = vmatpush1.bf16.msra.mxu0 %v2297
      %2317 = vmatprep.subr.bf16.mxu0 0
      %2318 = vmatpush1.bf16.msra.mxu0 %v2298
      %2319 = vmatprep.subr.bf16.mxu0 0
      %2320 = vmatpush1.bf16.msra.mxu0 %v2299
      %2321 = vmatprep.subr.bf16.mxu0 0
      %2322 = vmatpush1.bf16.msra.mxu0 %v2300
      %2323 = vmatprep.subr.bf16.mxu0 0
      %2324 = vmatpush1.bf16.msra.mxu0 %v2301
      %2325 = vmatprep.subr.bf16.mxu0 0
      %2326 = vmatpush1.bf16.msra.mxu0 %v2302
      %2327 = vmatprep.subr.bf16.mxu0 0
      %2328 = vmatpush1.bf16.msra.mxu0 0
      %2329 = vmatprep.subr.bf16.mxu0 0
      %2330 = vmatpush1.bf16.msra.mxu0 0
      %2331 = vmatprep.subr.bf16.mxu0 0
      %2332 = vmatpush1.bf16.msra.mxu0 0
      %2333 = vmatprep.subr.bf16.mxu0 0
      %2334 = vmatpush1.bf16.msra.mxu0 0
      %2335 = vmatprep.subr.bf16.mxu0 0
      %2336 = vmatpush1.bf16.msra.mxu0 0
      %2337 = vmatprep.subr.bf16.mxu0 0
      %2338 = vmatpush1.bf16.msra.mxu0 0
      %2339 = vmatprep.subr.bf16.mxu0 0
      %2340 = vmatpush1.bf16.msra.mxu0 0
      %2341 = vmatprep.subr.bf16.mxu0 0
      %2342 = vmatpush1.bf16.msra.mxu0 0
      %2343 = vmatprep.mubr.bf16.mxu0 0
      %2344 = vmatmul.mubr.bf16.gmra.mrb[0].mxu0 %v2255
      %v2345 = vpop.f32.mrb[0].mxu0
      %v2346 = vadd.f32 0.0, %v2345
      %v2347 = vpop.f32.mrb[0].mxu0
      %v2348 = vpop.f32.mrb[0].mxu0
      %v2349 = vadd.f32 0.0, %v2348
      %v2350 = vpop.f32.mrb[0].mxu0
      %2351 = vmatprep.mubr.bf16.mxu0 0
      %2352 = vmatmul.mubr.bf16.gmra.mrb[0].mxu0 %v2256
      %v2353 = vpop.f32.mrb[0].mxu0
      %v2354 = vadd.f32 0.0, %v2353
      %v2355 = vpop.f32.mrb[0].mxu0
      %v2356 = vpop.f32.mrb[0].mxu0
      %v2357 = vadd.f32 0.0, %v2356
      %v2358 = vpop.f32.mrb[0].mxu0
      %2359 = vmatprep.mubr.bf16.mxu0 0
      %2360 = vmatmul.mubr.bf16.gmra.mrb[0].mxu0 %v2257
      %v2361 = vpop.f32.mrb[0].mxu0
      %v2362 = vadd.f32 0.0, %v2361
      %v2363 = vpop.f32.mrb[0].mxu0
      %v2364 = vpop.f32.mrb[0].mxu0
      %v2365 = vadd.f32 0.0, %v2364
      %v2366 = vpop.f32.mrb[0].mxu0
      %2367 = vmatprep.mubr.bf16.mxu0 0
      %2368 = vmatmul.mubr.bf16.gmra.mrb[0].mxu0 %v2258
      %v2369 = vpop.f32.mrb[0].mxu0
      %v2370 = vadd.f32 0.0, %v2369
      %v2371 = vpop.f32.mrb[0].mxu0
      %v2372 = vpop.f32.mrb[0].mxu0
      %v2373 = vadd.f32 0.0, %v2372
      %v2374 = vpop.f32.mrb[0].mxu0
      %2375 = vdwg.mxu0
      %v2376 = vadd.f32 %v2207, %v2346
      %v2377 = vadd.f32 %v2208, %v2349
      %v2378 = vadd.f32 %v2209, %v2354
      %v2379 = vadd.f32 %v2210, %v2357
      %v2380 = vadd.f32 %v2211, %v2362
      %v2381 = vadd.f32 %v2212, %v2365
      %v2382 = vadd.f32 %v2213, %v2370
      %v2383 = vadd.f32 %v2214, %v2373
      %v2384 = vld [vmem:[%s2] sm:$0x1]
      %v2386 = vlaneseq
      %v2387 = vshrl.u32 %v2386, 7
      %v2388 = vsub.s32 0, %v2387
      %v2389 = vrot.slane %v2384, %v2388
      %v2391 = vadd.f32 %v2376, %v2389
      %v2392 = vadd.f32 %v2377, %v2389
      %v2393 = vadd.f32 %v2378, %v2389
      %v2394 = vadd.f32 %v2379, %v2389
      %v2395 = vadd.f32 %v2380, %v2389
      %v2396 = vadd.f32 %v2381, %v2389
      %v2397 = vadd.f32 %v2382, %v2389
      %v2398 = vadd.f32 %v2383, %v2389
      %v2399 = vmax.f32 %v2391, 0.0
      %v2400 = vmax.f32 %v2392, 0.0
      %v2401 = vmax.f32 %v2393, 0.0
      %v2402 = vmax.f32 %v2394, 0.0
      %v2403 = vmax.f32 %v2395, 0.0
      %v2404 = vmax.f32 %v2396, 0.0
      %v2405 = vmax.f32 %v2397, 0.0
      %v2406 = vmax.f32 %v2398, 0.0
      %2407 = vst [vmem:[%s244] sm:$0xff] %v2399
      %2408 = vst [vmem:[%s244 + $0x8] sm:$0xff] %v2400
      %2409 = vst [vmem:[%s244 + $0x10] sm:$0xff] %v2401
      %2410 = vst [vmem:[%s244 + $0x18] sm:$0xff] %v2402
      %2411 = vst [vmem:[%s244 + $0x20] sm:$0xff] %v2403
      %2412 = vst [vmem:[%s244 + $0x28] sm:$0xff] %v2404
      %2413 = vst [vmem:[%s244 + $0x30] sm:$0xff] %v2405
      %2414 = vst [vmem:[%s244 + $0x38] sm:$0xff] %v2406
      %p2415 = scmp.lt.s32.totalorder %s16, 1
      %s2416 = scalar_select %p2415, %s16, 1
      %s2417 = smul.addr %s2416, 8
      %s2418 = smul.addr %s2417, 8
      %s2419 = scalar_lea.vmem %s5, %s2418
      // Predicated region
      $region41: #{wrn_block_forward.3} parent=39 // pred_check
        %p2420 = pneg %p149
      $region42: #{wrn_block_forward.3} parent=39 // pred_check_branch
        %2422 = sbr.rel (%p2420) target = $region44
      $region43: #{wrn_block_forward.3} parent=39 // pred_region
        _
      $region44: #{wrn_block_forward.3} parent=39 // pred_fallthru
        _
    $region40: #{wrn_block_forward.3} parent=5 // pred_fallthru
      _
    %p2423 = scmp.le.s32.totalorder 2, %s11
    // Predicated region
    $region45: #{wrn_block_forward.3} parent=5 // pred_check
      %p2424 = pneg %p2423
    $region46: #{wrn_block_forward.3} parent=5 // pred_check_branch
      %2426 = sbr.rel (%p2424) target = $region48
    $region47: #{wrn_block_forward.3} parent=5 // pred_region
      %s2427 = ssub.s32 %s11, 2
      // Predicated region
      $region49: #{wrn_block_forward.3} parent=47 // pred_check
        %p2428 = pneg %p155
      $region50: #{wrn_block_forward.3} parent=47 // pred_check_branch
        %2430 = sbr.rel (%p2428) target = $region52
      $region51: #{wrn_block_forward.3} parent=47 // pred_region
        %p2431 = scmp.lt.s32.totalorder %s17, 1
        %s2432 = scalar_select %p2431, %s17, 1
        %s2433 = smul.addr %s2432, 8
        %s2434 = smul.addr %s2433, 8
        %s2435 = scalar_lea.vmem %s5, %s2434
      $region52: #{wrn_block_forward.3} parent=47 // pred_fallthru
        _
    $region48: #{wrn_block_forward.3} parent=5 // pred_fallthru
      _
  $region6: #{wrn_block_forward.3} parent=0 // loop_footer
    %s15 = sadd.s32 1, %s11
  $region7: #{wrn_block_forward.3} parent=0 // loop_footer_branch
    %10 = sbr.rel target = $region3
  $region8: #{wrn_block_forward.3} parent=0 // loop_exit
    _

</llo_original>
